<compile_context>
chip_gen: v6e
topology: v6e:2x2x1
jax: 0.10.0
libtpu: 0.0.40
codegen_flags: <defaults>
</compile_context>

<pallas_src>
import functools

import jax
import jax.numpy as jnp
from jax.experimental import pallas as pl
from jax.experimental.pallas import tpu as pltpu

N_ALIGN = 512                      # node-dim padding granularity (also min agg tile)
_VMEM_LIMIT = 32 * 1024 * 1024     # safe scoped-VMEM budget on v5e/v6e/v7x


def _round_up(x, m):
    return ((x + m - 1) // m) * m


def _pick_tiles(n_pad):
    """Pick (row tile, reduction tile) for the n_pad x n_pad adjacency matmul.

    Reduction tile tk: largest of {1024, 512, 256, 128} dividing n_pad (amortizes
    the ~0.35us per-grid-step overhead against the HBM A stream).
    Row tile tm: same target, but halved until there are >= 2 row tiles so the
    "parallel" axis can be sharded across both v7x TensorCores.
    """
    tk = 128
    for cand in (1024, 512, 256):
        if n_pad % cand == 0:
            tk = cand
            break
    tm = tk
    while n_pad // tm < 2 and tm > 128:
        tm //= 2
    return tm, tk


# ---------------------------------------------------------------------------
# Kernel 1: per-node linear transforms for one SAGEConv layer (fused Wl|Wr).
#   ZR = x @ [Wl | Wr]   (single 2*h_pad-wide MXU matmul, f32 accumulation)
#   Z  = bf16(ZR[:, :h_pad])        (neighbor transform; feeds the A matmul)
#   R  = ZR[:, h_pad:] + b          (root transform + lin_l bias; kept f32)
# Grid over row tiles of x; the (small, 128-padded) fused weight stays resident.
# ---------------------------------------------------------------------------
def _transform_kernel(x_ref, w_ref, b_ref, z_ref, r_ref, *, h_pad):
    zr = jnp.dot(x_ref[...], w_ref[...], preferred_element_type=jnp.float32)
    z_ref[...] = zr[:, :h_pad].astype(jnp.bfloat16)
    r_ref[...] = zr[:, h_pad:] + b_ref[...]


def _sage_transform(x_bf16, w_bf16, b, *, tm):
    n_pad, f_pad = x_bf16.shape
    h2 = w_bf16.shape[1]
    h_pad = h2 // 2
    kern = functools.partial(_transform_kernel, h_pad=h_pad)
    return pl.pallas_call(
        kern,
        out_shape=(jax.ShapeDtypeStruct((n_pad, h_pad), jnp.bfloat16),
                   jax.ShapeDtypeStruct((n_pad, h_pad), jnp.float32)),
        grid_spec=pltpu.PrefetchScalarGridSpec(
            num_scalar_prefetch=0,
            grid=(n_pad // tm,),
            in_specs=[pl.BlockSpec((tm, f_pad), lambda i: (i, 0)),
                      pl.BlockSpec((f_pad, h2), lambda i: (0, 0)),
                      pl.BlockSpec((1, h_pad), lambda i: (0, 0))],
            out_specs=[pl.BlockSpec((tm, h_pad), lambda i: (i, 0)),
                       pl.BlockSpec((tm, h_pad), lambda i: (i, 0))]),
        compiler_params=pltpu.CompilerParams(
            dimension_semantics=("parallel",),
            vmem_limit_bytes=_VMEM_LIMIT),
    )(x_bf16, w_bf16, b)


# ---------------------------------------------------------------------------
# Kernel 2: tiled mean-aggregation matmul + combine.
#   out[i] = act( (sum_k A_cnt[i,k] @ Z[k]) * inv_deg[i]  +  R[i] )
# A_cnt is the raw bf16 edge-count adjacency; the 1/deg mean normalization is an
# f32 per-row scale applied in the finalize (no XLA-side n^2 divide/cast pass).
# Grid = (row tiles, reduction tiles); f32 accumulator scratch, pl.when init/fin.
# ---------------------------------------------------------------------------
def _agg_relu_kernel(a_ref, z_ref, inv_ref, r_ref, h_ref, acc_ref):
    k = pl.program_id(1)

    @pl.when(k == 0)
    def _():
        acc_ref[...] = jnp.zeros_like(acc_ref)

    acc_ref[...] += jnp.dot(a_ref[...], z_ref[...],
                            preferred_element_type=jnp.float32)

    @pl.when(k == pl.num_programs(1) - 1)
    def _():
        h = acc_ref[...] * inv_ref[...] + r_ref[...]
        # relu; F.dropout(p=0.5, training) is identity in eval mode.
        # TODO(synk): training-mode dropout (pltpu.prng_random_bits mask) not emitted.
        h_ref[...] = jnp.maximum(h, 0.0).astype(h_ref.dtype)   # bf16 activation


def _agg_logsoftmax_kernel(a_ref, z_ref, inv_ref, r_ref, h_ref, lsm_ref, acc_ref,
                           *, num_classes):
    k = pl.program_id(1)

    @pl.when(k == 0)
    def _():
        acc_ref[...] = jnp.zeros_like(acc_ref)

    acc_ref[...] += jnp.dot(a_ref[...], z_ref[...],
                            preferred_element_type=jnp.float32)

    @pl.when(k == pl.num_programs(1) - 1)
    def _():
        h = acc_ref[...] * inv_ref[...] + r_ref[...]
        h_ref[...] = h
        # log_softmax over the class dim, masking padded lanes (cols >= num_classes).
        lane = jax.lax.broadcasted_iota(jnp.int32, h.shape, 1)
        valid = lane < num_classes
        hm = jnp.where(valid, h, -jnp.inf)
        m = jnp.max(hm, axis=1, keepdims=True)
        e = jnp.where(valid, jnp.exp(h - m), 0.0)
        lse = jnp.log(jnp.sum(e, axis=1, keepdims=True)) + m
        lsm_ref[...] = h - lse


def _sage_aggregate(a_cnt, z, inv_deg, r, *, tm, tk, relu, num_classes=None):
    n_pad = a_cnt.shape[0]
    h_pad = z.shape[1]
    grid = (n_pad // tm, n_pad // tk)
    in_specs = [pl.BlockSpec((tm, tk), lambda i, k: (i, k)),
                pl.BlockSpec((tk, h_pad), lambda i, k: (k, 0)),
                pl.BlockSpec((tm, 1), lambda i, k: (i, 0)),
                pl.BlockSpec((tm, h_pad), lambda i, k: (i, 0))]
    out_spec = pl.BlockSpec((tm, h_pad), lambda i, k: (i, 0))
    cp = pltpu.CompilerParams(
        dimension_semantics=("parallel", "arbitrary"),
        vmem_limit_bytes=_VMEM_LIMIT)
    scratch = [pltpu.VMEM((tm, h_pad), jnp.float32)]

    if relu:
        return pl.pallas_call(
            _agg_relu_kernel,
            out_shape=jax.ShapeDtypeStruct((n_pad, h_pad), jnp.bfloat16),
            grid_spec=pltpu.PrefetchScalarGridSpec(
                num_scalar_prefetch=0, grid=grid,
                in_specs=in_specs, out_specs=out_spec,
                scratch_shapes=scratch),
            compiler_params=cp,
        )(a_cnt, z, inv_deg, r)

    kern = functools.partial(_agg_logsoftmax_kernel, num_classes=num_classes)
    return pl.pallas_call(
        kern,
        out_shape=(jax.ShapeDtypeStruct((n_pad, h_pad), jnp.float32),
                   jax.ShapeDtypeStruct((n_pad, h_pad), jnp.float32)),
        grid_spec=pltpu.PrefetchScalarGridSpec(
            num_scalar_prefetch=0, grid=grid,
            in_specs=in_specs, out_specs=[out_spec, out_spec],
            scratch_shapes=scratch),
        compiler_params=cp,
    )(a_cnt, z, inv_deg, r)


# ---------------------------------------------------------------------------
# Forward wrapper
# ---------------------------------------------------------------------------
@jax.jit
def graphsage_forward(x, edge_index, params):
    """x: [N, dim_in] f32; edge_index: [2, E] int32 (row0 = src j, row1 = dst i).
    Returns (h [N, dim_out], log_softmax(h, dim=1) [N, dim_out])."""
    n, dim_in = x.shape
    dim_h = params["wl1"].shape[1]
    dim_out = params["wl2"].shape[1]

    # 128-lane / tile aligned padded sizes.
    n_pad = _round_up(max(n, 8), N_ALIGN)
    f_pad = _round_up(dim_in, 128)
    h_pad = _round_up(dim_h, 128)
    c_pad = _round_up(dim_out, 128)
    tm, tk = _pick_tiles(n_pad)

    # Glue: dense bf16 *count* adjacency (scatter-add; exact for degree <= 255) and an
    # f32 inv-degree vector computed by a length-E scatter (no n^2 divide/cast pass).
    # Padded rows/cols are zero so they never contribute to real nodes; padded rows do
    # get R = bias in the kernel, which is harmless because outputs are sliced to [:n].
    # TODO(synk): sparse CSR + scalar-prefetch gather aggregation for E << N^2 graphs.
    src, dst = edge_index[0], edge_index[1]
    a_cnt = jnp.zeros((n_pad, n_pad), jnp.bfloat16).at[dst, src].add(
        jnp.ones(src.shape, dtype=jnp.bfloat16))
    deg = jnp.zeros((n_pad,), jnp.float32).at[dst].add(1.0)
    inv_deg = (1.0 / jnp.maximum(deg, 1.0)).reshape(n_pad, 1)

    # Zero-padded bf16 inputs / fused [Wl | Wr] weights (stored [in, out] -> x @ W).
    xp = jnp.pad(x, ((0, n_pad - n), (0, f_pad - dim_in))).astype(jnp.bfloat16)
    wl1 = jnp.pad(params["wl1"], ((0, f_pad - dim_in), (0, h_pad - dim_h)))
    wr1 = jnp.pad(params["wr1"], ((0, f_pad - dim_in), (0, h_pad - dim_h)))
    w1 = jnp.concatenate([wl1, wr1], axis=1).astype(jnp.bfloat16)
    bl1 = jnp.pad(params["bl1"], ((0, 0), (0, h_pad - dim_h)))
    wl2 = jnp.pad(params["wl2"], ((0, h_pad - dim_h), (0, c_pad - dim_out)))
    wr2 = jnp.pad(params["wr2"], ((0, h_pad - dim_h), (0, c_pad - dim_out)))
    w2 = jnp.concatenate([wl2, wr2], axis=1).astype(jnp.bfloat16)
    bl2 = jnp.pad(params["bl2"], ((0, 0), (0, c_pad - dim_out)))

    # Layer 1: h1 = relu( (A_cnt @ (x @ Wl1)) * inv_deg + x @ Wr1 + b1 )   [reassociated]
    z1, r1 = _sage_transform(xp, w1, bl1, tm=tm)
    h1 = _sage_aggregate(a_cnt, z1, inv_deg, r1, tm=tm, tk=tk, relu=True)

    # Layer 2: h2 = (A_cnt @ (h1 @ Wl2)) * inv_deg + h1 @ Wr2 + b2 ; log_softmax.
    z2, r2 = _sage_transform(h1, w2, bl2, tm=tm)
    h2, lsm = _sage_aggregate(a_cnt, z2, inv_deg, r2, tm=tm, tk=tk, relu=False,
                              num_classes=dim_out)

    return h2[:n, :dim_out], lsm[:n, :dim_out]


def init_params(key, dim_in, dim_h, dim_out):
    """Deterministic param init matching SAGEConv shapes.
    lin_l: Linear(dim, out, bias=True) on aggregated neighbors,
    lin_r: Linear(dim, out, bias=False) on root features.
    Stored pre-transposed ([in, out]) so kernels compute x @ W directly."""
    ks = jax.random.split(key, 6)
    s1 = 1.0 / jnp.sqrt(dim_in)
    s2 = 1.0 / jnp.sqrt(dim_h)
    return {
        "wl1": jax.random.uniform(ks[0], (dim_in, dim_h), jnp.float32, -s1, s1),
        "wr1": jax.random.uniform(ks[1], (dim_in, dim_h), jnp.float32, -s1, s1),
        "bl1": jax.random.uniform(ks[2], (1, dim_h), jnp.float32, -s1, s1),
        "wl2": jax.random.uniform(ks[3], (dim_h, dim_out), jnp.float32, -s2, s2),
        "wr2": jax.random.uniform(ks[4], (dim_h, dim_out), jnp.float32, -s2, s2),
        "bl2": jax.random.uniform(ks[5], (1, dim_out), jnp.float32, -s2, s2),
    }


def _reference_forward(x, edge_index, params):
    """Pure-JAX f32 reference (eval-mode forward) for correctness check."""
    n = x.shape[0]
    src, dst = edge_index[0], edge_index[1]
    adj = jnp.zeros((n, n), jnp.float32).at[dst, src].add(1.0)
    am = adj / jnp.maximum(jnp.sum(adj, axis=1, keepdims=True), 1.0)
    h = (am @ x) @ params["wl1"] + params["bl1"] + x @ params["wr1"]
    h = jnp.maximum(h, 0.0)
    h2 = (am @ h) @ params["wl2"] + params["bl2"] + h @ params["wr2"]
    return h2, jax.nn.log_softmax(h2, axis=1)


if __name__ == "__main__":
    key = jax.random.PRNGKey(0)
    k_x, k_e, k_p = jax.random.split(key, 3)

    N, dim_in, dim_h, dim_out, E = 8, 32, 32, 8, 24

    x = jax.random.normal(k_x, (N, dim_in), dtype=jnp.float32)
    edge_index = jax.random.randint(k_e, (2, E), 0, N, dtype=jnp.int32)
    params = init_params(k_p, dim_in, dim_h, dim_out)

    h, log_probs = graphsage_forward(x, edge_index, params)
    jax.block_until_ready((h, log_probs))

    assert h.shape == (N, dim_out) and log_probs.shape == (N, dim_out)
    # log_softmax rows should sum (in prob space) to ~1
    assert bool(jnp.all(jnp.abs(jnp.sum(jnp.exp(log_probs), axis=1) - 1.0) < 1e-4))
    # parity vs pure-JAX f32 reference (bf16 MXU inputs -> loose tolerance)
    h_ref, lsm_ref = _reference_forward(x, edge_index, params)
    assert bool(jnp.max(jnp.abs(h - h_ref)) < 7e-2)
    assert bool(jnp.max(jnp.abs(log_probs - lsm_ref)) < 7e-2)
    print("KERNEL_OK")
</pallas_src>

<mosaic_0001>
module attributes {stable_mosaic.version = 11 : i64} {
  func.func private @main(%arg0: i32) attributes {dimension_semantics = [#tpu.dimension_semantics<core_parallel>], iteration_bounds = array<i64: 2>, tpu.core_type = #tpu.core_type<sc_scalar_subcore>, window_params = []} {
    return
  }
}

module attributes {stable_mosaic.version = 11 : i64} {
  func.func private @main(%arg0: i32) attributes {dimension_semantics = [#tpu.dimension_semantics<core_parallel>], iteration_bounds = array<i64: 2>, tpu.core_type = #tpu.core_type<sc_scalar_subcore>, window_params = []} {
    return
  }
}

module attributes {stable_mosaic.version = 11 : i64} {
  func.func @_transform_kernel(%arg0: i32, %arg1: memref<256x128xbf16, #tpu.memory_space<vmem>>, %arg2: memref<128x256xbf16, #tpu.memory_space<vmem>>, %arg3: memref<1x128xf32, #tpu.memory_space<vmem>>, %arg4: memref<256x128xbf16, #tpu.memory_space<vmem>>, %arg5: memref<256x128xf32, #tpu.memory_space<vmem>>) attributes {dimension_semantics = [#tpu.dimension_semantics<parallel>], iteration_bounds = array<i64: 2>, scalar_prefetch = 0 : i64, scratch_operands = 0 : i64, tpu.core_type = #tpu.core_type<tc>, window_params = [{transform_indices = @transform_0, window_bounds = array<i64: 256, 128>}, {pipeline_mode = #tpu.pipeline_mode<synchronous>, transform_indices = @transform_1, window_bounds = array<i64: 128, 256>}, {pipeline_mode = #tpu.pipeline_mode<synchronous>, transform_indices = @transform_2, window_bounds = array<i64: 1, 128>}, {transform_indices = @transform_3, window_bounds = array<i64: 256, 128>}, {transform_indices = @transform_4, window_bounds = array<i64: 256, 128>}]} {
    %c0 = arith.constant 0 : index
    %c0_0 = arith.constant 0 : index
    %0 = vector.load %arg1[%c0, %c0_0] : memref<256x128xbf16, #tpu.memory_space<vmem>>, vector<256x128xbf16>
    %c0_1 = arith.constant 0 : index
    %c0_2 = arith.constant 0 : index
    %1 = vector.load %arg2[%c0_1, %c0_2] : memref<128x256xbf16, #tpu.memory_space<vmem>>, vector<128x256xbf16>
    %cst = arith.constant dense<0.000000e+00> : vector<256x256xf32>
    %2 = tpu.matmul %0, %1, %cst {dimension_numbers = #tpu.dot_dimension_numbers<[1], [0], [0], [1], [0, 0, 1, 1], [], []>} : vector<256x128xbf16>, vector<128x256xbf16>, vector<256x256xf32> -> vector<256x256xf32>
    %3 = vector.extract_strided_slice %2 {offsets = [0, 0], sizes = [256, 128], strides = [1, 1]} : vector<256x256xf32> to vector<256x128xf32>
    %4 = arith.truncf %3 : vector<256x128xf32> to vector<256x128xbf16>
    %c0_3 = arith.constant 0 : index
    %c0_4 = arith.constant 0 : index
    %5 = vector.load %arg4[%c0_3, %c0_4] : memref<256x128xbf16, #tpu.memory_space<vmem>>, vector<256x128xbf16>
    tpu.vector_store %arg4[%c0_3, %c0_4], %4 {strides = array<i32>} : memref<256x128xbf16, #tpu.memory_space<vmem>>, vector<256x128xbf16>,
    %6 = vector.extract_strided_slice %2 {offsets = [0, 128], sizes = [256, 128], strides = [1, 1]} : vector<256x256xf32> to vector<256x128xf32>
    %c0_5 = arith.constant 0 : index
    %c0_6 = arith.constant 0 : index
    %7 = vector.load %arg3[%c0_5, %c0_6] : memref<1x128xf32, #tpu.memory_space<vmem>>, vector<1x128xf32>
    %8 = vector.broadcast %7 : vector<1x128xf32> to vector<256x128xf32>
    %9 = arith.addf %6, %8 : vector<256x128xf32>
    %c0_7 = arith.constant 0 : index
    %c0_8 = arith.constant 0 : index
    %10 = vector.load %arg5[%c0_7, %c0_8] : memref<256x128xf32, #tpu.memory_space<vmem>>, vector<256x128xf32>
    tpu.vector_store %arg5[%c0_7, %c0_8], %9 {strides = array<i32>} : memref<256x128xf32, #tpu.memory_space<vmem>>, vector<256x128xf32>,
    return
  }
  func.func @transform_0(%arg0: i32) -> (i32, i32) {
    %c0_i32 = arith.constant 0 : i32
    %c0_i32_0 = arith.constant 0 : i32
    return %arg0, %c0_i32 : i32, i32
  }
  func.func @transform_1(%arg0: i32) -> (i32, i32) {
    %c0_i32 = arith.constant 0 : i32
    %c0_i32_0 = arith.constant 0 : i32
    %c0_i32_1 = arith.constant 0 : i32
    return %c0_i32, %c0_i32_0 : i32, i32
  }
  func.func @transform_2(%arg0: i32) -> (i32, i32) {
    %c0_i32 = arith.constant 0 : i32
    %c0_i32_0 = arith.constant 0 : i32
    %c0_i32_1 = arith.constant 0 : i32
    return %c0_i32, %c0_i32_0 : i32, i32
  }
  func.func @transform_3(%arg0: i32) -> (i32, i32) {
    %c0_i32 = arith.constant 0 : i32
    %c0_i32_0 = arith.constant 0 : i32
    return %arg0, %c0_i32 : i32, i32
  }
  func.func @transform_4(%arg0: i32) -> (i32, i32) {
    %c0_i32 = arith.constant 0 : i32
    %c0_i32_0 = arith.constant 0 : i32
    return %arg0, %c0_i32 : i32, i32
  }
}

module attributes {stable_mosaic.version = 11 : i64} {
  func.func @_agg_relu_kernel(%arg0: i32, %arg1: i32, %arg2: memref<256x512xbf16, #tpu.memory_space<vmem>>, %arg3: memref<512x128xbf16, #tpu.memory_space<vmem>>, %arg4: memref<256x1xf32, #tpu.memory_space<vmem>>, %arg5: memref<256x128xf32, #tpu.memory_space<vmem>>, %arg6: memref<256x128xbf16, #tpu.memory_space<vmem>>, %arg7: memref<256x128xf32, #tpu.memory_space<vmem>>) attributes {dimension_semantics = [#tpu.dimension_semantics<parallel>, #tpu.dimension_semantics<arbitrary>], iteration_bounds = array<i64: 2, 1>, scalar_prefetch = 0 : i64, scratch_operands = 1 : i64, tpu.core_type = #tpu.core_type<tc>, window_params = [{transform_indices = @transform_0, window_bounds = array<i64: 256, 512>}, {transform_indices = @transform_1, window_bounds = array<i64: 512, 128>}, {transform_indices = @transform_2, window_bounds = array<i64: 256, 1>}, {transform_indices = @transform_3, window_bounds = array<i64: 256, 128>}, {transform_indices = @transform_4, window_bounds = array<i64: 256, 128>}]} {
    %c0_i32 = arith.constant 0 : i32
    %0 = arith.cmpi eq, %arg1, %c0_i32 : i32
    %1 = arith.extui %0 : i1 to i32
    %c0_i32_0 = arith.constant 0 : i32
    %2 = arith.cmpi ne, %1, %c0_i32_0 : i32
    scf.if %2 {
      %cst_10 = arith.constant 0.000000e+00 : f32
      %12 = vector.broadcast %cst_10 : f32 to vector<256x128xf32>
      %c0_11 = arith.constant 0 : index
      %c0_12 = arith.constant 0 : index
      %13 = vector.load %arg7[%c0_11, %c0_12] : memref<256x128xf32, #tpu.memory_space<vmem>>, vector<256x128xf32>
      tpu.vector_store %arg7[%c0_11, %c0_12], %12 {strides = array<i32>} : memref<256x128xf32, #tpu.memory_space<vmem>>, vector<256x128xf32>,
    } else {
    }
    %c0 = arith.constant 0 : index
    %c0_1 = arith.constant 0 : index
    %3 = vector.load %arg7[%c0, %c0_1] : memref<256x128xf32, #tpu.memory_space<vmem>>, vector<256x128xf32>
    %c0_2 = arith.constant 0 : index
    %c0_3 = arith.constant 0 : index
    %4 = vector.load %arg2[%c0_2, %c0_3] : memref<256x512xbf16, #tpu.memory_space<vmem>>, vector<256x512xbf16>
    %c0_4 = arith.constant 0 : index
    %c0_5 = arith.constant 0 : index
    %5 = vector.load %arg3[%c0_4, %c0_5] : memref<512x128xbf16, #tpu.memory_space<vmem>>, vector<512x128xbf16>
    %cst = arith.constant dense<0.000000e+00> : vector<256x128xf32>
    %6 = tpu.matmul %4, %5, %cst {dimension_numbers = #tpu.dot_dimension_numbers<[1], [0], [0], [1], [0, 0, 1, 1], [], []>} : vector<256x512xbf16>, vector<512x128xbf16>, vector<256x128xf32> -> vector<256x128xf32>
    %7 = arith.addf %3, %6 : vector<256x128xf32>
    %c0_6 = arith.constant 0 : index
    %c0_7 = arith.constant 0 : index
    %8 = vector.load %arg7[%c0_6, %c0_7] : memref<256x128xf32, #tpu.memory_space<vmem>>, vector<256x128xf32>
    tpu.vector_store %arg7[%c0_6, %c0_7], %7 {strides = array<i32>} : memref<256x128xf32, #tpu.memory_space<vmem>>, vector<256x128xf32>,
    %c0_i32_8 = arith.constant 0 : i32
    %9 = arith.cmpi eq, %arg1, %c0_i32_8 : i32
    %10 = arith.extui %9 : i1 to i32
    %c0_i32_9 = arith.constant 0 : i32
    %11 = arith.cmpi ne, %10, %c0_i32_9 : i32
    scf.if %11 {
      %c0_10 = arith.constant 0 : index
      %c0_11 = arith.constant 0 : index
      %12 = vector.load %arg7[%c0_10, %c0_11] : memref<256x128xf32, #tpu.memory_space<vmem>>, vector<256x128xf32>
      %c0_12 = arith.constant 0 : index
      %c0_13 = arith.constant 0 : index
      %13 = vector.load %arg4[%c0_12, %c0_13] : memref<256x1xf32, #tpu.memory_space<vmem>>, vector<256x1xf32>
      %14 = vector.broadcast %13 : vector<256x1xf32> to vector<256x128xf32>
      %15 = arith.mulf %12, %14 : vector<256x128xf32>
      %c0_14 = arith.constant 0 : index
      %c0_15 = arith.constant 0 : index
      %16 = vector.load %arg5[%c0_14, %c0_15] : memref<256x128xf32, #tpu.memory_space<vmem>>, vector<256x128xf32>
      %17 = arith.addf %15, %16 : vector<256x128xf32>
      %cst_16 = arith.constant 0.000000e+00 : f32
      %18 = vector.broadcast %cst_16 : f32 to vector<256x128xf32>
      %19 = arith.maximumf %17, %18 : vector<256x128xf32>
      %20 = arith.truncf %19 : vector<256x128xf32> to vector<256x128xbf16>
      %c0_17 = arith.constant 0 : index
      %c0_18 = arith.constant 0 : index
      %21 = vector.load %arg6[%c0_17, %c0_18] : memref<256x128xbf16, #tpu.memory_space<vmem>>, vector<256x128xbf16>
      tpu.vector_store %arg6[%c0_17, %c0_18], %20 {strides = array<i32>} : memref<256x128xbf16, #tpu.memory_space<vmem>>, vector<256x128xbf16>,
    } else {
    }
    return
  }
  func.func @transform_0(%arg0: i32, %arg1: i32) -> (i32, i32) {
    %c0_i32 = arith.constant 0 : i32
    return %arg0, %arg1 : i32, i32
  }
  func.func @transform_1(%arg0: i32, %arg1: i32) -> (i32, i32) {
    %c0_i32 = arith.constant 0 : i32
    %c0_i32_0 = arith.constant 0 : i32
    return %arg1, %c0_i32 : i32, i32
  }
  func.func @transform_2(%arg0: i32, %arg1: i32) -> (i32, i32) {
    %c0_i32 = arith.constant 0 : i32
    %c0_i32_0 = arith.constant 0 : i32
    return %arg0, %c0_i32 : i32, i32
  }
  func.func @transform_3(%arg0: i32, %arg1: i32) -> (i32, i32) {
    %c0_i32 = arith.constant 0 : i32
    %c0_i32_0 = arith.constant 0 : i32
    return %arg0, %c0_i32 : i32, i32
  }
  func.func @transform_4(%arg0: i32, %arg1: i32) -> (i32, i32) {
    %c0_i32 = arith.constant 0 : i32
    %c0_i32_0 = arith.constant 0 : i32
    return %arg0, %c0_i32 : i32, i32
  }
}

module attributes {stable_mosaic.version = 11 : i64} {
  func.func @_agg_logsoftmax_kernel(%arg0: i32, %arg1: i32, %arg2: memref<256x512xbf16, #tpu.memory_space<vmem>>, %arg3: memref<512x128xbf16, #tpu.memory_space<vmem>>, %arg4: memref<256x1xf32, #tpu.memory_space<vmem>>, %arg5: memref<256x128xf32, #tpu.memory_space<vmem>>, %arg6: memref<256x128xf32, #tpu.memory_space<vmem>>, %arg7: memref<256x128xf32, #tpu.memory_space<vmem>>, %arg8: memref<256x128xf32, #tpu.memory_space<vmem>>) attributes {dimension_semantics = [#tpu.dimension_semantics<parallel>, #tpu.dimension_semantics<arbitrary>], iteration_bounds = array<i64: 2, 1>, scalar_prefetch = 0 : i64, scratch_operands = 1 : i64, tpu.core_type = #tpu.core_type<tc>, window_params = [{transform_indices = @transform_0, window_bounds = array<i64: 256, 512>}, {transform_indices = @transform_1, window_bounds = array<i64: 512, 128>}, {transform_indices = @transform_2, window_bounds = array<i64: 256, 1>}, {transform_indices = @transform_3, window_bounds = array<i64: 256, 128>}, {transform_indices = @transform_4, window_bounds = array<i64: 256, 128>}, {transform_indices = @transform_5, window_bounds = array<i64: 256, 128>}]} {
    %c0_i32 = arith.constant 0 : i32
    %0 = arith.cmpi eq, %arg1, %c0_i32 : i32
    %1 = arith.extui %0 : i1 to i32
    %c0_i32_0 = arith.constant 0 : i32
    %2 = arith.cmpi ne, %1, %c0_i32_0 : i32
    scf.if %2 {
      %cst_10 = arith.constant 0.000000e+00 : f32
      %12 = vector.broadcast %cst_10 : f32 to vector<256x128xf32>
      %c0_11 = arith.constant 0 : index
      %c0_12 = arith.constant 0 : index
      %13 = vector.load %arg8[%c0_11, %c0_12] : memref<256x128xf32, #tpu.memory_space<vmem>>, vector<256x128xf32>
      tpu.vector_store %arg8[%c0_11, %c0_12], %12 {strides = array<i32>} : memref<256x128xf32, #tpu.memory_space<vmem>>, vector<256x128xf32>,
    } else {
    }
    %c0 = arith.constant 0 : index
    %c0_1 = arith.constant 0 : index
    %3 = vector.load %arg8[%c0, %c0_1] : memref<256x128xf32, #tpu.memory_space<vmem>>, vector<256x128xf32>
    %c0_2 = arith.constant 0 : index
    %c0_3 = arith.constant 0 : index
    %4 = vector.load %arg2[%c0_2, %c0_3] : memref<256x512xbf16, #tpu.memory_space<vmem>>, vector<256x512xbf16>
    %c0_4 = arith.constant 0 : index
    %c0_5 = arith.constant 0 : index
    %5 = vector.load %arg3[%c0_4, %c0_5] : memref<512x128xbf16, #tpu.memory_space<vmem>>, vector<512x128xbf16>
    %cst = arith.constant dense<0.000000e+00> : vector<256x128xf32>
    %6 = tpu.matmul %4, %5, %cst {dimension_numbers = #tpu.dot_dimension_numbers<[1], [0], [0], [1], [0, 0, 1, 1], [], []>} : vector<256x512xbf16>, vector<512x128xbf16>, vector<256x128xf32> -> vector<256x128xf32>
    %7 = arith.addf %3, %6 : vector<256x128xf32>
    %c0_6 = arith.constant 0 : index
    %c0_7 = arith.constant 0 : index
    %8 = vector.load %arg8[%c0_6, %c0_7] : memref<256x128xf32, #tpu.memory_space<vmem>>, vector<256x128xf32>
    tpu.vector_store %arg8[%c0_6, %c0_7], %7 {strides = array<i32>} : memref<256x128xf32, #tpu.memory_space<vmem>>, vector<256x128xf32>,
    %c0_i32_8 = arith.constant 0 : i32
    %9 = arith.cmpi eq, %arg1, %c0_i32_8 : i32
    %10 = arith.extui %9 : i1 to i32
    %c0_i32_9 = arith.constant 0 : i32
    %11 = arith.cmpi ne, %10, %c0_i32_9 : i32
    scf.if %11 {
      %c0_10 = arith.constant 0 : index
      %c0_11 = arith.constant 0 : index
      %12 = vector.load %arg8[%c0_10, %c0_11] : memref<256x128xf32, #tpu.memory_space<vmem>>, vector<256x128xf32>
      %c0_12 = arith.constant 0 : index
      %c0_13 = arith.constant 0 : index
      %13 = vector.load %arg4[%c0_12, %c0_13] : memref<256x1xf32, #tpu.memory_space<vmem>>, vector<256x1xf32>
      %14 = vector.broadcast %13 : vector<256x1xf32> to vector<256x128xf32>
      %15 = arith.mulf %12, %14 : vector<256x128xf32>
      %c0_14 = arith.constant 0 : index
      %c0_15 = arith.constant 0 : index
      %16 = vector.load %arg5[%c0_14, %c0_15] : memref<256x128xf32, #tpu.memory_space<vmem>>, vector<256x128xf32>
      %17 = arith.addf %15, %16 : vector<256x128xf32>
      %c0_16 = arith.constant 0 : index
      %c0_17 = arith.constant 0 : index
      %18 = vector.load %arg6[%c0_16, %c0_17] : memref<256x128xf32, #tpu.memory_space<vmem>>, vector<256x128xf32>
      tpu.vector_store %arg6[%c0_16, %c0_17], %17 {strides = array<i32>} : memref<256x128xf32, #tpu.memory_space<vmem>>, vector<256x128xf32>,
      %19 = tpu.iota {dimensions = array<i32: 1>} : vector<256x128xi32>
      %c8_i32 = arith.constant 8 : i32
      %20 = vector.broadcast %c8_i32 : i32 to vector<256x128xi32>
      %21 = arith.cmpi slt, %19, %20 : vector<256x128xi32>
      %cst_18 = arith.constant 0xFF800000 : f32
      %22 = vector.broadcast %cst_18 : f32 to vector<256x128xf32>
      %23 = arith.select %21, %17, %22 : vector<256x128xi1>, vector<256x128xf32>
      %cst_19 = arith.constant dense<0xFF800000> : vector<256xf32>
      %24 = vector.multi_reduction <maximumf>, %23, %cst_19 [1] : vector<256x128xf32> to vector<256xf32>
      %25 = vector.shape_cast %24 : vector<256xf32> to vector<256x1xf32>
      %26 = vector.broadcast %25 : vector<256x1xf32> to vector<256x128xf32>
      %27 = arith.subf %17, %26 : vector<256x128xf32>
      %28 = math.exp %27 : vector<256x128xf32>
      %cst_20 = arith.constant 0.000000e+00 : f32
      %29 = vector.broadcast %cst_20 : f32 to vector<256x128xf32>
      %30 = arith.select %21, %28, %29 : vector<256x128xi1>, vector<256x128xf32>
      %cst_21 = arith.constant dense<0.000000e+00> : vector<256xf32>
      %31 = vector.multi_reduction <add>, %30, %cst_21 [1] : vector<256x128xf32> to vector<256xf32>
      %32 = vector.shape_cast %31 : vector<256xf32> to vector<256x1xf32>
      %33 = math.log %32 : vector<256x1xf32>
      %34 = arith.addf %33, %25 : vector<256x1xf32>
      %35 = vector.broadcast %34 : vector<256x1xf32> to vector<256x128xf32>
      %36 = arith.subf %17, %35 : vector<256x128xf32>
      %c0_22 = arith.constant 0 : index
      %c0_23 = arith.constant 0 : index
      %37 = vector.load %arg7[%c0_22, %c0_23] : memref<256x128xf32, #tpu.memory_space<vmem>>, vector<256x128xf32>
      tpu.vector_store %arg7[%c0_22, %c0_23], %36 {strides = array<i32>} : memref<256x128xf32, #tpu.memory_space<vmem>>, vector<256x128xf32>,
    } else {
    }
    return
  }
  func.func @transform_0(%arg0: i32, %arg1: i32) -> (i32, i32) {
    %c0_i32 = arith.constant 0 : i32
    return %arg0, %arg1 : i32, i32
  }
  func.func @transform_1(%arg0: i32, %arg1: i32) -> (i32, i32) {
    %c0_i32 = arith.constant 0 : i32
    %c0_i32_0 = arith.constant 0 : i32
    return %arg1, %c0_i32 : i32, i32
  }
  func.func @transform_2(%arg0: i32, %arg1: i32) -> (i32, i32) {
    %c0_i32 = arith.constant 0 : i32
    %c0_i32_0 = arith.constant 0 : i32
    return %arg0, %c0_i32 : i32, i32
  }
  func.func @transform_3(%arg0: i32, %arg1: i32) -> (i32, i32) {
    %c0_i32 = arith.constant 0 : i32
    %c0_i32_0 = arith.constant 0 : i32
    return %arg0, %c0_i32 : i32, i32
  }
  func.func @transform_4(%arg0: i32, %arg1: i32) -> (i32, i32) {
    %c0_i32 = arith.constant 0 : i32
    %c0_i32_0 = arith.constant 0 : i32
    return %arg0, %c0_i32 : i32, i32
  }
  func.func @transform_5(%arg0: i32, %arg1: i32) -> (i32, i32) {
    %c0_i32 = arith.constant 0 : i32
    %c0_i32_0 = arith.constant 0 : i32
    return %arg0, %c0_i32 : i32, i32
  }
}

</mosaic_0001>

<llo_original>
// kernel: graphsage_forward.4
$region0: #{graphsage_forward.4}
  #allocation0 [shape = 'u32[]', space=smem, size = 0x4, offset = 0x4, fixed_abs, tag = 'smem constant byte address 0x4 - core index']
  #allocation1 [shape = 'u32[144,128]{1,0:T(1,128)}', space=vmem, size = 0x12000, scoped, tag = 'internal scratch']
  %s0 = inlined_call_operand.vmem [shape: bf16[512,128], index: 0, kind: input, shape index: {}]
  %s1 = inlined_call_operand.vmem [shape: bf16[128,256], index: 1, kind: input, shape index: {}]
  %s2 = inlined_call_operand.vmem [shape: f32[1,128], index: 2, kind: input, shape index: {}]
  %s3 = inlined_call_operand.vmem [shape: bf16[512,128], index: 3, kind: output, shape index: {0}]
  %s4 = inlined_call_operand.vmem [shape: f32[512,128], index: 4, kind: output, shape index: {1}]
  %5 = xla_tuple %s3, %s4
  %s6 = sld [smem:[#allocation0]]
  $region53: #{graphsage_forward.4} parent=0
    _
  %s8 = ssub.s32 1, %s6
  %s9 = scalar_select 0, %s8, %s6
  loop: start=0, step=1, limit=4
  $region2: #{graphsage_forward.4} parent=0 // loop_pre_header
    _
  $region3: #{graphsage_forward.4} parent=0 // loop_header
    %s11 = sphi 0, %s15
    %p12 = scmp.ge.s32.totalorder %s11, 4
    %s21 = sphi 0, %s23
    %s24 = sphi 0, %s21
    %s25 = sphi 0, %s24
    %s41 = sphi 0, %s25
    %s45 = sphi 0, %s45
    %s47 = sphi 0, %s45
    %s48 = sphi 0, %s47
    %s62 = sphi 0, %s48
    %s66 = sphi 0, %s66
    %s68 = sphi 0, %s66
    %s69 = sphi 0, %s68
    %s83 = sphi 0, %s69
    %s89 = sphi 0, %s91
    %s92 = sphi 0, %s89
    %s93 = sphi 0, %s92
    %s109 = sphi 0, %s93
    %s115 = sphi 0, %s117
    %s118 = sphi 0, %s115
    %s119 = sphi 0, %s118
    %s135 = sphi 0, %s119
  $region4: #{graphsage_forward.4} parent=0 // loop_header_branch
    %14 = sbr.rel (%p12) target = $region8
  $region5: #{graphsage_forward.4} parent=0 // loop_body
    %s16 = ssub.s32 %s11, 1
    %s17 = ssub.s32 %s11, 2
    %s18 = sadd.s32 %s11, 1
    %s19 = ssub.s32 %s11, %s18
    %p20 = scmp.eq.s32.totalorder %s19, 0
    %s22 = sadd.s32 %s21, 1
    %s23 = scalar_select %p20, %s21, %s22
    %p26 = pneg %p20
    %p27 = scmp.eq.s32.totalorder %s11, 1
    %p28 = por %p26, %p27
    %p29 = scmp.ne.s32.totalorder %s21, %s24
    %p30 = scmp.eq.s32.totalorder %s11, 0
    %p31 = por %p29, %p30
    %p32 = scmp.ne.s32.totalorder %s21, %s24
    %p33 = scmp.eq.s32.totalorder %s16, 1
    %p34 = por %p32, %p33
    %p35 = scmp.ne.s32.totalorder %s24, %s25
    %p36 = scmp.eq.s32.totalorder %s16, 0
    %p37 = por %p35, %p36
    %p38 = scmp.ne.s32.totalorder %s24, %s25
    %p39 = scmp.eq.s32.totalorder %s17, 1
    %p40 = por %p38, %p39
    %p42 = scmp.ne.s32.totalorder %s25, %s41
    %p43 = scmp.eq.s32.totalorder %s17, 0
    %p44 = por %p42, %p43
    %s46 = sadd.s32 %s45, 1
    %p49 = scmp.eq.s32.totalorder %s11, 1
    %p50 = scmp.ne.s32.totalorder %s45, %s47
    %p51 = scmp.eq.s32.totalorder %s11, 0
    %p52 = por %p50, %p51
    %p53 = scmp.ne.s32.totalorder %s45, %s47
    %p54 = scmp.eq.s32.totalorder %s16, 1
    %p55 = por %p53, %p54
    %p56 = scmp.ne.s32.totalorder %s47, %s48
    %p57 = scmp.eq.s32.totalorder %s16, 0
    %p58 = por %p56, %p57
    %p59 = scmp.ne.s32.totalorder %s47, %s48
    %p60 = scmp.eq.s32.totalorder %s17, 1
    %p61 = por %p59, %p60
    %p63 = scmp.ne.s32.totalorder %s48, %s62
    %p64 = scmp.eq.s32.totalorder %s17, 0
    %p65 = por %p63, %p64
    %s67 = sadd.s32 %s66, 1
    %p70 = scmp.eq.s32.totalorder %s11, 1
    %p71 = scmp.ne.s32.totalorder %s66, %s68
    %p72 = scmp.eq.s32.totalorder %s11, 0
    %p73 = por %p71, %p72
    %p74 = scmp.ne.s32.totalorder %s66, %s68
    %p75 = scmp.eq.s32.totalorder %s16, 1
    %p76 = por %p74, %p75
    %p77 = scmp.ne.s32.totalorder %s68, %s69
    %p78 = scmp.eq.s32.totalorder %s16, 0
    %p79 = por %p77, %p78
    %p80 = scmp.ne.s32.totalorder %s68, %s69
    %p81 = scmp.eq.s32.totalorder %s17, 1
    %p82 = por %p80, %p81
    %p84 = scmp.ne.s32.totalorder %s69, %s83
    %p85 = scmp.eq.s32.totalorder %s17, 0
    %p86 = por %p84, %p85
    %s87 = ssub.s32 %s11, %s18
    %p88 = scmp.eq.s32.totalorder %s87, 0
    %s90 = sadd.s32 %s89, 1
    %s91 = scalar_select %p88, %s89, %s90
    %p94 = pneg %p88
    %p95 = scmp.eq.s32.totalorder %s11, 1
    %p96 = por %p94, %p95
    %p97 = scmp.ne.s32.totalorder %s89, %s92
    %p98 = scmp.eq.s32.totalorder %s11, 0
    %p99 = por %p97, %p98
    %p100 = scmp.ne.s32.totalorder %s89, %s92
    %p101 = scmp.eq.s32.totalorder %s16, 1
    %p102 = por %p100, %p101
    %p103 = scmp.ne.s32.totalorder %s92, %s93
    %p104 = scmp.eq.s32.totalorder %s16, 0
    %p105 = por %p103, %p104
    %p106 = scmp.ne.s32.totalorder %s92, %s93
    %p107 = scmp.eq.s32.totalorder %s17, 1
    %p108 = por %p106, %p107
    %p110 = scmp.ne.s32.totalorder %s93, %s109
    %p111 = scmp.eq.s32.totalorder %s17, 0
    %p112 = por %p110, %p111
    %s113 = ssub.s32 %s11, %s18
    %p114 = scmp.eq.s32.totalorder %s113, 0
    %s116 = sadd.s32 %s115, 1
    %s117 = scalar_select %p114, %s115, %s116
    %p120 = pneg %p114
    %p121 = scmp.eq.s32.totalorder %s11, 1
    %p122 = por %p120, %p121
    %p123 = scmp.ne.s32.totalorder %s115, %s118
    %p124 = scmp.eq.s32.totalorder %s11, 0
    %p125 = por %p123, %p124
    %p126 = scmp.ne.s32.totalorder %s115, %s118
    %p127 = scmp.eq.s32.totalorder %s16, 1
    %p128 = por %p126, %p127
    %p129 = scmp.ne.s32.totalorder %s118, %s119
    %p130 = scmp.eq.s32.totalorder %s16, 0
    %p131 = por %p129, %p130
    %p132 = scmp.ne.s32.totalorder %s118, %s119
    %p133 = scmp.eq.s32.totalorder %s17, 1
    %p134 = por %p132, %p133
    %p136 = scmp.ne.s32.totalorder %s119, %s135
    %p137 = scmp.eq.s32.totalorder %s17, 0
    %p138 = por %p136, %p137
    %p139 = scmp.le.s32.totalorder 1, %s11
    %p140 = scmp.lt.s32.totalorder %s11, 3
    %p141 = pnand %p139, %p140
    %p142 = pneg %p141
    // Predicated region
    $region9: #{graphsage_forward.4} parent=5 // pred_check
      _
    $region10: #{graphsage_forward.4} parent=5 // pred_check_branch
      %144 = sbr.rel (%p141) target = $region12
    $region11: #{graphsage_forward.4} parent=5 // pred_region
      %s145 = ssub.s32 %s11, 1
      // Predicated region
      $region13: #{graphsage_forward.4} parent=11 // pred_check
        %p146 = pneg %p58
      $region14: #{graphsage_forward.4} parent=11 // pred_check_branch
        %148 = sbr.rel (%p146) target = $region16
      $region15: #{graphsage_forward.4} parent=11 // pred_region
        _
      $region16: #{graphsage_forward.4} parent=11 // pred_fallthru
        _
      // Predicated region
      $region17: #{graphsage_forward.4} parent=11 // pred_check
        %p149 = pneg %p79
      $region18: #{graphsage_forward.4} parent=11 // pred_check_branch
        %151 = sbr.rel (%p149) target = $region20
      $region19: #{graphsage_forward.4} parent=11 // pred_region
        _
      $region20: #{graphsage_forward.4} parent=11 // pred_fallthru
        _
    $region12: #{graphsage_forward.4} parent=5 // pred_fallthru
      _
    %p152 = scmp.lt.s32.totalorder %s11, 2
    // Predicated region
    $region21: #{graphsage_forward.4} parent=5 // pred_check
      %p153 = pneg %p152
    $region22: #{graphsage_forward.4} parent=5 // pred_check_branch
      %155 = sbr.rel (%p153) target = $region24
    $region23: #{graphsage_forward.4} parent=5 // pred_region
      // Predicated region
      $region25: #{graphsage_forward.4} parent=23 // pred_check
        %p156 = pneg %p31
      $region26: #{graphsage_forward.4} parent=23 // pred_check_branch
        %158 = sbr.rel (%p156) target = $region28
      $region27: #{graphsage_forward.4} parent=23 // pred_region
        %s159 = smul.u32 32, %s11
        %p160 = scmp.lt.s32.totalorder %s159, 63
        %s161 = scalar_select %p160, %s159, 63
        %s162 = smul.addr %s161, 4
        %s163 = scalar_lea.vmem %s0, %s162
        %s164 = smul.u32 32, %s11
      $region28: #{graphsage_forward.4} parent=23 // pred_fallthru
        _
    $region24: #{graphsage_forward.4} parent=5 // pred_fallthru
      _
    %p165 = scmp.le.s32.totalorder 1, %s11
    %p166 = scmp.lt.s32.totalorder %s11, 3
    %p167 = pnand %p165, %p166
    %p168 = pneg %p167
    // Predicated region
    $region29: #{graphsage_forward.4} parent=5 // pred_check
      _
    $region30: #{graphsage_forward.4} parent=5 // pred_check_branch
      %170 = sbr.rel (%p167) target = $region32
    $region31: #{graphsage_forward.4} parent=5 // pred_region
      %s171 = ssub.s32 %s11, 1
      %s172 = smul.u32 32, %s16
      %p173 = scmp.lt.s32.totalorder %s172, 63
      %s174 = scalar_select %p173, %s172, 63
      %s175 = smul.addr %s174, 4
      %s176 = scalar_lea.vmem %s0, %s175
      %p177 = pneg %p37
      %p178 = pneg %p34
      %p179 = pneg %p58
      %p180 = pneg %p55
      %p181 = pneg %p79
      %p182 = pneg %p76
      %p183 = pneg %p105
      %p184 = pneg %p102
      %s185 = smul.u32 32, %s16
      %p186 = scmp.lt.s32.totalorder %s185, 63
      %s187 = scalar_select %p186, %s185, 63
      %s188 = smul.addr %s187, 4
      %s189 = scalar_lea.vmem %s3, %s188
      %p190 = pneg %p131
      %p191 = pneg %p128
      %s192 = smul.u32 32, %s16
      %p193 = scmp.lt.s32.totalorder %s192, 63
      %s194 = scalar_select %p193, %s192, 63
      %s195 = smul.addr %s194, 8
      %s196 = scalar_lea.vmem %s4, %s195
      %s197 = smul.u32 32, %s16
      %p198 = scmp.lt.s32.totalorder %s197, 63
      %s199 = scalar_select %p198, %s197, 63
      %s200 = smul.addr %s199, 4
      %s201 = scalar_lea.vmem %s0, %s200
      %s202 = smul.u32 32, %s16
      %s203 = smul.u32 32, %s16
      %p204 = scmp.lt.s32.totalorder %s203, 63
      %s205 = scalar_select %p204, %s203, 63
      %s206 = smul.addr %s205, 4
      %s207 = scalar_lea.vmem %s3, %s206
      %s208 = smul.u32 32, %s16
      %s209 = smul.u32 32, %s16
      %p210 = scmp.lt.s32.totalorder %s209, 63
      %s211 = scalar_select %p210, %s209, 63
      %s212 = smul.addr %s211, 8
      %s213 = scalar_lea.vmem %s4, %s212
      %s214 = smul.u32 32, %s16
      %v216 = vld [vmem:[%s201] sm:$0xf]
      %v217 = vld [vmem:[%s201 + $0x4] sm:$0xf]
      %v218 = vld [vmem:[%s201 + $0x8] sm:$0xf]
      %v219 = vld [vmem:[%s201 + $0xc] sm:$0xf]
      %v220 = vld [vmem:[%s201 + $0x10] sm:$0xf]
      %v221 = vld [vmem:[%s201 + $0x14] sm:$0xf]
      %v222 = vld [vmem:[%s201 + $0x18] sm:$0xf]
      %v223 = vld [vmem:[%s201 + $0x1c] sm:$0xf]
      %v224 = vld [vmem:[%s201 + $0x20] sm:$0xf]
      %v225 = vld [vmem:[%s201 + $0x24] sm:$0xf]
      %v226 = vld [vmem:[%s201 + $0x28] sm:$0xf]
      %v227 = vld [vmem:[%s201 + $0x2c] sm:$0xf]
      %v228 = vld [vmem:[%s201 + $0x30] sm:$0xf]
      %v229 = vld [vmem:[%s201 + $0x34] sm:$0xf]
      %v230 = vld [vmem:[%s201 + $0x38] sm:$0xf]
      %v231 = vld [vmem:[%s201 + $0x3c] sm:$0xf]
      %v232 = vld [vmem:[%s201 + $0x40] sm:$0xf]
      %v233 = vld [vmem:[%s201 + $0x44] sm:$0xf]
      %v234 = vld [vmem:[%s201 + $0x48] sm:$0xf]
      %v235 = vld [vmem:[%s201 + $0x4c] sm:$0xf]
      %v236 = vld [vmem:[%s201 + $0x50] sm:$0xf]
      %v237 = vld [vmem:[%s201 + $0x54] sm:$0xf]
      %v238 = vld [vmem:[%s201 + $0x58] sm:$0xf]
      %v239 = vld [vmem:[%s201 + $0x5c] sm:$0xf]
      %v240 = vld [vmem:[%s201 + $0x60] sm:$0xf]
      %v241 = vld [vmem:[%s201 + $0x64] sm:$0xf]
      %v242 = vld [vmem:[%s201 + $0x68] sm:$0xf]
      %v243 = vld [vmem:[%s201 + $0x6c] sm:$0xf]
      %v244 = vld [vmem:[%s201 + $0x70] sm:$0xf]
      %v245 = vld [vmem:[%s201 + $0x74] sm:$0xf]
      %v246 = vld [vmem:[%s201 + $0x78] sm:$0xf]
      %v247 = vld [vmem:[%s201 + $0x7c] sm:$0xf]
      %v248 = vld [vmem:[%s1] sm:$0xff]
      %v249 = vld [vmem:[%s1 + $0x8] sm:$0xff]
      %v250 = vld [vmem:[%s1 + $0x10] sm:$0xff]
      %v251 = vld [vmem:[%s1 + $0x18] sm:$0xff]
      %v252 = vld [vmem:[%s1 + $0x20] sm:$0xff]
      %v253 = vld [vmem:[%s1 + $0x28] sm:$0xff]
      %v254 = vld [vmem:[%s1 + $0x30] sm:$0xff]
      %v255 = vld [vmem:[%s1 + $0x38] sm:$0xff]
      %v256 = vld [vmem:[%s1 + $0x40] sm:$0xff]
      %v257 = vld [vmem:[%s1 + $0x48] sm:$0xff]
      %v258 = vld [vmem:[%s1 + $0x50] sm:$0xff]
      %v259 = vld [vmem:[%s1 + $0x58] sm:$0xff]
      %v260 = vld [vmem:[%s1 + $0x60] sm:$0xff]
      %v261 = vld [vmem:[%s1 + $0x68] sm:$0xff]
      %v262 = vld [vmem:[%s1 + $0x70] sm:$0xff]
      %v263 = vld [vmem:[%s1 + $0x78] sm:$0xff]
      %v296 = vunpack.c.l.b16 %v216
      %v297 = vunpack.c.l.b16 %v217
      %v298 = vunpack.c.l.b16 %v218
      %v299 = vunpack.c.l.b16 %v219
      %v300 = vunpack.c.l.b16 %v220
      %v301 = vunpack.c.l.b16 %v221
      %v302 = vunpack.c.l.b16 %v222
      %v303 = vunpack.c.l.b16 %v223
      %v304 = vunpack.c.l.b16 %v224
      %v305 = vunpack.c.l.b16 %v225
      %v306 = vunpack.c.l.b16 %v226
      %v307 = vunpack.c.l.b16 %v227
      %v308 = vunpack.c.l.b16 %v228
      %v309 = vunpack.c.l.b16 %v229
      %v310 = vunpack.c.l.b16 %v230
      %v311 = vunpack.c.l.b16 %v231
      %v312 = vunpack.c.l.b16 %v232
      %v313 = vunpack.c.l.b16 %v233
      %v314 = vunpack.c.l.b16 %v234
      %v315 = vunpack.c.l.b16 %v235
      %v316 = vunpack.c.l.b16 %v236
      %v317 = vunpack.c.l.b16 %v237
      %v318 = vunpack.c.l.b16 %v238
      %v319 = vunpack.c.l.b16 %v239
      %v320 = vunpack.c.l.b16 %v240
      %v321 = vunpack.c.l.b16 %v241
      %v322 = vunpack.c.l.b16 %v242
      %v323 = vunpack.c.l.b16 %v243
      %v324 = vunpack.c.l.b16 %v244
      %v325 = vunpack.c.l.b16 %v245
      %v326 = vunpack.c.l.b16 %v246
      %v327 = vunpack.c.l.b16 %v247
      %v328 = vpack.c.b16 %v297, %v296
      %v329 = vpack.c.b16 %v299, %v298
      %v330 = vpack.c.b16 %v301, %v300
      %v331 = vpack.c.b16 %v303, %v302
      %v332 = vpack.c.b16 %v305, %v304
      %v333 = vpack.c.b16 %v307, %v306
      %v334 = vpack.c.b16 %v309, %v308
      %v335 = vpack.c.b16 %v311, %v310
      %v336 = vpack.c.b16 %v313, %v312
      %v337 = vpack.c.b16 %v315, %v314
      %v338 = vpack.c.b16 %v317, %v316
      %v339 = vpack.c.b16 %v319, %v318
      %v340 = vpack.c.b16 %v321, %v320
      %v341 = vpack.c.b16 %v323, %v322
      %v342 = vpack.c.b16 %v325, %v324
      %v343 = vpack.c.b16 %v327, %v326
      %v376 = vunpack.c.l.b16 %v248
      %v377 = vunpack.c.h.b16 %v248
      %v378 = vunpack.c.l.b16 %v249
      %v379 = vunpack.c.h.b16 %v249
      %v380 = vunpack.c.l.b16 %v250
      %v381 = vunpack.c.h.b16 %v250
      %v382 = vunpack.c.l.b16 %v251
      %v383 = vunpack.c.h.b16 %v251
      %v384 = vunpack.c.l.b16 %v252
      %v385 = vunpack.c.h.b16 %v252
      %v386 = vunpack.c.l.b16 %v253
      %v387 = vunpack.c.h.b16 %v253
      %v388 = vunpack.c.l.b16 %v254
      %v389 = vunpack.c.h.b16 %v254
      %v390 = vunpack.c.l.b16 %v255
      %v391 = vunpack.c.h.b16 %v255
      %v392 = vunpack.c.l.b16 %v256
      %v393 = vunpack.c.h.b16 %v256
      %v394 = vunpack.c.l.b16 %v257
      %v395 = vunpack.c.h.b16 %v257
      %v396 = vunpack.c.l.b16 %v258
      %v397 = vunpack.c.h.b16 %v258
      %v398 = vunpack.c.l.b16 %v259
      %v399 = vunpack.c.h.b16 %v259
      %v400 = vunpack.c.l.b16 %v260
      %v401 = vunpack.c.h.b16 %v260
      %v402 = vunpack.c.l.b16 %v261
      %v403 = vunpack.c.h.b16 %v261
      %v404 = vunpack.c.l.b16 %v262
      %v405 = vunpack.c.h.b16 %v262
      %v406 = vunpack.c.l.b16 %v263
      %v407 = vunpack.c.h.b16 %v263
      %v408 = vpack.c.b16 %v378, %v376
      %v409 = vpack.c.b16 %v379, %v377
      %v410 = vpack.c.b16 %v382, %v380
      %v411 = vpack.c.b16 %v383, %v381
      %v412 = vpack.c.b16 %v386, %v384
      %v413 = vpack.c.b16 %v387, %v385
      %v414 = vpack.c.b16 %v390, %v388
      %v415 = vpack.c.b16 %v391, %v389
      %v416 = vpack.c.b16 %v394, %v392
      %v417 = vpack.c.b16 %v395, %v393
      %v418 = vpack.c.b16 %v398, %v396
      %v419 = vpack.c.b16 %v399, %v397
      %v420 = vpack.c.b16 %v402, %v400
      %v421 = vpack.c.b16 %v403, %v401
      %v422 = vpack.c.b16 %v406, %v404
      %v423 = vpack.c.b16 %v407, %v405
      %440 = vmatprep.subr.bf16.mxu0 %v423
      %441 = vmatpush1.bf16.msra.mxu0 %v422
      %442 = vmatprep.subr.bf16.mxu0 %v421
      %443 = vmatpush1.bf16.msra.mxu0 %v420
      %444 = vmatprep.subr.bf16.mxu0 %v419
      %445 = vmatpush1.bf16.msra.mxu0 %v418
      %446 = vmatprep.subr.bf16.mxu0 %v417
      %447 = vmatpush1.bf16.msra.mxu0 %v416
      %448 = vmatprep.subr.bf16.mxu0 %v415
      %449 = vmatpush1.bf16.msra.mxu0 %v414
      %450 = vmatprep.subr.bf16.mxu0 %v413
      %451 = vmatpush1.bf16.msra.mxu0 %v412
      %452 = vmatprep.subr.bf16.mxu0 %v411
      %453 = vmatpush1.bf16.msra.mxu0 %v410
      %454 = vmatprep.subr.bf16.mxu0 %v409
      %455 = vmatpush1.bf16.msra.mxu0 %v408
      %456 = vmatprep.subr.bf16.mxu0 0
      %457 = vmatpush2.bf16.msra.mxu0 0
      %458 = vmatprep.subr.bf16.mxu0 0
      %459 = vmatpush2.bf16.msra.mxu0 0
      %460 = vmatprep.subr.bf16.mxu0 0
      %461 = vmatpush2.bf16.msra.mxu0 0
      %462 = vmatprep.subr.bf16.mxu0 0
      %463 = vmatpush2.bf16.msra.mxu0 0
      %464 = vmatprep.subr.bf16.mxu0 0
      %465 = vmatpush2.bf16.msra.mxu0 0
      %466 = vmatprep.subr.bf16.mxu0 0
      %467 = vmatpush2.bf16.msra.mxu0 0
      %468 = vmatprep.subr.bf16.mxu0 0
      %469 = vmatpush2.bf16.msra.mxu0 0
      %470 = vmatprep.subr.bf16.mxu0 0
      %471 = vmatpush2.bf16.msra.mxu0 0
      %472 = vmatprep.mubr.bf16.mxu0 0
      %473 = vmatmul.mubr.bf16.gmra.mxu0 %v328
      %v474 = vpop.f32.mrf.mxu0
      %v475 = vadd.f32 0.0, %v474
      %v476 = vpop.f32.mrf.mxu0
      %v477 = vadd.f32 0.0, %v476
      %v478 = vpop.f32.mrf.mxu0
      %v479 = vadd.f32 0.0, %v478
      %v480 = vpop.f32.mrf.mxu0
      %v481 = vadd.f32 0.0, %v480
      %482 = vmatprep.mubr.bf16.mxu0 0
      %483 = vmatmul.mubr.bf16.gmra.mxu0 %v329
      %v484 = vpop.f32.mrf.mxu0
      %v485 = vadd.f32 0.0, %v484
      %v486 = vpop.f32.mrf.mxu0
      %v487 = vadd.f32 0.0, %v486
      %v488 = vpop.f32.mrf.mxu0
      %v489 = vadd.f32 0.0, %v488
      %v490 = vpop.f32.mrf.mxu0
      %v491 = vadd.f32 0.0, %v490
      %492 = vmatprep.mubr.bf16.mxu0 0
      %493 = vmatmul.mubr.bf16.gmra.mxu0 %v330
      %v494 = vpop.f32.mrf.mxu0
      %v495 = vadd.f32 0.0, %v494
      %v496 = vpop.f32.mrf.mxu0
      %v497 = vadd.f32 0.0, %v496
      %v498 = vpop.f32.mrf.mxu0
      %v499 = vadd.f32 0.0, %v498
      %v500 = vpop.f32.mrf.mxu0
      %v501 = vadd.f32 0.0, %v500
      %502 = vmatprep.mubr.bf16.mxu0 0
      %503 = vmatmul.mubr.bf16.gmra.mxu0 %v331
      %v504 = vpop.f32.mrf.mxu0
      %v505 = vadd.f32 0.0, %v504
      %v506 = vpop.f32.mrf.mxu0
      %v507 = vadd.f32 0.0, %v506
      %v508 = vpop.f32.mrf.mxu0
      %v509 = vadd.f32 0.0, %v508
      %v510 = vpop.f32.mrf.mxu0
      %v511 = vadd.f32 0.0, %v510
      %512 = vmatprep.mubr.bf16.mxu0 0
      %513 = vmatmul.mubr.bf16.gmra.mxu0 %v332
      %v514 = vpop.f32.mrf.mxu0
      %v515 = vadd.f32 0.0, %v514
      %v516 = vpop.f32.mrf.mxu0
      %v517 = vadd.f32 0.0, %v516
      %v518 = vpop.f32.mrf.mxu0
      %v519 = vadd.f32 0.0, %v518
      %v520 = vpop.f32.mrf.mxu0
      %v521 = vadd.f32 0.0, %v520
      %522 = vmatprep.mubr.bf16.mxu0 0
      %523 = vmatmul.mubr.bf16.gmra.mxu0 %v333
      %v524 = vpop.f32.mrf.mxu0
      %v525 = vadd.f32 0.0, %v524
      %v526 = vpop.f32.mrf.mxu0
      %v527 = vadd.f32 0.0, %v526
      %v528 = vpop.f32.mrf.mxu0
      %v529 = vadd.f32 0.0, %v528
      %v530 = vpop.f32.mrf.mxu0
      %v531 = vadd.f32 0.0, %v530
      %532 = vmatprep.mubr.bf16.mxu0 0
      %533 = vmatmul.mubr.bf16.gmra.mxu0 %v334
      %v534 = vpop.f32.mrf.mxu0
      %v535 = vadd.f32 0.0, %v534
      %v536 = vpop.f32.mrf.mxu0
      %v537 = vadd.f32 0.0, %v536
      %v538 = vpop.f32.mrf.mxu0
      %v539 = vadd.f32 0.0, %v538
      %v540 = vpop.f32.mrf.mxu0
      %v541 = vadd.f32 0.0, %v540
      %542 = vmatprep.mubr.bf16.mxu0 0
      %543 = vmatmul.mubr.bf16.gmra.mxu0 %v335
      %v544 = vpop.f32.mrf.mxu0
      %v545 = vadd.f32 0.0, %v544
      %v546 = vpop.f32.mrf.mxu0
      %v547 = vadd.f32 0.0, %v546
      %v548 = vpop.f32.mrf.mxu0
      %v549 = vadd.f32 0.0, %v548
      %v550 = vpop.f32.mrf.mxu0
      %v551 = vadd.f32 0.0, %v550
      %552 = vmatprep.mubr.bf16.mxu0 0
      %553 = vmatmul.mubr.bf16.gmra.mxu0 %v336
      %v554 = vpop.f32.mrf.mxu0
      %v555 = vadd.f32 0.0, %v554
      %v556 = vpop.f32.mrf.mxu0
      %v557 = vadd.f32 0.0, %v556
      %v558 = vpop.f32.mrf.mxu0
      %v559 = vadd.f32 0.0, %v558
      %v560 = vpop.f32.mrf.mxu0
      %v561 = vadd.f32 0.0, %v560
      %562 = vmatprep.mubr.bf16.mxu0 0
      %563 = vmatmul.mubr.bf16.gmra.mxu0 %v337
      %v564 = vpop.f32.mrf.mxu0
      %v565 = vadd.f32 0.0, %v564
      %v566 = vpop.f32.mrf.mxu0
      %v567 = vadd.f32 0.0, %v566
      %v568 = vpop.f32.mrf.mxu0
      %v569 = vadd.f32 0.0, %v568
      %v570 = vpop.f32.mrf.mxu0
      %v571 = vadd.f32 0.0, %v570
      %572 = vmatprep.mubr.bf16.mxu0 0
      %573 = vmatmul.mubr.bf16.gmra.mxu0 %v338
      %v574 = vpop.f32.mrf.mxu0
      %v575 = vadd.f32 0.0, %v574
      %v576 = vpop.f32.mrf.mxu0
      %v577 = vadd.f32 0.0, %v576
      %v578 = vpop.f32.mrf.mxu0
      %v579 = vadd.f32 0.0, %v578
      %v580 = vpop.f32.mrf.mxu0
      %v581 = vadd.f32 0.0, %v580
      %582 = vmatprep.mubr.bf16.mxu0 0
      %583 = vmatmul.mubr.bf16.gmra.mxu0 %v339
      %v584 = vpop.f32.mrf.mxu0
      %v585 = vadd.f32 0.0, %v584
      %v586 = vpop.f32.mrf.mxu0
      %v587 = vadd.f32 0.0, %v586
      %v588 = vpop.f32.mrf.mxu0
      %v589 = vadd.f32 0.0, %v588
      %v590 = vpop.f32.mrf.mxu0
      %v591 = vadd.f32 0.0, %v590
      %592 = vmatprep.mubr.bf16.mxu0 0
      %593 = vmatmul.mubr.bf16.gmra.mxu0 %v340
      %v594 = vpop.f32.mrf.mxu0
      %v595 = vadd.f32 0.0, %v594
      %v596 = vpop.f32.mrf.mxu0
      %v597 = vadd.f32 0.0, %v596
      %v598 = vpop.f32.mrf.mxu0
      %v599 = vadd.f32 0.0, %v598
      %v600 = vpop.f32.mrf.mxu0
      %v601 = vadd.f32 0.0, %v600
      %602 = vmatprep.mubr.bf16.mxu0 0
      %603 = vmatmul.mubr.bf16.gmra.mxu0 %v341
      %v604 = vpop.f32.mrf.mxu0
      %v605 = vadd.f32 0.0, %v604
      %v606 = vpop.f32.mrf.mxu0
      %v607 = vadd.f32 0.0, %v606
      %v608 = vpop.f32.mrf.mxu0
      %v609 = vadd.f32 0.0, %v608
      %v610 = vpop.f32.mrf.mxu0
      %v611 = vadd.f32 0.0, %v610
      %612 = vmatprep.mubr.bf16.mxu0 0
      %613 = vmatmul.mubr.bf16.gmra.mxu0 %v342
      %v614 = vpop.f32.mrf.mxu0
      %v615 = vadd.f32 0.0, %v614
      %v616 = vpop.f32.mrf.mxu0
      %v617 = vadd.f32 0.0, %v616
      %v618 = vpop.f32.mrf.mxu0
      %v619 = vadd.f32 0.0, %v618
      %v620 = vpop.f32.mrf.mxu0
      %v621 = vadd.f32 0.0, %v620
      %622 = vmatprep.mubr.bf16.mxu0 0
      %623 = vmatmul.mubr.bf16.gmra.mxu0 %v343
      %v624 = vpop.f32.mrf.mxu0
      %v625 = vadd.f32 0.0, %v624
      %v626 = vpop.f32.mrf.mxu0
      %v627 = vadd.f32 0.0, %v626
      %v628 = vpop.f32.mrf.mxu0
      %v629 = vadd.f32 0.0, %v628
      %v630 = vpop.f32.mrf.mxu0
      %v631 = vadd.f32 0.0, %v630
      %632 = vdwg.mxu0
      %v633 = vpack.c.bf16 %v479, %v475
      %v634 = vpack.c.bf16 %v489, %v485
      %v635 = vpack.c.bf16 %v499, %v495
      %v636 = vpack.c.bf16 %v509, %v505
      %v637 = vpack.c.bf16 %v519, %v515
      %v638 = vpack.c.bf16 %v529, %v525
      %v639 = vpack.c.bf16 %v539, %v535
      %v640 = vpack.c.bf16 %v549, %v545
      %v641 = vpack.c.bf16 %v559, %v555
      %v642 = vpack.c.bf16 %v569, %v565
      %v643 = vpack.c.bf16 %v579, %v575
      %v644 = vpack.c.bf16 %v589, %v585
      %v645 = vpack.c.bf16 %v599, %v595
      %v646 = vpack.c.bf16 %v609, %v605
      %v647 = vpack.c.bf16 %v619, %v615
      %v648 = vpack.c.bf16 %v629, %v625
      %v665 = vunpack.c.l.b16 %v633
      %v666 = vunpack.c.h.b16 %v633
      %v667 = vunpack.c.l.b16 %v634
      %v668 = vunpack.c.h.b16 %v634
      %v669 = vunpack.c.l.b16 %v635
      %v670 = vunpack.c.h.b16 %v635
      %v671 = vunpack.c.l.b16 %v636
      %v672 = vunpack.c.h.b16 %v636
      %v673 = vunpack.c.l.b16 %v637
      %v674 = vunpack.c.h.b16 %v637
      %v675 = vunpack.c.l.b16 %v638
      %v676 = vunpack.c.h.b16 %v638
      %v677 = vunpack.c.l.b16 %v639
      %v678 = vunpack.c.h.b16 %v639
      %v679 = vunpack.c.l.b16 %v640
      %v680 = vunpack.c.h.b16 %v640
      %v681 = vunpack.c.l.b16 %v641
      %v682 = vunpack.c.h.b16 %v641
      %v683 = vunpack.c.l.b16 %v642
      %v684 = vunpack.c.h.b16 %v642
      %v685 = vunpack.c.l.b16 %v643
      %v686 = vunpack.c.h.b16 %v643
      %v687 = vunpack.c.l.b16 %v644
      %v688 = vunpack.c.h.b16 %v644
      %v689 = vunpack.c.l.b16 %v645
      %v690 = vunpack.c.h.b16 %v645
      %v691 = vunpack.c.l.b16 %v646
      %v692 = vunpack.c.h.b16 %v646
      %v693 = vunpack.c.l.b16 %v647
      %v694 = vunpack.c.h.b16 %v647
      %v695 = vunpack.c.l.b16 %v648
      %v696 = vunpack.c.h.b16 %v648
      %v697 = vpack.c.b16 %v665, %v665
      %v698 = vpack.c.b16 %v666, %v666
      %v699 = vpack.c.b16 %v667, %v667
      %v700 = vpack.c.b16 %v668, %v668
      %v701 = vpack.c.b16 %v669, %v669
      %v702 = vpack.c.b16 %v670, %v670
      %v703 = vpack.c.b16 %v671, %v671
      %v704 = vpack.c.b16 %v672, %v672
      %v705 = vpack.c.b16 %v673, %v673
      %v706 = vpack.c.b16 %v674, %v674
      %v707 = vpack.c.b16 %v675, %v675
      %v708 = vpack.c.b16 %v676, %v676
      %v709 = vpack.c.b16 %v677, %v677
      %v710 = vpack.c.b16 %v678, %v678
      %v711 = vpack.c.b16 %v679, %v679
      %v712 = vpack.c.b16 %v680, %v680
      %v713 = vpack.c.b16 %v681, %v681
      %v714 = vpack.c.b16 %v682, %v682
      %v715 = vpack.c.b16 %v683, %v683
      %v716 = vpack.c.b16 %v684, %v684
      %v717 = vpack.c.b16 %v685, %v685
      %v718 = vpack.c.b16 %v686, %v686
      %v719 = vpack.c.b16 %v687, %v687
      %v720 = vpack.c.b16 %v688, %v688
      %v721 = vpack.c.b16 %v689, %v689
      %v722 = vpack.c.b16 %v690, %v690
      %v723 = vpack.c.b16 %v691, %v691
      %v724 = vpack.c.b16 %v692, %v692
      %v725 = vpack.c.b16 %v693, %v693
      %v726 = vpack.c.b16 %v694, %v694
      %v727 = vpack.c.b16 %v695, %v695
      %v728 = vpack.c.b16 %v696, %v696
      %761 = vst [vmem:[%s207] sm:$0xf] %v697
      %762 = vst [vmem:[%s207 + $0x4] sm:$0xf] %v698
      %763 = vst [vmem:[%s207 + $0x8] sm:$0xf] %v699
      %764 = vst [vmem:[%s207 + $0xc] sm:$0xf] %v700
      %765 = vst [vmem:[%s207 + $0x10] sm:$0xf] %v701
      %766 = vst [vmem:[%s207 + $0x14] sm:$0xf] %v702
      %767 = vst [vmem:[%s207 + $0x18] sm:$0xf] %v703
      %768 = vst [vmem:[%s207 + $0x1c] sm:$0xf] %v704
      %769 = vst [vmem:[%s207 + $0x20] sm:$0xf] %v705
      %770 = vst [vmem:[%s207 + $0x24] sm:$0xf] %v706
      %771 = vst [vmem:[%s207 + $0x28] sm:$0xf] %v707
      %772 = vst [vmem:[%s207 + $0x2c] sm:$0xf] %v708
      %773 = vst [vmem:[%s207 + $0x30] sm:$0xf] %v709
      %774 = vst [vmem:[%s207 + $0x34] sm:$0xf] %v710
      %775 = vst [vmem:[%s207 + $0x38] sm:$0xf] %v711
      %776 = vst [vmem:[%s207 + $0x3c] sm:$0xf] %v712
      %777 = vst [vmem:[%s207 + $0x40] sm:$0xf] %v713
      %778 = vst [vmem:[%s207 + $0x44] sm:$0xf] %v714
      %779 = vst [vmem:[%s207 + $0x48] sm:$0xf] %v715
      %780 = vst [vmem:[%s207 + $0x4c] sm:$0xf] %v716
      %781 = vst [vmem:[%s207 + $0x50] sm:$0xf] %v717
      %782 = vst [vmem:[%s207 + $0x54] sm:$0xf] %v718
      %783 = vst [vmem:[%s207 + $0x58] sm:$0xf] %v719
      %784 = vst [vmem:[%s207 + $0x5c] sm:$0xf] %v720
      %785 = vst [vmem:[%s207 + $0x60] sm:$0xf] %v721
      %786 = vst [vmem:[%s207 + $0x64] sm:$0xf] %v722
      %787 = vst [vmem:[%s207 + $0x68] sm:$0xf] %v723
      %788 = vst [vmem:[%s207 + $0x6c] sm:$0xf] %v724
      %789 = vst [vmem:[%s207 + $0x70] sm:$0xf] %v725
      %790 = vst [vmem:[%s207 + $0x74] sm:$0xf] %v726
      %791 = vst [vmem:[%s207 + $0x78] sm:$0xf] %v727
      %792 = vst [vmem:[%s207 + $0x7c] sm:$0xf] %v728
      %v793 = vld [vmem:[%s2] sm:$0x1]
      %v795 = vlaneseq
      %v796 = vshrl.u32 %v795, 7
      %v797 = vsub.s32 0, %v796
      %v798 = vrot.slane %v793, %v797
      %v800 = vadd.f32 %v477, %v798
      %v801 = vadd.f32 %v481, %v798
      %v802 = vadd.f32 %v487, %v798
      %v803 = vadd.f32 %v491, %v798
      %v804 = vadd.f32 %v497, %v798
      %v805 = vadd.f32 %v501, %v798
      %v806 = vadd.f32 %v507, %v798
      %v807 = vadd.f32 %v511, %v798
      %v808 = vadd.f32 %v517, %v798
      %v809 = vadd.f32 %v521, %v798
      %v810 = vadd.f32 %v527, %v798
      %v811 = vadd.f32 %v531, %v798
      %v812 = vadd.f32 %v537, %v798
      %v813 = vadd.f32 %v541, %v798
      %v814 = vadd.f32 %v547, %v798
      %v815 = vadd.f32 %v551, %v798
      %v816 = vadd.f32 %v557, %v798
      %v817 = vadd.f32 %v561, %v798
      %v818 = vadd.f32 %v567, %v798
      %v819 = vadd.f32 %v571, %v798
      %v820 = vadd.f32 %v577, %v798
      %v821 = vadd.f32 %v581, %v798
      %v822 = vadd.f32 %v587, %v798
      %v823 = vadd.f32 %v591, %v798
      %v824 = vadd.f32 %v597, %v798
      %v825 = vadd.f32 %v601, %v798
      %v826 = vadd.f32 %v607, %v798
      %v827 = vadd.f32 %v611, %v798
      %v828 = vadd.f32 %v617, %v798
      %v829 = vadd.f32 %v621, %v798
      %v830 = vadd.f32 %v627, %v798
      %v831 = vadd.f32 %v631, %v798
      %832 = vst [vmem:[%s213] sm:$0xff] %v800
      %833 = vst [vmem:[%s213 + $0x8] sm:$0xff] %v801
      %834 = vst [vmem:[%s213 + $0x10] sm:$0xff] %v802
      %835 = vst [vmem:[%s213 + $0x18] sm:$0xff] %v803
      %836 = vst [vmem:[%s213 + $0x20] sm:$0xff] %v804
      %837 = vst [vmem:[%s213 + $0x28] sm:$0xff] %v805
      %838 = vst [vmem:[%s213 + $0x30] sm:$0xff] %v806
      %839 = vst [vmem:[%s213 + $0x38] sm:$0xff] %v807
      %840 = vst [vmem:[%s213 + $0x40] sm:$0xff] %v808
      %841 = vst [vmem:[%s213 + $0x48] sm:$0xff] %v809
      %842 = vst [vmem:[%s213 + $0x50] sm:$0xff] %v810
      %843 = vst [vmem:[%s213 + $0x58] sm:$0xff] %v811
      %844 = vst [vmem:[%s213 + $0x60] sm:$0xff] %v812
      %845 = vst [vmem:[%s213 + $0x68] sm:$0xff] %v813
      %846 = vst [vmem:[%s213 + $0x70] sm:$0xff] %v814
      %847 = vst [vmem:[%s213 + $0x78] sm:$0xff] %v815
      %848 = vst [vmem:[%s213 + $0x80] sm:$0xff] %v816
      %849 = vst [vmem:[%s213 + $0x88] sm:$0xff] %v817
      %850 = vst [vmem:[%s213 + $0x90] sm:$0xff] %v818
      %851 = vst [vmem:[%s213 + $0x98] sm:$0xff] %v819
      %852 = vst [vmem:[%s213 + $0xa0] sm:$0xff] %v820
      %853 = vst [vmem:[%s213 + $0xa8] sm:$0xff] %v821
      %854 = vst [vmem:[%s213 + $0xb0] sm:$0xff] %v822
      %855 = vst [vmem:[%s213 + $0xb8] sm:$0xff] %v823
      %856 = vst [vmem:[%s213 + $0xc0] sm:$0xff] %v824
      %857 = vst [vmem:[%s213 + $0xc8] sm:$0xff] %v825
      %858 = vst [vmem:[%s213 + $0xd0] sm:$0xff] %v826
      %859 = vst [vmem:[%s213 + $0xd8] sm:$0xff] %v827
      %860 = vst [vmem:[%s213 + $0xe0] sm:$0xff] %v828
      %861 = vst [vmem:[%s213 + $0xe8] sm:$0xff] %v829
      %862 = vst [vmem:[%s213 + $0xf0] sm:$0xff] %v830
      %863 = vst [vmem:[%s213 + $0xf8] sm:$0xff] %v831
      %s864 = smul.u32 32, %s16
      %p865 = scmp.lt.s32.totalorder %s864, 63
      %s866 = scalar_select %p865, %s864, 63
      %s867 = smul.addr %s866, 4
      %s868 = scalar_lea.vmem %s3, %s867
      %s869 = smul.u32 32, %s16
      %p870 = scmp.lt.s32.totalorder %s869, 63
      %s871 = scalar_select %p870, %s869, 63
      %s872 = smul.addr %s871, 8
      %s873 = scalar_lea.vmem %s4, %s872
      // Predicated region
      $region33: #{graphsage_forward.4} parent=31 // pred_check
        %p874 = pneg %p102
      $region34: #{graphsage_forward.4} parent=31 // pred_check_branch
        %876 = sbr.rel (%p874) target = $region36
      $region35: #{graphsage_forward.4} parent=31 // pred_region
        %s877 = smul.u32 32, %s16
      $region36: #{graphsage_forward.4} parent=31 // pred_fallthru
        _
      // Predicated region
      $region37: #{graphsage_forward.4} parent=31 // pred_check
        %p878 = pneg %p128
      $region38: #{graphsage_forward.4} parent=31 // pred_check_branch
        %880 = sbr.rel (%p878) target = $region40
      $region39: #{graphsage_forward.4} parent=31 // pred_region
        %s881 = smul.u32 32, %s16
      $region40: #{graphsage_forward.4} parent=31 // pred_fallthru
        _
    $region32: #{graphsage_forward.4} parent=5 // pred_fallthru
      _
    %p882 = scmp.le.s32.totalorder 2, %s11
    // Predicated region
    $region41: #{graphsage_forward.4} parent=5 // pred_check
      %p883 = pneg %p882
    $region42: #{graphsage_forward.4} parent=5 // pred_check_branch
      %885 = sbr.rel (%p883) target = $region44
    $region43: #{graphsage_forward.4} parent=5 // pred_region
      %s886 = ssub.s32 %s11, 2
      // Predicated region
      $region45: #{graphsage_forward.4} parent=43 // pred_check
        %p887 = pneg %p108
      $region46: #{graphsage_forward.4} parent=43 // pred_check_branch
        %889 = sbr.rel (%p887) target = $region48
      $region47: #{graphsage_forward.4} parent=43 // pred_region
        %s890 = smul.u32 32, %s17
        %p891 = scmp.lt.s32.totalorder %s890, 63
        %s892 = scalar_select %p891, %s890, 63
        %s893 = smul.addr %s892, 4
        %s894 = scalar_lea.vmem %s3, %s893
      $region48: #{graphsage_forward.4} parent=43 // pred_fallthru
        _
      // Predicated region
      $region49: #{graphsage_forward.4} parent=43 // pred_check
        %p895 = pneg %p134
      $region50: #{graphsage_forward.4} parent=43 // pred_check_branch
        %897 = sbr.rel (%p895) target = $region52
      $region51: #{graphsage_forward.4} parent=43 // pred_region
        %s898 = smul.u32 32, %s17
        %p899 = scmp.lt.s32.totalorder %s898, 63
        %s900 = scalar_select %p899, %s898, 63
        %s901 = smul.addr %s900, 8
        %s902 = scalar_lea.vmem %s4, %s901
      $region52: #{graphsage_forward.4} parent=43 // pred_fallthru
        _
    $region44: #{graphsage_forward.4} parent=5 // pred_fallthru
      _
  $region6: #{graphsage_forward.4} parent=0 // loop_footer
    %s15 = sadd.s32 1, %s11
  $region7: #{graphsage_forward.4} parent=0 // loop_footer_branch
    %10 = sbr.rel target = $region3
  $region8: #{graphsage_forward.4} parent=0 // loop_exit
    _

// kernel: graphsage_forward.5
$region0: #{graphsage_forward.5}
  #allocation0 [shape = 'u32[]', space=smem, size = 0x4, offset = 0x4, fixed_abs, tag = 'smem constant byte address 0x4 - core index']
  #allocation1 [shape = 'u32[144,128]{1,0:T(1,128)}', space=vmem, size = 0x12000, scoped, tag = 'internal scratch']
  #allocation2 [shape = 'f32[256,128]{1,0:T(8,128)}', space=vmem, size = 0x20000, scoped, tag = 'scratch operand']
  %s0 = inlined_call_operand.vmem [shape: bf16[512,512], index: 0, kind: input, shape index: {}]
  %s1 = inlined_call_operand.vmem [shape: bf16[512,128], index: 1, kind: input, shape index: {}]
  %s2 = inlined_call_operand.vmem [shape: f32[512,1], index: 2, kind: input, shape index: {}]
  %s3 = inlined_call_operand.vmem [shape: f32[512,128], index: 3, kind: input, shape index: {}]
  %s4 = inlined_call_operand.vmem [shape: bf16[512,128], index: 4, kind: output, shape index: {}]
  %s5 = sld [smem:[#allocation0]]
  $region57: #{graphsage_forward.5} parent=0
    _
  %s7 = ssub.s32 1, %s5
  %s8 = scalar_select 0, %s7, %s5
  loop: start=0, step=1, limit=4
  $region2: #{graphsage_forward.5} parent=0 // loop_pre_header
    _
  $region3: #{graphsage_forward.5} parent=0 // loop_header
    %s10 = sphi 0, %s14
    %p11 = scmp.ge.s32.totalorder %s10, 4
    %s17 = sphi 0, %s29
    %s18 = sphi 0, %s25
    %s19 = sphi 0, %s17
    %s20 = sphi 0, %s18
    %s21 = sphi 0, %s19
    %s22 = sphi 0, %s20
    %s34 = sphi 0, %s36
    %s37 = sphi 0, %s34
    %s38 = sphi 0, %s37
    %s54 = sphi 0, %s38
    %s60 = sphi 0, %s62
    %s63 = sphi 0, %s60
    %s64 = sphi 0, %s63
    %s80 = sphi 0, %s64
    %s86 = sphi 0, %s88
    %s89 = sphi 0, %s86
    %s90 = sphi 0, %s89
    %s106 = sphi 0, %s90
    %s112 = sphi 0, %s114
    %s115 = sphi 0, %s112
    %s116 = sphi 0, %s115
    %s132 = sphi 0, %s116
    %s138 = sphi 0, %s140
    %s141 = sphi 0, %s138
    %s142 = sphi 0, %s141
    %s158 = sphi 0, %s142
  $region4: #{graphsage_forward.5} parent=0 // loop_header_branch
    %13 = sbr.rel (%p11) target = $region8
  $region5: #{graphsage_forward.5} parent=0 // loop_body
    %s15 = ssub.s32 %s10, 1
    %s16 = ssub.s32 %s10, 2
    %s23 = sadd.s32 1, %s18
    %p24 = scmp.ge.s32.totalorder %s23, 1
    %s25 = scalar_select %p24, 0, %s23
    %s26 = sadd.s32 1, %s17
    %s27 = scalar_select %p24, %s26, %s17
    %p28 = scmp.ge.s32.totalorder %s27, 2
    %s29 = scalar_select %p28, 0, %s27
    %s30 = ssub.s32 %s17, %s29
    %s31 = ssub.s32 %s18, %s25
    %s32 = sor.u32 %s30, %s31
    %p33 = scmp.eq.s32.totalorder %s32, 0
    %s35 = sadd.s32 %s34, 1
    %s36 = scalar_select %p33, %s34, %s35
    %p39 = pneg %p33
    %p40 = scmp.eq.s32.totalorder %s10, 1
    %p41 = por %p39, %p40
    %p42 = scmp.ne.s32.totalorder %s34, %s37
    %p43 = scmp.eq.s32.totalorder %s10, 0
    %p44 = por %p42, %p43
    %p45 = scmp.ne.s32.totalorder %s34, %s37
    %p46 = scmp.eq.s32.totalorder %s15, 1
    %p47 = por %p45, %p46
    %p48 = scmp.ne.s32.totalorder %s37, %s38
    %p49 = scmp.eq.s32.totalorder %s15, 0
    %p50 = por %p48, %p49
    %p51 = scmp.ne.s32.totalorder %s37, %s38
    %p52 = scmp.eq.s32.totalorder %s16, 1
    %p53 = por %p51, %p52
    %p55 = scmp.ne.s32.totalorder %s38, %s54
    %p56 = scmp.eq.s32.totalorder %s16, 0
    %p57 = por %p55, %p56
    %s58 = ssub.s32 %s18, %s25
    %p59 = scmp.eq.s32.totalorder %s58, 0
    %s61 = sadd.s32 %s60, 1
    %s62 = scalar_select %p59, %s60, %s61
    %p65 = pneg %p59
    %p66 = scmp.eq.s32.totalorder %s10, 1
    %p67 = por %p65, %p66
    %p68 = scmp.ne.s32.totalorder %s60, %s63
    %p69 = scmp.eq.s32.totalorder %s10, 0
    %p70 = por %p68, %p69
    %p71 = scmp.ne.s32.totalorder %s60, %s63
    %p72 = scmp.eq.s32.totalorder %s15, 1
    %p73 = por %p71, %p72
    %p74 = scmp.ne.s32.totalorder %s63, %s64
    %p75 = scmp.eq.s32.totalorder %s15, 0
    %p76 = por %p74, %p75
    %p77 = scmp.ne.s32.totalorder %s63, %s64
    %p78 = scmp.eq.s32.totalorder %s16, 1
    %p79 = por %p77, %p78
    %p81 = scmp.ne.s32.totalorder %s64, %s80
    %p82 = scmp.eq.s32.totalorder %s16, 0
    %p83 = por %p81, %p82
    %s84 = ssub.s32 %s17, %s29
    %p85 = scmp.eq.s32.totalorder %s84, 0
    %s87 = sadd.s32 %s86, 1
    %s88 = scalar_select %p85, %s86, %s87
    %p91 = pneg %p85
    %p92 = scmp.eq.s32.totalorder %s10, 1
    %p93 = por %p91, %p92
    %p94 = scmp.ne.s32.totalorder %s86, %s89
    %p95 = scmp.eq.s32.totalorder %s10, 0
    %p96 = por %p94, %p95
    %p97 = scmp.ne.s32.totalorder %s86, %s89
    %p98 = scmp.eq.s32.totalorder %s15, 1
    %p99 = por %p97, %p98
    %p100 = scmp.ne.s32.totalorder %s89, %s90
    %p101 = scmp.eq.s32.totalorder %s15, 0
    %p102 = por %p100, %p101
    %p103 = scmp.ne.s32.totalorder %s89, %s90
    %p104 = scmp.eq.s32.totalorder %s16, 1
    %p105 = por %p103, %p104
    %p107 = scmp.ne.s32.totalorder %s90, %s106
    %p108 = scmp.eq.s32.totalorder %s16, 0
    %p109 = por %p107, %p108
    %s110 = ssub.s32 %s17, %s29
    %p111 = scmp.eq.s32.totalorder %s110, 0
    %s113 = sadd.s32 %s112, 1
    %s114 = scalar_select %p111, %s112, %s113
    %p117 = pneg %p111
    %p118 = scmp.eq.s32.totalorder %s10, 1
    %p119 = por %p117, %p118
    %p120 = scmp.ne.s32.totalorder %s112, %s115
    %p121 = scmp.eq.s32.totalorder %s10, 0
    %p122 = por %p120, %p121
    %p123 = scmp.ne.s32.totalorder %s112, %s115
    %p124 = scmp.eq.s32.totalorder %s15, 1
    %p125 = por %p123, %p124
    %p126 = scmp.ne.s32.totalorder %s115, %s116
    %p127 = scmp.eq.s32.totalorder %s15, 0
    %p128 = por %p126, %p127
    %p129 = scmp.ne.s32.totalorder %s115, %s116
    %p130 = scmp.eq.s32.totalorder %s16, 1
    %p131 = por %p129, %p130
    %p133 = scmp.ne.s32.totalorder %s116, %s132
    %p134 = scmp.eq.s32.totalorder %s16, 0
    %p135 = por %p133, %p134
    %s136 = ssub.s32 %s17, %s29
    %p137 = scmp.eq.s32.totalorder %s136, 0
    %s139 = sadd.s32 %s138, 1
    %s140 = scalar_select %p137, %s138, %s139
    %p143 = pneg %p137
    %p144 = scmp.eq.s32.totalorder %s10, 1
    %p145 = por %p143, %p144
    %p146 = scmp.ne.s32.totalorder %s138, %s141
    %p147 = scmp.eq.s32.totalorder %s10, 0
    %p148 = por %p146, %p147
    %p149 = scmp.ne.s32.totalorder %s138, %s141
    %p150 = scmp.eq.s32.totalorder %s15, 1
    %p151 = por %p149, %p150
    %p152 = scmp.ne.s32.totalorder %s141, %s142
    %p153 = scmp.eq.s32.totalorder %s15, 0
    %p154 = por %p152, %p153
    %p155 = scmp.ne.s32.totalorder %s141, %s142
    %p156 = scmp.eq.s32.totalorder %s16, 1
    %p157 = por %p155, %p156
    %p159 = scmp.ne.s32.totalorder %s142, %s158
    %p160 = scmp.eq.s32.totalorder %s16, 0
    %p161 = por %p159, %p160
    %p162 = scmp.le.s32.totalorder 1, %s10
    %p163 = scmp.lt.s32.totalorder %s10, 3
    %p164 = pnand %p162, %p163
    %p165 = pneg %p164
    // Predicated region
    $region9: #{graphsage_forward.5} parent=5 // pred_check
      _
    $region10: #{graphsage_forward.5} parent=5 // pred_check_branch
      %167 = sbr.rel (%p164) target = $region12
    $region11: #{graphsage_forward.5} parent=5 // pred_region
      %s168 = ssub.s32 %s10, 1
      // Predicated region
      $region13: #{graphsage_forward.5} parent=11 // pred_check
        %p169 = pneg %p76
      $region14: #{graphsage_forward.5} parent=11 // pred_check_branch
        %171 = sbr.rel (%p169) target = $region16
      $region15: #{graphsage_forward.5} parent=11 // pred_region
        %s172 = smul.u32 64, %s20
        %p173 = scmp.lt.s32.totalorder %s172, 63
        %s174 = scalar_select %p173, %s172, 63
        %s175 = smul.addr %s174, 4
        %s176 = scalar_lea.vmem %s1, %s175
        %s177 = smul.u32 64, %s20
      $region16: #{graphsage_forward.5} parent=11 // pred_fallthru
        _
    $region12: #{graphsage_forward.5} parent=5 // pred_fallthru
      _
    %p178 = scmp.lt.s32.totalorder %s10, 2
    // Predicated region
    $region17: #{graphsage_forward.5} parent=5 // pred_check
      %p179 = pneg %p178
    $region18: #{graphsage_forward.5} parent=5 // pred_check_branch
      %181 = sbr.rel (%p179) target = $region20
    $region19: #{graphsage_forward.5} parent=5 // pred_region
      // Predicated region
      $region21: #{graphsage_forward.5} parent=19 // pred_check
        %p182 = pneg %p44
      $region22: #{graphsage_forward.5} parent=19 // pred_check_branch
        %184 = sbr.rel (%p182) target = $region24
      $region23: #{graphsage_forward.5} parent=19 // pred_region
        %s185 = smul.u32 32, %s17
        %s186 = smul.u32 4, %s18
        %p187 = scmp.lt.s32.totalorder %s185, 63
        %s188 = scalar_select %p187, %s185, 63
        %p189 = scmp.lt.s32.totalorder %s186, 3
        %s190 = scalar_select %p189, %s186, 3
        %s191 = smul.addr %s188, 4
        %s192 = sadd.s32 %s190, %s191
        %s193 = smul.addr %s192, 4
        %s194 = scalar_lea.vmem %s0, %s193
        %s195 = smul.u32 32, %s17
        %s196 = smul.u32 4, %s18
      $region24: #{graphsage_forward.5} parent=19 // pred_fallthru
        _
      // Predicated region
      $region25: #{graphsage_forward.5} parent=19 // pred_check
        %p197 = pneg %p96
      $region26: #{graphsage_forward.5} parent=19 // pred_check_branch
        %199 = sbr.rel (%p197) target = $region28
      $region27: #{graphsage_forward.5} parent=19 // pred_region
        %s200 = smul.u32 32, %s17
        %p201 = scmp.lt.s32.totalorder %s200, 63
        %s202 = scalar_select %p201, %s200, 63
        %s203 = smul.addr %s202, 8
        %s204 = scalar_lea.vmem %s2, %s203
        %s205 = smul.u32 32, %s17
      $region28: #{graphsage_forward.5} parent=19 // pred_fallthru
        _
      // Predicated region
      $region29: #{graphsage_forward.5} parent=19 // pred_check
        %p206 = pneg %p122
      $region30: #{graphsage_forward.5} parent=19 // pred_check_branch
        %208 = sbr.rel (%p206) target = $region32
      $region31: #{graphsage_forward.5} parent=19 // pred_region
        %s209 = smul.u32 32, %s17
        %p210 = scmp.lt.s32.totalorder %s209, 63
        %s211 = scalar_select %p210, %s209, 63
        %s212 = smul.addr %s211, 8
        %s213 = scalar_lea.vmem %s3, %s212
        %s214 = smul.u32 32, %s17
      $region32: #{graphsage_forward.5} parent=19 // pred_fallthru
        _
    $region20: #{graphsage_forward.5} parent=5 // pred_fallthru
      _
    %p215 = scmp.le.s32.totalorder 1, %s10
    %p216 = scmp.lt.s32.totalorder %s10, 3
    %p217 = pnand %p215, %p216
    %p218 = pneg %p217
    // Predicated region
    $region33: #{graphsage_forward.5} parent=5 // pred_check
      _
    $region34: #{graphsage_forward.5} parent=5 // pred_check_branch
      %220 = sbr.rel (%p217) target = $region36
    $region35: #{graphsage_forward.5} parent=5 // pred_region
      %s221 = ssub.s32 %s10, 1
      %s222 = smul.u32 32, %s19
      %s223 = smul.u32 4, %s20
      %p224 = scmp.lt.s32.totalorder %s222, 63
      %s225 = scalar_select %p224, %s222, 63
      %p226 = scmp.lt.s32.totalorder %s223, 3
      %s227 = scalar_select %p226, %s223, 3
      %s228 = smul.addr %s225, 4
      %s229 = sadd.s32 %s227, %s228
      %s230 = smul.addr %s229, 4
      %s231 = scalar_lea.vmem %s0, %s230
      %p232 = pneg %p50
      %p233 = pneg %p47
      %s234 = smul.u32 64, %s20
      %p235 = scmp.lt.s32.totalorder %s234, 63
      %s236 = scalar_select %p235, %s234, 63
      %s237 = smul.addr %s236, 4
      %s238 = scalar_lea.vmem %s1, %s237
      %p239 = pneg %p76
      %p240 = pneg %p73
      %s241 = smul.u32 32, %s19
      %p242 = scmp.lt.s32.totalorder %s241, 63
      %s243 = scalar_select %p242, %s241, 63
      %s244 = smul.addr %s243, 8
      %s245 = scalar_lea.vmem %s2, %s244
      %p246 = pneg %p102
      %p247 = pneg %p99
      %s248 = smul.u32 32, %s19
      %p249 = scmp.lt.s32.totalorder %s248, 63
      %s250 = scalar_select %p249, %s248, 63
      %s251 = smul.addr %s250, 8
      %s252 = scalar_lea.vmem %s3, %s251
      %p253 = pneg %p128
      %p254 = pneg %p125
      %p255 = pneg %p154
      %p256 = pneg %p151
      %s257 = smul.u32 32, %s19
      %p258 = scmp.lt.s32.totalorder %s257, 63
      %s259 = scalar_select %p258, %s257, 63
      %s260 = smul.addr %s259, 4
      %s261 = scalar_lea.vmem %s4, %s260
      %s262 = smul.u32 32, %s19
      %s263 = smul.u32 4, %s20
      %p264 = scmp.lt.s32.totalorder %s262, 63
      %s265 = scalar_select %p264, %s262, 63
      %p266 = scmp.lt.s32.totalorder %s263, 3
      %s267 = scalar_select %p266, %s263, 3
      %s268 = smul.addr %s265, 4
      %s269 = sadd.s32 %s267, %s268
      %s270 = smul.addr %s269, 4
      %s271 = scalar_lea.vmem %s0, %s270
      %s272 = smul.u32 32, %s19
      %s273 = smul.u32 4, %s20
      %s274 = smul.u32 64, %s20
      %p275 = scmp.lt.s32.totalorder %s274, 63
      %s276 = scalar_select %p275, %s274, 63
      %s277 = smul.addr %s276, 4
      %s278 = scalar_lea.vmem %s1, %s277
      %s279 = smul.u32 64, %s20
      %s280 = smul.u32 32, %s19
      %p281 = scmp.lt.s32.totalorder %s280, 63
      %s282 = scalar_select %p281, %s280, 63
      %s283 = smul.addr %s282, 8
      %s284 = scalar_lea.vmem %s2, %s283
      %s285 = smul.u32 32, %s19
      %s286 = smul.u32 32, %s19
      %p287 = scmp.lt.s32.totalorder %s286, 63
      %s288 = scalar_select %p287, %s286, 63
      %s289 = smul.addr %s288, 8
      %s290 = scalar_lea.vmem %s3, %s289
      %s291 = smul.u32 32, %s19
      %s292 = smul.u32 32, %s19
      %p293 = scmp.lt.s32.totalorder %s292, 63
      %s294 = scalar_select %p293, %s292, 63
      %s295 = smul.addr %s294, 4
      %s296 = scalar_lea.vmem %s4, %s295
      %s297 = smul.u32 32, %s19
      %p299 = scmp.eq.s32.totalorder %s20, 0
      // Predicated region
      $region37: #{graphsage_forward.5} parent=35 // pred_check
        %p300 = pneg %p299
      $region38: #{graphsage_forward.5} parent=35 // pred_check_branch
        %302 = sbr.rel (%p300) target = $region40
      $region39: #{graphsage_forward.5} parent=35 // pred_region
        %303 = vst [vmem:[#allocation2] sm:$0xff] 0.0
        %304 = vst [vmem:[#allocation2 + $0x8] sm:$0xff] 0.0
        %305 = vst [vmem:[#allocation2 + $0x10] sm:$0xff] 0.0
        %306 = vst [vmem:[#allocation2 + $0x18] sm:$0xff] 0.0
        %307 = vst [vmem:[#allocation2 + $0x20] sm:$0xff] 0.0
        %308 = vst [vmem:[#allocation2 + $0x28] sm:$0xff] 0.0
        %309 = vst [vmem:[#allocation2 + $0x30] sm:$0xff] 0.0
        %310 = vst [vmem:[#allocation2 + $0x38] sm:$0xff] 0.0
        %311 = vst [vmem:[#allocation2 + $0x40] sm:$0xff] 0.0
        %312 = vst [vmem:[#allocation2 + $0x48] sm:$0xff] 0.0
        %313 = vst [vmem:[#allocation2 + $0x50] sm:$0xff] 0.0
        %314 = vst [vmem:[#allocation2 + $0x58] sm:$0xff] 0.0
        %315 = vst [vmem:[#allocation2 + $0x60] sm:$0xff] 0.0
        %316 = vst [vmem:[#allocation2 + $0x68] sm:$0xff] 0.0
        %317 = vst [vmem:[#allocation2 + $0x70] sm:$0xff] 0.0
        %318 = vst [vmem:[#allocation2 + $0x78] sm:$0xff] 0.0
        %319 = vst [vmem:[#allocation2 + $0x80] sm:$0xff] 0.0
        %320 = vst [vmem:[#allocation2 + $0x88] sm:$0xff] 0.0
        %321 = vst [vmem:[#allocation2 + $0x90] sm:$0xff] 0.0
        %322 = vst [vmem:[#allocation2 + $0x98] sm:$0xff] 0.0
        %323 = vst [vmem:[#allocation2 + $0xa0] sm:$0xff] 0.0
        %324 = vst [vmem:[#allocation2 + $0xa8] sm:$0xff] 0.0
        %325 = vst [vmem:[#allocation2 + $0xb0] sm:$0xff] 0.0
        %326 = vst [vmem:[#allocation2 + $0xb8] sm:$0xff] 0.0
        %327 = vst [vmem:[#allocation2 + $0xc0] sm:$0xff] 0.0
        %328 = vst [vmem:[#allocation2 + $0xc8] sm:$0xff] 0.0
        %329 = vst [vmem:[#allocation2 + $0xd0] sm:$0xff] 0.0
        %330 = vst [vmem:[#allocation2 + $0xd8] sm:$0xff] 0.0
        %331 = vst [vmem:[#allocation2 + $0xe0] sm:$0xff] 0.0
        %332 = vst [vmem:[#allocation2 + $0xe8] sm:$0xff] 0.0
        %333 = vst [vmem:[#allocation2 + $0xf0] sm:$0xff] 0.0
        %334 = vst [vmem:[#allocation2 + $0xf8] sm:$0xff] 0.0
      $region40: #{graphsage_forward.5} parent=35 // pred_fallthru
        _
      %v335 = vld [vmem:[#allocation2] sm:$0xff]
      %v336 = vld [vmem:[#allocation2 + $0x8] sm:$0xff]
      %v337 = vld [vmem:[#allocation2 + $0x10] sm:$0xff]
      %v338 = vld [vmem:[#allocation2 + $0x18] sm:$0xff]
      %v339 = vld [vmem:[#allocation2 + $0x20] sm:$0xff]
      %v340 = vld [vmem:[#allocation2 + $0x28] sm:$0xff]
      %v341 = vld [vmem:[#allocation2 + $0x30] sm:$0xff]
      %v342 = vld [vmem:[#allocation2 + $0x38] sm:$0xff]
      %v343 = vld [vmem:[#allocation2 + $0x40] sm:$0xff]
      %v344 = vld [vmem:[#allocation2 + $0x48] sm:$0xff]
      %v345 = vld [vmem:[#allocation2 + $0x50] sm:$0xff]
      %v346 = vld [vmem:[#allocation2 + $0x58] sm:$0xff]
      %v347 = vld [vmem:[#allocation2 + $0x60] sm:$0xff]
      %v348 = vld [vmem:[#allocation2 + $0x68] sm:$0xff]
      %v349 = vld [vmem:[#allocation2 + $0x70] sm:$0xff]
      %v350 = vld [vmem:[#allocation2 + $0x78] sm:$0xff]
      %v351 = vld [vmem:[#allocation2 + $0x80] sm:$0xff]
      %v352 = vld [vmem:[#allocation2 + $0x88] sm:$0xff]
      %v353 = vld [vmem:[#allocation2 + $0x90] sm:$0xff]
      %v354 = vld [vmem:[#allocation2 + $0x98] sm:$0xff]
      %v355 = vld [vmem:[#allocation2 + $0xa0] sm:$0xff]
      %v356 = vld [vmem:[#allocation2 + $0xa8] sm:$0xff]
      %v357 = vld [vmem:[#allocation2 + $0xb0] sm:$0xff]
      %v358 = vld [vmem:[#allocation2 + $0xb8] sm:$0xff]
      %v359 = vld [vmem:[#allocation2 + $0xc0] sm:$0xff]
      %v360 = vld [vmem:[#allocation2 + $0xc8] sm:$0xff]
      %v361 = vld [vmem:[#allocation2 + $0xd0] sm:$0xff]
      %v362 = vld [vmem:[#allocation2 + $0xd8] sm:$0xff]
      %v363 = vld [vmem:[#allocation2 + $0xe0] sm:$0xff]
      %v364 = vld [vmem:[#allocation2 + $0xe8] sm:$0xff]
      %v365 = vld [vmem:[#allocation2 + $0xf0] sm:$0xff]
      %v366 = vld [vmem:[#allocation2 + $0xf8] sm:$0xff]
      %v367 = vld [vmem:[%s271] sm:$0xff]
      %v368 = vld [vmem:[%s271 + $0x8] sm:$0xff]
      %v369 = vld [vmem:[%s271 + $0x10] sm:$0xff]
      %v370 = vld [vmem:[%s271 + $0x18] sm:$0xff]
      %v371 = vld [vmem:[%s271 + $0x20] sm:$0xff]
      %v372 = vld [vmem:[%s271 + $0x28] sm:$0xff]
      %v373 = vld [vmem:[%s271 + $0x30] sm:$0xff]
      %v374 = vld [vmem:[%s271 + $0x38] sm:$0xff]
      %v375 = vld [vmem:[%s271 + $0x40] sm:$0xff]
      %v376 = vld [vmem:[%s271 + $0x48] sm:$0xff]
      %v377 = vld [vmem:[%s271 + $0x50] sm:$0xff]
      %v378 = vld [vmem:[%s271 + $0x58] sm:$0xff]
      %v379 = vld [vmem:[%s271 + $0x60] sm:$0xff]
      %v380 = vld [vmem:[%s271 + $0x68] sm:$0xff]
      %v381 = vld [vmem:[%s271 + $0x70] sm:$0xff]
      %v382 = vld [vmem:[%s271 + $0x78] sm:$0xff]
      %v383 = vld [vmem:[%s271 + $0x80] sm:$0xff]
      %v384 = vld [vmem:[%s271 + $0x88] sm:$0xff]
      %v385 = vld [vmem:[%s271 + $0x90] sm:$0xff]
      %v386 = vld [vmem:[%s271 + $0x98] sm:$0xff]
      %v387 = vld [vmem:[%s271 + $0xa0] sm:$0xff]
      %v388 = vld [vmem:[%s271 + $0xa8] sm:$0xff]
      %v389 = vld [vmem:[%s271 + $0xb0] sm:$0xff]
      %v390 = vld [vmem:[%s271 + $0xb8] sm:$0xff]
      %v391 = vld [vmem:[%s271 + $0xc0] sm:$0xff]
      %v392 = vld [vmem:[%s271 + $0xc8] sm:$0xff]
      %v393 = vld [vmem:[%s271 + $0xd0] sm:$0xff]
      %v394 = vld [vmem:[%s271 + $0xd8] sm:$0xff]
      %v395 = vld [vmem:[%s271 + $0xe0] sm:$0xff]
      %v396 = vld [vmem:[%s271 + $0xe8] sm:$0xff]
      %v397 = vld [vmem:[%s271 + $0xf0] sm:$0xff]
      %v398 = vld [vmem:[%s271 + $0xf8] sm:$0xff]
      %v399 = vld [vmem:[%s271 + $0x100] sm:$0xff]
      %v400 = vld [vmem:[%s271 + $0x108] sm:$0xff]
      %v401 = vld [vmem:[%s271 + $0x110] sm:$0xff]
      %v402 = vld [vmem:[%s271 + $0x118] sm:$0xff]
      %v403 = vld [vmem:[%s271 + $0x120] sm:$0xff]
      %v404 = vld [vmem:[%s271 + $0x128] sm:$0xff]
      %v405 = vld [vmem:[%s271 + $0x130] sm:$0xff]
      %v406 = vld [vmem:[%s271 + $0x138] sm:$0xff]
      %v407 = vld [vmem:[%s271 + $0x140] sm:$0xff]
      %v408 = vld [vmem:[%s271 + $0x148] sm:$0xff]
      %v409 = vld [vmem:[%s271 + $0x150] sm:$0xff]
      %v410 = vld [vmem:[%s271 + $0x158] sm:$0xff]
      %v411 = vld [vmem:[%s271 + $0x160] sm:$0xff]
      %v412 = vld [vmem:[%s271 + $0x168] sm:$0xff]
      %v413 = vld [vmem:[%s271 + $0x170] sm:$0xff]
      %v414 = vld [vmem:[%s271 + $0x178] sm:$0xff]
      %v415 = vld [vmem:[%s271 + $0x180] sm:$0xff]
      %v416 = vld [vmem:[%s271 + $0x188] sm:$0xff]
      %v417 = vld [vmem:[%s271 + $0x190] sm:$0xff]
      %v418 = vld [vmem:[%s271 + $0x198] sm:$0xff]
      %v419 = vld [vmem:[%s271 + $0x1a0] sm:$0xff]
      %v420 = vld [vmem:[%s271 + $0x1a8] sm:$0xff]
      %v421 = vld [vmem:[%s271 + $0x1b0] sm:$0xff]
      %v422 = vld [vmem:[%s271 + $0x1b8] sm:$0xff]
      %v423 = vld [vmem:[%s271 + $0x1c0] sm:$0xff]
      %v424 = vld [vmem:[%s271 + $0x1c8] sm:$0xff]
      %v425 = vld [vmem:[%s271 + $0x1d0] sm:$0xff]
      %v426 = vld [vmem:[%s271 + $0x1d8] sm:$0xff]
      %v427 = vld [vmem:[%s271 + $0x1e0] sm:$0xff]
      %v428 = vld [vmem:[%s271 + $0x1e8] sm:$0xff]
      %v429 = vld [vmem:[%s271 + $0x1f0] sm:$0xff]
      %v430 = vld [vmem:[%s271 + $0x1f8] sm:$0xff]
      %v431 = vld [vmem:[%s278] sm:$0xf]
      %v432 = vld [vmem:[%s278 + $0x4] sm:$0xf]
      %v433 = vld [vmem:[%s278 + $0x8] sm:$0xf]
      %v434 = vld [vmem:[%s278 + $0xc] sm:$0xf]
      %v435 = vld [vmem:[%s278 + $0x10] sm:$0xf]
      %v436 = vld [vmem:[%s278 + $0x14] sm:$0xf]
      %v437 = vld [vmem:[%s278 + $0x18] sm:$0xf]
      %v438 = vld [vmem:[%s278 + $0x1c] sm:$0xf]
      %v439 = vld [vmem:[%s278 + $0x20] sm:$0xf]
      %v440 = vld [vmem:[%s278 + $0x24] sm:$0xf]
      %v441 = vld [vmem:[%s278 + $0x28] sm:$0xf]
      %v442 = vld [vmem:[%s278 + $0x2c] sm:$0xf]
      %v443 = vld [vmem:[%s278 + $0x30] sm:$0xf]
      %v444 = vld [vmem:[%s278 + $0x34] sm:$0xf]
      %v445 = vld [vmem:[%s278 + $0x38] sm:$0xf]
      %v446 = vld [vmem:[%s278 + $0x3c] sm:$0xf]
      %v447 = vld [vmem:[%s278 + $0x40] sm:$0xf]
      %v448 = vld [vmem:[%s278 + $0x44] sm:$0xf]
      %v449 = vld [vmem:[%s278 + $0x48] sm:$0xf]
      %v450 = vld [vmem:[%s278 + $0x4c] sm:$0xf]
      %v451 = vld [vmem:[%s278 + $0x50] sm:$0xf]
      %v452 = vld [vmem:[%s278 + $0x54] sm:$0xf]
      %v453 = vld [vmem:[%s278 + $0x58] sm:$0xf]
      %v454 = vld [vmem:[%s278 + $0x5c] sm:$0xf]
      %v455 = vld [vmem:[%s278 + $0x60] sm:$0xf]
      %v456 = vld [vmem:[%s278 + $0x64] sm:$0xf]
      %v457 = vld [vmem:[%s278 + $0x68] sm:$0xf]
      %v458 = vld [vmem:[%s278 + $0x6c] sm:$0xf]
      %v459 = vld [vmem:[%s278 + $0x70] sm:$0xf]
      %v460 = vld [vmem:[%s278 + $0x74] sm:$0xf]
      %v461 = vld [vmem:[%s278 + $0x78] sm:$0xf]
      %v462 = vld [vmem:[%s278 + $0x7c] sm:$0xf]
      %v463 = vld [vmem:[%s278 + $0x80] sm:$0xf]
      %v464 = vld [vmem:[%s278 + $0x84] sm:$0xf]
      %v465 = vld [vmem:[%s278 + $0x88] sm:$0xf]
      %v466 = vld [vmem:[%s278 + $0x8c] sm:$0xf]
      %v467 = vld [vmem:[%s278 + $0x90] sm:$0xf]
      %v468 = vld [vmem:[%s278 + $0x94] sm:$0xf]
      %v469 = vld [vmem:[%s278 + $0x98] sm:$0xf]
      %v470 = vld [vmem:[%s278 + $0x9c] sm:$0xf]
      %v471 = vld [vmem:[%s278 + $0xa0] sm:$0xf]
      %v472 = vld [vmem:[%s278 + $0xa4] sm:$0xf]
      %v473 = vld [vmem:[%s278 + $0xa8] sm:$0xf]
      %v474 = vld [vmem:[%s278 + $0xac] sm:$0xf]
      %v475 = vld [vmem:[%s278 + $0xb0] sm:$0xf]
      %v476 = vld [vmem:[%s278 + $0xb4] sm:$0xf]
      %v477 = vld [vmem:[%s278 + $0xb8] sm:$0xf]
      %v478 = vld [vmem:[%s278 + $0xbc] sm:$0xf]
      %v479 = vld [vmem:[%s278 + $0xc0] sm:$0xf]
      %v480 = vld [vmem:[%s278 + $0xc4] sm:$0xf]
      %v481 = vld [vmem:[%s278 + $0xc8] sm:$0xf]
      %v482 = vld [vmem:[%s278 + $0xcc] sm:$0xf]
      %v483 = vld [vmem:[%s278 + $0xd0] sm:$0xf]
      %v484 = vld [vmem:[%s278 + $0xd4] sm:$0xf]
      %v485 = vld [vmem:[%s278 + $0xd8] sm:$0xf]
      %v486 = vld [vmem:[%s278 + $0xdc] sm:$0xf]
      %v487 = vld [vmem:[%s278 + $0xe0] sm:$0xf]
      %v488 = vld [vmem:[%s278 + $0xe4] sm:$0xf]
      %v489 = vld [vmem:[%s278 + $0xe8] sm:$0xf]
      %v490 = vld [vmem:[%s278 + $0xec] sm:$0xf]
      %v491 = vld [vmem:[%s278 + $0xf0] sm:$0xf]
      %v492 = vld [vmem:[%s278 + $0xf4] sm:$0xf]
      %v493 = vld [vmem:[%s278 + $0xf8] sm:$0xf]
      %v494 = vld [vmem:[%s278 + $0xfc] sm:$0xf]
      %v559 = vunpack.c.l.b16 %v367
      %v560 = vunpack.c.h.b16 %v367
      %v561 = vunpack.c.l.b16 %v368
      %v562 = vunpack.c.h.b16 %v368
      %v563 = vunpack.c.l.b16 %v369
      %v564 = vunpack.c.h.b16 %v369
      %v565 = vunpack.c.l.b16 %v370
      %v566 = vunpack.c.h.b16 %v370
      %v567 = vunpack.c.l.b16 %v371
      %v568 = vunpack.c.h.b16 %v371
      %v569 = vunpack.c.l.b16 %v372
      %v570 = vunpack.c.h.b16 %v372
      %v571 = vunpack.c.l.b16 %v373
      %v572 = vunpack.c.h.b16 %v373
      %v573 = vunpack.c.l.b16 %v374
      %v574 = vunpack.c.h.b16 %v374
      %v575 = vunpack.c.l.b16 %v375
      %v576 = vunpack.c.h.b16 %v375
      %v577 = vunpack.c.l.b16 %v376
      %v578 = vunpack.c.h.b16 %v376
      %v579 = vunpack.c.l.b16 %v377
      %v580 = vunpack.c.h.b16 %v377
      %v581 = vunpack.c.l.b16 %v378
      %v582 = vunpack.c.h.b16 %v378
      %v583 = vunpack.c.l.b16 %v379
      %v584 = vunpack.c.h.b16 %v379
      %v585 = vunpack.c.l.b16 %v380
      %v586 = vunpack.c.h.b16 %v380
      %v587 = vunpack.c.l.b16 %v381
      %v588 = vunpack.c.h.b16 %v381
      %v589 = vunpack.c.l.b16 %v382
      %v590 = vunpack.c.h.b16 %v382
      %v591 = vunpack.c.l.b16 %v383
      %v592 = vunpack.c.h.b16 %v383
      %v593 = vunpack.c.l.b16 %v384
      %v594 = vunpack.c.h.b16 %v384
      %v595 = vunpack.c.l.b16 %v385
      %v596 = vunpack.c.h.b16 %v385
      %v597 = vunpack.c.l.b16 %v386
      %v598 = vunpack.c.h.b16 %v386
      %v599 = vunpack.c.l.b16 %v387
      %v600 = vunpack.c.h.b16 %v387
      %v601 = vunpack.c.l.b16 %v388
      %v602 = vunpack.c.h.b16 %v388
      %v603 = vunpack.c.l.b16 %v389
      %v604 = vunpack.c.h.b16 %v389
      %v605 = vunpack.c.l.b16 %v390
      %v606 = vunpack.c.h.b16 %v390
      %v607 = vunpack.c.l.b16 %v391
      %v608 = vunpack.c.h.b16 %v391
      %v609 = vunpack.c.l.b16 %v392
      %v610 = vunpack.c.h.b16 %v392
      %v611 = vunpack.c.l.b16 %v393
      %v612 = vunpack.c.h.b16 %v393
      %v613 = vunpack.c.l.b16 %v394
      %v614 = vunpack.c.h.b16 %v394
      %v615 = vunpack.c.l.b16 %v395
      %v616 = vunpack.c.h.b16 %v395
      %v617 = vunpack.c.l.b16 %v396
      %v618 = vunpack.c.h.b16 %v396
      %v619 = vunpack.c.l.b16 %v397
      %v620 = vunpack.c.h.b16 %v397
      %v621 = vunpack.c.l.b16 %v398
      %v622 = vunpack.c.h.b16 %v398
      %v623 = vunpack.c.l.b16 %v399
      %v624 = vunpack.c.h.b16 %v399
      %v625 = vunpack.c.l.b16 %v400
      %v626 = vunpack.c.h.b16 %v400
      %v627 = vunpack.c.l.b16 %v401
      %v628 = vunpack.c.h.b16 %v401
      %v629 = vunpack.c.l.b16 %v402
      %v630 = vunpack.c.h.b16 %v402
      %v631 = vunpack.c.l.b16 %v403
      %v632 = vunpack.c.h.b16 %v403
      %v633 = vunpack.c.l.b16 %v404
      %v634 = vunpack.c.h.b16 %v404
      %v635 = vunpack.c.l.b16 %v405
      %v636 = vunpack.c.h.b16 %v405
      %v637 = vunpack.c.l.b16 %v406
      %v638 = vunpack.c.h.b16 %v406
      %v639 = vunpack.c.l.b16 %v407
      %v640 = vunpack.c.h.b16 %v407
      %v641 = vunpack.c.l.b16 %v408
      %v642 = vunpack.c.h.b16 %v408
      %v643 = vunpack.c.l.b16 %v409
      %v644 = vunpack.c.h.b16 %v409
      %v645 = vunpack.c.l.b16 %v410
      %v646 = vunpack.c.h.b16 %v410
      %v647 = vunpack.c.l.b16 %v411
      %v648 = vunpack.c.h.b16 %v411
      %v649 = vunpack.c.l.b16 %v412
      %v650 = vunpack.c.h.b16 %v412
      %v651 = vunpack.c.l.b16 %v413
      %v652 = vunpack.c.h.b16 %v413
      %v653 = vunpack.c.l.b16 %v414
      %v654 = vunpack.c.h.b16 %v414
      %v655 = vunpack.c.l.b16 %v415
      %v656 = vunpack.c.h.b16 %v415
      %v657 = vunpack.c.l.b16 %v416
      %v658 = vunpack.c.h.b16 %v416
      %v659 = vunpack.c.l.b16 %v417
      %v660 = vunpack.c.h.b16 %v417
      %v661 = vunpack.c.l.b16 %v418
      %v662 = vunpack.c.h.b16 %v418
      %v663 = vunpack.c.l.b16 %v419
      %v664 = vunpack.c.h.b16 %v419
      %v665 = vunpack.c.l.b16 %v420
      %v666 = vunpack.c.h.b16 %v420
      %v667 = vunpack.c.l.b16 %v421
      %v668 = vunpack.c.h.b16 %v421
      %v669 = vunpack.c.l.b16 %v422
      %v670 = vunpack.c.h.b16 %v422
      %v671 = vunpack.c.l.b16 %v423
      %v672 = vunpack.c.h.b16 %v423
      %v673 = vunpack.c.l.b16 %v424
      %v674 = vunpack.c.h.b16 %v424
      %v675 = vunpack.c.l.b16 %v425
      %v676 = vunpack.c.h.b16 %v425
      %v677 = vunpack.c.l.b16 %v426
      %v678 = vunpack.c.h.b16 %v426
      %v679 = vunpack.c.l.b16 %v427
      %v680 = vunpack.c.h.b16 %v427
      %v681 = vunpack.c.l.b16 %v428
      %v682 = vunpack.c.h.b16 %v428
      %v683 = vunpack.c.l.b16 %v429
      %v684 = vunpack.c.h.b16 %v429
      %v685 = vunpack.c.l.b16 %v430
      %v686 = vunpack.c.h.b16 %v430
      %v687 = vpack.c.b16 %v563, %v559
      %v688 = vpack.c.b16 %v564, %v560
      %v689 = vpack.c.b16 %v565, %v561
      %v690 = vpack.c.b16 %v566, %v562
      %v691 = vpack.c.b16 %v571, %v567
      %v692 = vpack.c.b16 %v572, %v568
      %v693 = vpack.c.b16 %v573, %v569
      %v694 = vpack.c.b16 %v574, %v570
      %v695 = vpack.c.b16 %v579, %v575
      %v696 = vpack.c.b16 %v580, %v576
      %v697 = vpack.c.b16 %v581, %v577
      %v698 = vpack.c.b16 %v582, %v578
      %v699 = vpack.c.b16 %v587, %v583
      %v700 = vpack.c.b16 %v588, %v584
      %v701 = vpack.c.b16 %v589, %v585
      %v702 = vpack.c.b16 %v590, %v586
      %v703 = vpack.c.b16 %v595, %v591
      %v704 = vpack.c.b16 %v596, %v592
      %v705 = vpack.c.b16 %v597, %v593
      %v706 = vpack.c.b16 %v598, %v594
      %v707 = vpack.c.b16 %v603, %v599
      %v708 = vpack.c.b16 %v604, %v600
      %v709 = vpack.c.b16 %v605, %v601
      %v710 = vpack.c.b16 %v606, %v602
      %v711 = vpack.c.b16 %v611, %v607
      %v712 = vpack.c.b16 %v612, %v608
      %v713 = vpack.c.b16 %v613, %v609
      %v714 = vpack.c.b16 %v614, %v610
      %v715 = vpack.c.b16 %v619, %v615
      %v716 = vpack.c.b16 %v620, %v616
      %v717 = vpack.c.b16 %v621, %v617
      %v718 = vpack.c.b16 %v622, %v618
      %v719 = vpack.c.b16 %v627, %v623
      %v720 = vpack.c.b16 %v628, %v624
      %v721 = vpack.c.b16 %v629, %v625
      %v722 = vpack.c.b16 %v630, %v626
      %v723 = vpack.c.b16 %v635, %v631
      %v724 = vpack.c.b16 %v636, %v632
      %v725 = vpack.c.b16 %v637, %v633
      %v726 = vpack.c.b16 %v638, %v634
      %v727 = vpack.c.b16 %v643, %v639
      %v728 = vpack.c.b16 %v644, %v640
      %v729 = vpack.c.b16 %v645, %v641
      %v730 = vpack.c.b16 %v646, %v642
      %v731 = vpack.c.b16 %v651, %v647
      %v732 = vpack.c.b16 %v652, %v648
      %v733 = vpack.c.b16 %v653, %v649
      %v734 = vpack.c.b16 %v654, %v650
      %v735 = vpack.c.b16 %v659, %v655
      %v736 = vpack.c.b16 %v660, %v656
      %v737 = vpack.c.b16 %v661, %v657
      %v738 = vpack.c.b16 %v662, %v658
      %v739 = vpack.c.b16 %v667, %v663
      %v740 = vpack.c.b16 %v668, %v664
      %v741 = vpack.c.b16 %v669, %v665
      %v742 = vpack.c.b16 %v670, %v666
      %v743 = vpack.c.b16 %v675, %v671
      %v744 = vpack.c.b16 %v676, %v672
      %v745 = vpack.c.b16 %v677, %v673
      %v746 = vpack.c.b16 %v678, %v674
      %v747 = vpack.c.b16 %v683, %v679
      %v748 = vpack.c.b16 %v684, %v680
      %v749 = vpack.c.b16 %v685, %v681
      %v750 = vpack.c.b16 %v686, %v682
      %v879 = vunpack.c.l.b16 %v431
      %v880 = vunpack.c.l.b16 %v432
      %v881 = vunpack.c.l.b16 %v433
      %v882 = vunpack.c.l.b16 %v434
      %v883 = vunpack.c.l.b16 %v435
      %v884 = vunpack.c.l.b16 %v436
      %v885 = vunpack.c.l.b16 %v437
      %v886 = vunpack.c.l.b16 %v438
      %v887 = vunpack.c.l.b16 %v439
      %v888 = vunpack.c.l.b16 %v440
      %v889 = vunpack.c.l.b16 %v441
      %v890 = vunpack.c.l.b16 %v442
      %v891 = vunpack.c.l.b16 %v443
      %v892 = vunpack.c.l.b16 %v444
      %v893 = vunpack.c.l.b16 %v445
      %v894 = vunpack.c.l.b16 %v446
      %v895 = vunpack.c.l.b16 %v447
      %v896 = vunpack.c.l.b16 %v448
      %v897 = vunpack.c.l.b16 %v449
      %v898 = vunpack.c.l.b16 %v450
      %v899 = vunpack.c.l.b16 %v451
      %v900 = vunpack.c.l.b16 %v452
      %v901 = vunpack.c.l.b16 %v453
      %v902 = vunpack.c.l.b16 %v454
      %v903 = vunpack.c.l.b16 %v455
      %v904 = vunpack.c.l.b16 %v456
      %v905 = vunpack.c.l.b16 %v457
      %v906 = vunpack.c.l.b16 %v458
      %v907 = vunpack.c.l.b16 %v459
      %v908 = vunpack.c.l.b16 %v460
      %v909 = vunpack.c.l.b16 %v461
      %v910 = vunpack.c.l.b16 %v462
      %v911 = vunpack.c.l.b16 %v463
      %v912 = vunpack.c.l.b16 %v464
      %v913 = vunpack.c.l.b16 %v465
      %v914 = vunpack.c.l.b16 %v466
      %v915 = vunpack.c.l.b16 %v467
      %v916 = vunpack.c.l.b16 %v468
      %v917 = vunpack.c.l.b16 %v469
      %v918 = vunpack.c.l.b16 %v470
      %v919 = vunpack.c.l.b16 %v471
      %v920 = vunpack.c.l.b16 %v472
      %v921 = vunpack.c.l.b16 %v473
      %v922 = vunpack.c.l.b16 %v474
      %v923 = vunpack.c.l.b16 %v475
      %v924 = vunpack.c.l.b16 %v476
      %v925 = vunpack.c.l.b16 %v477
      %v926 = vunpack.c.l.b16 %v478
      %v927 = vunpack.c.l.b16 %v479
      %v928 = vunpack.c.l.b16 %v480
      %v929 = vunpack.c.l.b16 %v481
      %v930 = vunpack.c.l.b16 %v482
      %v931 = vunpack.c.l.b16 %v483
      %v932 = vunpack.c.l.b16 %v484
      %v933 = vunpack.c.l.b16 %v485
      %v934 = vunpack.c.l.b16 %v486
      %v935 = vunpack.c.l.b16 %v487
      %v936 = vunpack.c.l.b16 %v488
      %v937 = vunpack.c.l.b16 %v489
      %v938 = vunpack.c.l.b16 %v490
      %v939 = vunpack.c.l.b16 %v491
      %v940 = vunpack.c.l.b16 %v492
      %v941 = vunpack.c.l.b16 %v493
      %v942 = vunpack.c.l.b16 %v494
      %v943 = vpack.c.b16 %v880, %v879
      %v944 = vpack.c.b16 %v882, %v881
      %v945 = vpack.c.b16 %v884, %v883
      %v946 = vpack.c.b16 %v886, %v885
      %v947 = vpack.c.b16 %v888, %v887
      %v948 = vpack.c.b16 %v890, %v889
      %v949 = vpack.c.b16 %v892, %v891
      %v950 = vpack.c.b16 %v894, %v893
      %v951 = vpack.c.b16 %v896, %v895
      %v952 = vpack.c.b16 %v898, %v897
      %v953 = vpack.c.b16 %v900, %v899
      %v954 = vpack.c.b16 %v902, %v901
      %v955 = vpack.c.b16 %v904, %v903
      %v956 = vpack.c.b16 %v906, %v905
      %v957 = vpack.c.b16 %v908, %v907
      %v958 = vpack.c.b16 %v910, %v909
      %v959 = vpack.c.b16 %v912, %v911
      %v960 = vpack.c.b16 %v914, %v913
      %v961 = vpack.c.b16 %v916, %v915
      %v962 = vpack.c.b16 %v918, %v917
      %v963 = vpack.c.b16 %v920, %v919
      %v964 = vpack.c.b16 %v922, %v921
      %v965 = vpack.c.b16 %v924, %v923
      %v966 = vpack.c.b16 %v926, %v925
      %v967 = vpack.c.b16 %v928, %v927
      %v968 = vpack.c.b16 %v930, %v929
      %v969 = vpack.c.b16 %v932, %v931
      %v970 = vpack.c.b16 %v934, %v933
      %v971 = vpack.c.b16 %v936, %v935
      %v972 = vpack.c.b16 %v938, %v937
      %v973 = vpack.c.b16 %v940, %v939
      %v974 = vpack.c.b16 %v942, %v941
      %1007 = vmatprep.subr.bf16.mxu0 0
      %1008 = vmatpush1.bf16.msra.mxu0 %v950
      %1009 = vmatprep.subr.bf16.mxu0 0
      %1010 = vmatpush1.bf16.msra.mxu0 %v949
      %1011 = vmatprep.subr.bf16.mxu0 0
      %1012 = vmatpush1.bf16.msra.mxu0 %v948
      %1013 = vmatprep.subr.bf16.mxu0 0
      %1014 = vmatpush1.bf16.msra.mxu0 %v947
      %1015 = vmatprep.subr.bf16.mxu0 0
      %1016 = vmatpush1.bf16.msra.mxu0 %v946
      %1017 = vmatprep.subr.bf16.mxu0 0
      %1018 = vmatpush1.bf16.msra.mxu0 %v945
      %1019 = vmatprep.subr.bf16.mxu0 0
      %1020 = vmatpush1.bf16.msra.mxu0 %v944
      %1021 = vmatprep.subr.bf16.mxu0 0
      %1022 = vmatpush1.bf16.msra.mxu0 %v943
      %1023 = vmatprep.subr.bf16.mxu0 0
      %1024 = vmatpush2.bf16.msra.mxu0 %v958
      %1025 = vmatprep.subr.bf16.mxu0 0
      %1026 = vmatpush2.bf16.msra.mxu0 %v957
      %1027 = vmatprep.subr.bf16.mxu0 0
      %1028 = vmatpush2.bf16.msra.mxu0 %v956
      %1029 = vmatprep.subr.bf16.mxu0 0
      %1030 = vmatpush2.bf16.msra.mxu0 %v955
      %1031 = vmatprep.subr.bf16.mxu0 0
      %1032 = vmatpush2.bf16.msra.mxu0 %v954
      %1033 = vmatprep.subr.bf16.mxu0 0
      %1034 = vmatpush2.bf16.msra.mxu0 %v953
      %1035 = vmatprep.subr.bf16.mxu0 0
      %1036 = vmatpush2.bf16.msra.mxu0 %v952
      %1037 = vmatprep.subr.bf16.mxu0 0
      %1038 = vmatpush2.bf16.msra.mxu0 %v951
      %1039 = vmatprep.mubr.bf16.mxu0 %v688
      %1040 = vmatmul.mubr.bf16.gmra.mxu0 %v687
      %v1041 = vpop.f32.mrf.mxu0
      %v1042 = vadd.f32 0.0, %v1041
      %v1043 = vpop.f32.mrf.mxu0
      %v1044 = vpop.f32.mrf.mxu0
      %v1045 = vadd.f32 0.0, %v1044
      %v1046 = vpop.f32.mrf.mxu0
      %1047 = vmatprep.mubr.bf16.mxu0 %v692
      %1048 = vmatmul.mubr.bf16.gmra.mxu0 %v691
      %v1049 = vpop.f32.mrf.mxu0
      %v1050 = vadd.f32 0.0, %v1049
      %v1051 = vpop.f32.mrf.mxu0
      %v1052 = vpop.f32.mrf.mxu0
      %v1053 = vadd.f32 0.0, %v1052
      %v1054 = vpop.f32.mrf.mxu0
      %1055 = vmatprep.mubr.bf16.mxu0 %v696
      %1056 = vmatmul.mubr.bf16.gmra.mxu0 %v695
      %v1057 = vpop.f32.mrf.mxu0
      %v1058 = vadd.f32 0.0, %v1057
      %v1059 = vpop.f32.mrf.mxu0
      %v1060 = vpop.f32.mrf.mxu0
      %v1061 = vadd.f32 0.0, %v1060
      %v1062 = vpop.f32.mrf.mxu0
      %1063 = vmatprep.mubr.bf16.mxu0 %v700
      %1064 = vmatmul.mubr.bf16.gmra.mxu0 %v699
      %v1065 = vpop.f32.mrf.mxu0
      %v1066 = vadd.f32 0.0, %v1065
      %v1067 = vpop.f32.mrf.mxu0
      %v1068 = vpop.f32.mrf.mxu0
      %v1069 = vadd.f32 0.0, %v1068
      %v1070 = vpop.f32.mrf.mxu0
      %1071 = vmatprep.mubr.bf16.mxu0 %v704
      %1072 = vmatmul.mubr.bf16.gmra.mxu0 %v703
      %v1073 = vpop.f32.mrf.mxu0
      %v1074 = vadd.f32 0.0, %v1073
      %v1075 = vpop.f32.mrf.mxu0
      %v1076 = vpop.f32.mrf.mxu0
      %v1077 = vadd.f32 0.0, %v1076
      %v1078 = vpop.f32.mrf.mxu0
      %1079 = vmatprep.mubr.bf16.mxu0 %v708
      %1080 = vmatmul.mubr.bf16.gmra.mxu0 %v707
      %v1081 = vpop.f32.mrf.mxu0
      %v1082 = vadd.f32 0.0, %v1081
      %v1083 = vpop.f32.mrf.mxu0
      %v1084 = vpop.f32.mrf.mxu0
      %v1085 = vadd.f32 0.0, %v1084
      %v1086 = vpop.f32.mrf.mxu0
      %1087 = vmatprep.mubr.bf16.mxu0 %v712
      %1088 = vmatmul.mubr.bf16.gmra.mxu0 %v711
      %v1089 = vpop.f32.mrf.mxu0
      %v1090 = vadd.f32 0.0, %v1089
      %v1091 = vpop.f32.mrf.mxu0
      %v1092 = vpop.f32.mrf.mxu0
      %v1093 = vadd.f32 0.0, %v1092
      %v1094 = vpop.f32.mrf.mxu0
      %1095 = vmatprep.mubr.bf16.mxu0 %v716
      %1096 = vmatmul.mubr.bf16.gmra.mxu0 %v715
      %v1097 = vpop.f32.mrf.mxu0
      %v1098 = vadd.f32 0.0, %v1097
      %v1099 = vpop.f32.mrf.mxu0
      %v1100 = vpop.f32.mrf.mxu0
      %v1101 = vadd.f32 0.0, %v1100
      %v1102 = vpop.f32.mrf.mxu0
      %1103 = vmatprep.mubr.bf16.mxu0 %v720
      %1104 = vmatmul.mubr.bf16.gmra.mxu0 %v719
      %v1105 = vpop.f32.mrf.mxu0
      %v1106 = vadd.f32 0.0, %v1105
      %v1107 = vpop.f32.mrf.mxu0
      %v1108 = vpop.f32.mrf.mxu0
      %v1109 = vadd.f32 0.0, %v1108
      %v1110 = vpop.f32.mrf.mxu0
      %1111 = vmatprep.mubr.bf16.mxu0 %v724
      %1112 = vmatmul.mubr.bf16.gmra.mxu0 %v723
      %v1113 = vpop.f32.mrf.mxu0
      %v1114 = vadd.f32 0.0, %v1113
      %v1115 = vpop.f32.mrf.mxu0
      %v1116 = vpop.f32.mrf.mxu0
      %v1117 = vadd.f32 0.0, %v1116
      %v1118 = vpop.f32.mrf.mxu0
      %1119 = vmatprep.mubr.bf16.mxu0 %v728
      %1120 = vmatmul.mubr.bf16.gmra.mxu0 %v727
      %v1121 = vpop.f32.mrf.mxu0
      %v1122 = vadd.f32 0.0, %v1121
      %v1123 = vpop.f32.mrf.mxu0
      %v1124 = vpop.f32.mrf.mxu0
      %v1125 = vadd.f32 0.0, %v1124
      %v1126 = vpop.f32.mrf.mxu0
      %1127 = vmatprep.mubr.bf16.mxu0 %v732
      %1128 = vmatmul.mubr.bf16.gmra.mxu0 %v731
      %v1129 = vpop.f32.mrf.mxu0
      %v1130 = vadd.f32 0.0, %v1129
      %v1131 = vpop.f32.mrf.mxu0
      %v1132 = vpop.f32.mrf.mxu0
      %v1133 = vadd.f32 0.0, %v1132
      %v1134 = vpop.f32.mrf.mxu0
      %1135 = vmatprep.mubr.bf16.mxu0 %v736
      %1136 = vmatmul.mubr.bf16.gmra.mxu0 %v735
      %v1137 = vpop.f32.mrf.mxu0
      %v1138 = vadd.f32 0.0, %v1137
      %v1139 = vpop.f32.mrf.mxu0
      %v1140 = vpop.f32.mrf.mxu0
      %v1141 = vadd.f32 0.0, %v1140
      %v1142 = vpop.f32.mrf.mxu0
      %1143 = vmatprep.mubr.bf16.mxu0 %v740
      %1144 = vmatmul.mubr.bf16.gmra.mxu0 %v739
      %v1145 = vpop.f32.mrf.mxu0
      %v1146 = vadd.f32 0.0, %v1145
      %v1147 = vpop.f32.mrf.mxu0
      %v1148 = vpop.f32.mrf.mxu0
      %v1149 = vadd.f32 0.0, %v1148
      %v1150 = vpop.f32.mrf.mxu0
      %1151 = vmatprep.mubr.bf16.mxu0 %v744
      %1152 = vmatmul.mubr.bf16.gmra.mxu0 %v743
      %v1153 = vpop.f32.mrf.mxu0
      %v1154 = vadd.f32 0.0, %v1153
      %v1155 = vpop.f32.mrf.mxu0
      %v1156 = vpop.f32.mrf.mxu0
      %v1157 = vadd.f32 0.0, %v1156
      %v1158 = vpop.f32.mrf.mxu0
      %1159 = vmatprep.mubr.bf16.mxu0 %v748
      %1160 = vmatmul.mubr.bf16.gmra.mxu0 %v747
      %v1161 = vpop.f32.mrf.mxu0
      %v1162 = vadd.f32 0.0, %v1161
      %v1163 = vpop.f32.mrf.mxu0
      %v1164 = vpop.f32.mrf.mxu0
      %v1165 = vadd.f32 0.0, %v1164
      %v1166 = vpop.f32.mrf.mxu0
      %1167 = vdwg.mxu0
      %1168 = vmatprep.subr.bf16.mxu0 0
      %1169 = vmatpush1.bf16.msra.mxu0 %v966
      %1170 = vmatprep.subr.bf16.mxu0 0
      %1171 = vmatpush1.bf16.msra.mxu0 %v965
      %1172 = vmatprep.subr.bf16.mxu0 0
      %1173 = vmatpush1.bf16.msra.mxu0 %v964
      %1174 = vmatprep.subr.bf16.mxu0 0
      %1175 = vmatpush1.bf16.msra.mxu0 %v963
      %1176 = vmatprep.subr.bf16.mxu0 0
      %1177 = vmatpush1.bf16.msra.mxu0 %v962
      %1178 = vmatprep.subr.bf16.mxu0 0
      %1179 = vmatpush1.bf16.msra.mxu0 %v961
      %1180 = vmatprep.subr.bf16.mxu0 0
      %1181 = vmatpush1.bf16.msra.mxu0 %v960
      %1182 = vmatprep.subr.bf16.mxu0 0
      %1183 = vmatpush1.bf16.msra.mxu0 %v959
      %1184 = vmatprep.subr.bf16.mxu0 0
      %1185 = vmatpush2.bf16.msra.mxu0 %v974
      %1186 = vmatprep.subr.bf16.mxu0 0
      %1187 = vmatpush2.bf16.msra.mxu0 %v973
      %1188 = vmatprep.subr.bf16.mxu0 0
      %1189 = vmatpush2.bf16.msra.mxu0 %v972
      %1190 = vmatprep.subr.bf16.mxu0 0
      %1191 = vmatpush2.bf16.msra.mxu0 %v971
      %1192 = vmatprep.subr.bf16.mxu0 0
      %1193 = vmatpush2.bf16.msra.mxu0 %v970
      %1194 = vmatprep.subr.bf16.mxu0 0
      %1195 = vmatpush2.bf16.msra.mxu0 %v969
      %1196 = vmatprep.subr.bf16.mxu0 0
      %1197 = vmatpush2.bf16.msra.mxu0 %v968
      %1198 = vmatprep.subr.bf16.mxu0 0
      %1199 = vmatpush2.bf16.msra.mxu0 %v967
      %1200 = vmatprep.mubr.bf16.mxu0 %v690
      %1201 = vmatmul.mubr.bf16.gmra.mxu0 %v689
      %v1202 = vpop.f32.mrf.mxu0
      %v1203 = vadd.f32 %v1042, %v1202
      %v1204 = vpop.f32.mrf.mxu0
      %v1205 = vpop.f32.mrf.mxu0
      %v1206 = vadd.f32 %v1045, %v1205
      %v1207 = vpop.f32.mrf.mxu0
      %1208 = vmatprep.mubr.bf16.mxu0 %v694
      %1209 = vmatmul.mubr.bf16.gmra.mxu0 %v693
      %v1210 = vpop.f32.mrf.mxu0
      %v1211 = vadd.f32 %v1050, %v1210
      %v1212 = vpop.f32.mrf.mxu0
      %v1213 = vpop.f32.mrf.mxu0
      %v1214 = vadd.f32 %v1053, %v1213
      %v1215 = vpop.f32.mrf.mxu0
      %1216 = vmatprep.mubr.bf16.mxu0 %v698
      %1217 = vmatmul.mubr.bf16.gmra.mxu0 %v697
      %v1218 = vpop.f32.mrf.mxu0
      %v1219 = vadd.f32 %v1058, %v1218
      %v1220 = vpop.f32.mrf.mxu0
      %v1221 = vpop.f32.mrf.mxu0
      %v1222 = vadd.f32 %v1061, %v1221
      %v1223 = vpop.f32.mrf.mxu0
      %1224 = vmatprep.mubr.bf16.mxu0 %v702
      %1225 = vmatmul.mubr.bf16.gmra.mxu0 %v701
      %v1226 = vpop.f32.mrf.mxu0
      %v1227 = vadd.f32 %v1066, %v1226
      %v1228 = vpop.f32.mrf.mxu0
      %v1229 = vpop.f32.mrf.mxu0
      %v1230 = vadd.f32 %v1069, %v1229
      %v1231 = vpop.f32.mrf.mxu0
      %1232 = vmatprep.mubr.bf16.mxu0 %v706
      %1233 = vmatmul.mubr.bf16.gmra.mxu0 %v705
      %v1234 = vpop.f32.mrf.mxu0
      %v1235 = vadd.f32 %v1074, %v1234
      %v1236 = vpop.f32.mrf.mxu0
      %v1237 = vpop.f32.mrf.mxu0
      %v1238 = vadd.f32 %v1077, %v1237
      %v1239 = vpop.f32.mrf.mxu0
      %1240 = vmatprep.mubr.bf16.mxu0 %v710
      %1241 = vmatmul.mubr.bf16.gmra.mxu0 %v709
      %v1242 = vpop.f32.mrf.mxu0
      %v1243 = vadd.f32 %v1082, %v1242
      %v1244 = vpop.f32.mrf.mxu0
      %v1245 = vpop.f32.mrf.mxu0
      %v1246 = vadd.f32 %v1085, %v1245
      %v1247 = vpop.f32.mrf.mxu0
      %1248 = vmatprep.mubr.bf16.mxu0 %v714
      %1249 = vmatmul.mubr.bf16.gmra.mxu0 %v713
      %v1250 = vpop.f32.mrf.mxu0
      %v1251 = vadd.f32 %v1090, %v1250
      %v1252 = vpop.f32.mrf.mxu0
      %v1253 = vpop.f32.mrf.mxu0
      %v1254 = vadd.f32 %v1093, %v1253
      %v1255 = vpop.f32.mrf.mxu0
      %1256 = vmatprep.mubr.bf16.mxu0 %v718
      %1257 = vmatmul.mubr.bf16.gmra.mxu0 %v717
      %v1258 = vpop.f32.mrf.mxu0
      %v1259 = vadd.f32 %v1098, %v1258
      %v1260 = vpop.f32.mrf.mxu0
      %v1261 = vpop.f32.mrf.mxu0
      %v1262 = vadd.f32 %v1101, %v1261
      %v1263 = vpop.f32.mrf.mxu0
      %1264 = vmatprep.mubr.bf16.mxu0 %v722
      %1265 = vmatmul.mubr.bf16.gmra.mxu0 %v721
      %v1266 = vpop.f32.mrf.mxu0
      %v1267 = vadd.f32 %v1106, %v1266
      %v1268 = vpop.f32.mrf.mxu0
      %v1269 = vpop.f32.mrf.mxu0
      %v1270 = vadd.f32 %v1109, %v1269
      %v1271 = vpop.f32.mrf.mxu0
      %1272 = vmatprep.mubr.bf16.mxu0 %v726
      %1273 = vmatmul.mubr.bf16.gmra.mxu0 %v725
      %v1274 = vpop.f32.mrf.mxu0
      %v1275 = vadd.f32 %v1114, %v1274
      %v1276 = vpop.f32.mrf.mxu0
      %v1277 = vpop.f32.mrf.mxu0
      %v1278 = vadd.f32 %v1117, %v1277
      %v1279 = vpop.f32.mrf.mxu0
      %1280 = vmatprep.mubr.bf16.mxu0 %v730
      %1281 = vmatmul.mubr.bf16.gmra.mxu0 %v729
      %v1282 = vpop.f32.mrf.mxu0
      %v1283 = vadd.f32 %v1122, %v1282
      %v1284 = vpop.f32.mrf.mxu0
      %v1285 = vpop.f32.mrf.mxu0
      %v1286 = vadd.f32 %v1125, %v1285
      %v1287 = vpop.f32.mrf.mxu0
      %1288 = vmatprep.mubr.bf16.mxu0 %v734
      %1289 = vmatmul.mubr.bf16.gmra.mxu0 %v733
      %v1290 = vpop.f32.mrf.mxu0
      %v1291 = vadd.f32 %v1130, %v1290
      %v1292 = vpop.f32.mrf.mxu0
      %v1293 = vpop.f32.mrf.mxu0
      %v1294 = vadd.f32 %v1133, %v1293
      %v1295 = vpop.f32.mrf.mxu0
      %1296 = vmatprep.mubr.bf16.mxu0 %v738
      %1297 = vmatmul.mubr.bf16.gmra.mxu0 %v737
      %v1298 = vpop.f32.mrf.mxu0
      %v1299 = vadd.f32 %v1138, %v1298
      %v1300 = vpop.f32.mrf.mxu0
      %v1301 = vpop.f32.mrf.mxu0
      %v1302 = vadd.f32 %v1141, %v1301
      %v1303 = vpop.f32.mrf.mxu0
      %1304 = vmatprep.mubr.bf16.mxu0 %v742
      %1305 = vmatmul.mubr.bf16.gmra.mxu0 %v741
      %v1306 = vpop.f32.mrf.mxu0
      %v1307 = vadd.f32 %v1146, %v1306
      %v1308 = vpop.f32.mrf.mxu0
      %v1309 = vpop.f32.mrf.mxu0
      %v1310 = vadd.f32 %v1149, %v1309
      %v1311 = vpop.f32.mrf.mxu0
      %1312 = vmatprep.mubr.bf16.mxu0 %v746
      %1313 = vmatmul.mubr.bf16.gmra.mxu0 %v745
      %v1314 = vpop.f32.mrf.mxu0
      %v1315 = vadd.f32 %v1154, %v1314
      %v1316 = vpop.f32.mrf.mxu0
      %v1317 = vpop.f32.mrf.mxu0
      %v1318 = vadd.f32 %v1157, %v1317
      %v1319 = vpop.f32.mrf.mxu0
      %1320 = vmatprep.mubr.bf16.mxu0 %v750
      %1321 = vmatmul.mubr.bf16.gmra.mxu0 %v749
      %v1322 = vpop.f32.mrf.mxu0
      %v1323 = vadd.f32 %v1162, %v1322
      %v1324 = vpop.f32.mrf.mxu0
      %v1325 = vpop.f32.mrf.mxu0
      %v1326 = vadd.f32 %v1165, %v1325
      %v1327 = vpop.f32.mrf.mxu0
      %1328 = vdwg.mxu0
      %v1329 = vadd.f32 %v335, %v1203
      %v1330 = vadd.f32 %v336, %v1206
      %v1331 = vadd.f32 %v337, %v1211
      %v1332 = vadd.f32 %v338, %v1214
      %v1333 = vadd.f32 %v339, %v1219
      %v1334 = vadd.f32 %v340, %v1222
      %v1335 = vadd.f32 %v341, %v1227
      %v1336 = vadd.f32 %v342, %v1230
      %v1337 = vadd.f32 %v343, %v1235
      %v1338 = vadd.f32 %v344, %v1238
      %v1339 = vadd.f32 %v345, %v1243
      %v1340 = vadd.f32 %v346, %v1246
      %v1341 = vadd.f32 %v347, %v1251
      %v1342 = vadd.f32 %v348, %v1254
      %v1343 = vadd.f32 %v349, %v1259
      %v1344 = vadd.f32 %v350, %v1262
      %v1345 = vadd.f32 %v351, %v1267
      %v1346 = vadd.f32 %v352, %v1270
      %v1347 = vadd.f32 %v353, %v1275
      %v1348 = vadd.f32 %v354, %v1278
      %v1349 = vadd.f32 %v355, %v1283
      %v1350 = vadd.f32 %v356, %v1286
      %v1351 = vadd.f32 %v357, %v1291
      %v1352 = vadd.f32 %v358, %v1294
      %v1353 = vadd.f32 %v359, %v1299
      %v1354 = vadd.f32 %v360, %v1302
      %v1355 = vadd.f32 %v361, %v1307
      %v1356 = vadd.f32 %v362, %v1310
      %v1357 = vadd.f32 %v363, %v1315
      %v1358 = vadd.f32 %v364, %v1318
      %v1359 = vadd.f32 %v365, %v1323
      %v1360 = vadd.f32 %v366, %v1326
      %1361 = vst [vmem:[#allocation2] sm:$0xff] %v1329
      %1362 = vst [vmem:[#allocation2 + $0x8] sm:$0xff] %v1330
      %1363 = vst [vmem:[#allocation2 + $0x10] sm:$0xff] %v1331
      %1364 = vst [vmem:[#allocation2 + $0x18] sm:$0xff] %v1332
      %1365 = vst [vmem:[#allocation2 + $0x20] sm:$0xff] %v1333
      %1366 = vst [vmem:[#allocation2 + $0x28] sm:$0xff] %v1334
      %1367 = vst [vmem:[#allocation2 + $0x30] sm:$0xff] %v1335
      %1368 = vst [vmem:[#allocation2 + $0x38] sm:$0xff] %v1336
      %1369 = vst [vmem:[#allocation2 + $0x40] sm:$0xff] %v1337
      %1370 = vst [vmem:[#allocation2 + $0x48] sm:$0xff] %v1338
      %1371 = vst [vmem:[#allocation2 + $0x50] sm:$0xff] %v1339
      %1372 = vst [vmem:[#allocation2 + $0x58] sm:$0xff] %v1340
      %1373 = vst [vmem:[#allocation2 + $0x60] sm:$0xff] %v1341
      %1374 = vst [vmem:[#allocation2 + $0x68] sm:$0xff] %v1342
      %1375 = vst [vmem:[#allocation2 + $0x70] sm:$0xff] %v1343
      %1376 = vst [vmem:[#allocation2 + $0x78] sm:$0xff] %v1344
      %1377 = vst [vmem:[#allocation2 + $0x80] sm:$0xff] %v1345
      %1378 = vst [vmem:[#allocation2 + $0x88] sm:$0xff] %v1346
      %1379 = vst [vmem:[#allocation2 + $0x90] sm:$0xff] %v1347
      %1380 = vst [vmem:[#allocation2 + $0x98] sm:$0xff] %v1348
      %1381 = vst [vmem:[#allocation2 + $0xa0] sm:$0xff] %v1349
      %1382 = vst [vmem:[#allocation2 + $0xa8] sm:$0xff] %v1350
      %1383 = vst [vmem:[#allocation2 + $0xb0] sm:$0xff] %v1351
      %1384 = vst [vmem:[#allocation2 + $0xb8] sm:$0xff] %v1352
      %1385 = vst [vmem:[#allocation2 + $0xc0] sm:$0xff] %v1353
      %1386 = vst [vmem:[#allocation2 + $0xc8] sm:$0xff] %v1354
      %1387 = vst [vmem:[#allocation2 + $0xd0] sm:$0xff] %v1355
      %1388 = vst [vmem:[#allocation2 + $0xd8] sm:$0xff] %v1356
      %1389 = vst [vmem:[#allocation2 + $0xe0] sm:$0xff] %v1357
      %1390 = vst [vmem:[#allocation2 + $0xe8] sm:$0xff] %v1358
      %1391 = vst [vmem:[#allocation2 + $0xf0] sm:$0xff] %v1359
      %1392 = vst [vmem:[#allocation2 + $0xf8] sm:$0xff] %v1360
      // Predicated region
      $region41: #{graphsage_forward.5} parent=35 // pred_check
        %p1393 = pneg %p299
      $region42: #{graphsage_forward.5} parent=35 // pred_check_branch
        %1395 = sbr.rel (%p1393) target = $region44
      $region43: #{graphsage_forward.5} parent=35 // pred_region
        %v1396 = vld [vmem:[#allocation2] sm:$0xff]
        %v1397 = vld [vmem:[#allocation2 + $0x8] sm:$0xff]
        %v1398 = vld [vmem:[#allocation2 + $0x10] sm:$0xff]
        %v1399 = vld [vmem:[#allocation2 + $0x18] sm:$0xff]
        %v1400 = vld [vmem:[#allocation2 + $0x20] sm:$0xff]
        %v1401 = vld [vmem:[#allocation2 + $0x28] sm:$0xff]
        %v1402 = vld [vmem:[#allocation2 + $0x30] sm:$0xff]
        %v1403 = vld [vmem:[#allocation2 + $0x38] sm:$0xff]
        %v1404 = vld [vmem:[#allocation2 + $0x40] sm:$0xff]
        %v1405 = vld [vmem:[#allocation2 + $0x48] sm:$0xff]
        %v1406 = vld [vmem:[#allocation2 + $0x50] sm:$0xff]
        %v1407 = vld [vmem:[#allocation2 + $0x58] sm:$0xff]
        %v1408 = vld [vmem:[#allocation2 + $0x60] sm:$0xff]
        %v1409 = vld [vmem:[#allocation2 + $0x68] sm:$0xff]
        %v1410 = vld [vmem:[#allocation2 + $0x70] sm:$0xff]
        %v1411 = vld [vmem:[#allocation2 + $0x78] sm:$0xff]
        %v1412 = vld [vmem:[#allocation2 + $0x80] sm:$0xff]
        %v1413 = vld [vmem:[#allocation2 + $0x88] sm:$0xff]
        %v1414 = vld [vmem:[#allocation2 + $0x90] sm:$0xff]
        %v1415 = vld [vmem:[#allocation2 + $0x98] sm:$0xff]
        %v1416 = vld [vmem:[#allocation2 + $0xa0] sm:$0xff]
        %v1417 = vld [vmem:[#allocation2 + $0xa8] sm:$0xff]
        %v1418 = vld [vmem:[#allocation2 + $0xb0] sm:$0xff]
        %v1419 = vld [vmem:[#allocation2 + $0xb8] sm:$0xff]
        %v1420 = vld [vmem:[#allocation2 + $0xc0] sm:$0xff]
        %v1421 = vld [vmem:[#allocation2 + $0xc8] sm:$0xff]
        %v1422 = vld [vmem:[#allocation2 + $0xd0] sm:$0xff]
        %v1423 = vld [vmem:[#allocation2 + $0xd8] sm:$0xff]
        %v1424 = vld [vmem:[#allocation2 + $0xe0] sm:$0xff]
        %v1425 = vld [vmem:[#allocation2 + $0xe8] sm:$0xff]
        %v1426 = vld [vmem:[#allocation2 + $0xf0] sm:$0xff]
        %v1427 = vld [vmem:[#allocation2 + $0xf8] sm:$0xff]
        %v1428 = vld [vmem:[%s284] sm:$0xff]
        %v1429 = vld [vmem:[%s284 + $0x8] sm:$0xff]
        %v1430 = vld [vmem:[%s284 + $0x10] sm:$0xff]
        %v1431 = vld [vmem:[%s284 + $0x18] sm:$0xff]
        %v1432 = vld [vmem:[%s284 + $0x20] sm:$0xff]
        %v1433 = vld [vmem:[%s284 + $0x28] sm:$0xff]
        %v1434 = vld [vmem:[%s284 + $0x30] sm:$0xff]
        %v1435 = vld [vmem:[%s284 + $0x38] sm:$0xff]
        %v1436 = vld [vmem:[%s284 + $0x40] sm:$0xff]
        %v1437 = vld [vmem:[%s284 + $0x48] sm:$0xff]
        %v1438 = vld [vmem:[%s284 + $0x50] sm:$0xff]
        %v1439 = vld [vmem:[%s284 + $0x58] sm:$0xff]
        %v1440 = vld [vmem:[%s284 + $0x60] sm:$0xff]
        %v1441 = vld [vmem:[%s284 + $0x68] sm:$0xff]
        %v1442 = vld [vmem:[%s284 + $0x70] sm:$0xff]
        %v1443 = vld [vmem:[%s284 + $0x78] sm:$0xff]
        %v1444 = vld [vmem:[%s284 + $0x80] sm:$0xff]
        %v1445 = vld [vmem:[%s284 + $0x88] sm:$0xff]
        %v1446 = vld [vmem:[%s284 + $0x90] sm:$0xff]
        %v1447 = vld [vmem:[%s284 + $0x98] sm:$0xff]
        %v1448 = vld [vmem:[%s284 + $0xa0] sm:$0xff]
        %v1449 = vld [vmem:[%s284 + $0xa8] sm:$0xff]
        %v1450 = vld [vmem:[%s284 + $0xb0] sm:$0xff]
        %v1451 = vld [vmem:[%s284 + $0xb8] sm:$0xff]
        %v1452 = vld [vmem:[%s284 + $0xc0] sm:$0xff]
        %v1453 = vld [vmem:[%s284 + $0xc8] sm:$0xff]
        %v1454 = vld [vmem:[%s284 + $0xd0] sm:$0xff]
        %v1455 = vld [vmem:[%s284 + $0xd8] sm:$0xff]
        %v1456 = vld [vmem:[%s284 + $0xe0] sm:$0xff]
        %v1457 = vld [vmem:[%s284 + $0xe8] sm:$0xff]
        %v1458 = vld [vmem:[%s284 + $0xf0] sm:$0xff]
        %v1459 = vld [vmem:[%s284 + $0xf8] sm:$0xff]
        %1461 = vset.pattern.permute.xlu0 0
        %1462 = vperm.xlu0 %1461, %v1428
        %v1463 = vpop.permute.xlu0 %1462
        %1466 = vset.pattern.permute.xlu0 0
        %1467 = vperm.xlu0 %1466, %v1429
        %v1468 = vpop.permute.xlu0 %1467
        %1471 = vset.pattern.permute.xlu0 0
        %1472 = vperm.xlu0 %1471, %v1430
        %v1473 = vpop.permute.xlu0 %1472
        %1476 = vset.pattern.permute.xlu0 0
        %1477 = vperm.xlu0 %1476, %v1431
        %v1478 = vpop.permute.xlu0 %1477
        %1481 = vset.pattern.permute.xlu0 0
        %1482 = vperm.xlu0 %1481, %v1432
        %v1483 = vpop.permute.xlu0 %1482
        %1486 = vset.pattern.permute.xlu0 0
        %1487 = vperm.xlu0 %1486, %v1433
        %v1488 = vpop.permute.xlu0 %1487
        %1491 = vset.pattern.permute.xlu0 0
        %1492 = vperm.xlu0 %1491, %v1434
        %v1493 = vpop.permute.xlu0 %1492
        %1496 = vset.pattern.permute.xlu0 0
        %1497 = vperm.xlu0 %1496, %v1435
        %v1498 = vpop.permute.xlu0 %1497
        %1501 = vset.pattern.permute.xlu0 0
        %1502 = vperm.xlu0 %1501, %v1436
        %v1503 = vpop.permute.xlu0 %1502
        %1506 = vset.pattern.permute.xlu0 0
        %1507 = vperm.xlu0 %1506, %v1437
        %v1508 = vpop.permute.xlu0 %1507
        %1511 = vset.pattern.permute.xlu0 0
        %1512 = vperm.xlu0 %1511, %v1438
        %v1513 = vpop.permute.xlu0 %1512
        %1516 = vset.pattern.permute.xlu0 0
        %1517 = vperm.xlu0 %1516, %v1439
        %v1518 = vpop.permute.xlu0 %1517
        %1521 = vset.pattern.permute.xlu0 0
        %1522 = vperm.xlu0 %1521, %v1440
        %v1523 = vpop.permute.xlu0 %1522
        %1526 = vset.pattern.permute.xlu0 0
        %1527 = vperm.xlu0 %1526, %v1441
        %v1528 = vpop.permute.xlu0 %1527
        %1531 = vset.pattern.permute.xlu0 0
        %1532 = vperm.xlu0 %1531, %v1442
        %v1533 = vpop.permute.xlu0 %1532
        %1536 = vset.pattern.permute.xlu0 0
        %1537 = vperm.xlu0 %1536, %v1443
        %v1538 = vpop.permute.xlu0 %1537
        %1541 = vset.pattern.permute.xlu0 0
        %1542 = vperm.xlu0 %1541, %v1444
        %v1543 = vpop.permute.xlu0 %1542
        %1546 = vset.pattern.permute.xlu0 0
        %1547 = vperm.xlu0 %1546, %v1445
        %v1548 = vpop.permute.xlu0 %1547
        %1551 = vset.pattern.permute.xlu0 0
        %1552 = vperm.xlu0 %1551, %v1446
        %v1553 = vpop.permute.xlu0 %1552
        %1556 = vset.pattern.permute.xlu0 0
        %1557 = vperm.xlu0 %1556, %v1447
        %v1558 = vpop.permute.xlu0 %1557
        %1561 = vset.pattern.permute.xlu0 0
        %1562 = vperm.xlu0 %1561, %v1448
        %v1563 = vpop.permute.xlu0 %1562
        %1566 = vset.pattern.permute.xlu0 0
        %1567 = vperm.xlu0 %1566, %v1449
        %v1568 = vpop.permute.xlu0 %1567
        %1571 = vset.pattern.permute.xlu0 0
        %1572 = vperm.xlu0 %1571, %v1450
        %v1573 = vpop.permute.xlu0 %1572
        %1576 = vset.pattern.permute.xlu0 0
        %1577 = vperm.xlu0 %1576, %v1451
        %v1578 = vpop.permute.xlu0 %1577
        %1581 = vset.pattern.permute.xlu0 0
        %1582 = vperm.xlu0 %1581, %v1452
        %v1583 = vpop.permute.xlu0 %1582
        %1586 = vset.pattern.permute.xlu0 0
        %1587 = vperm.xlu0 %1586, %v1453
        %v1588 = vpop.permute.xlu0 %1587
        %1591 = vset.pattern.permute.xlu0 0
        %1592 = vperm.xlu0 %1591, %v1454
        %v1593 = vpop.permute.xlu0 %1592
        %1596 = vset.pattern.permute.xlu0 0
        %1597 = vperm.xlu0 %1596, %v1455
        %v1598 = vpop.permute.xlu0 %1597
        %1601 = vset.pattern.permute.xlu0 0
        %1602 = vperm.xlu0 %1601, %v1456
        %v1603 = vpop.permute.xlu0 %1602
        %1606 = vset.pattern.permute.xlu0 0
        %1607 = vperm.xlu0 %1606, %v1457
        %v1608 = vpop.permute.xlu0 %1607
        %1611 = vset.pattern.permute.xlu0 0
        %1612 = vperm.xlu0 %1611, %v1458
        %v1613 = vpop.permute.xlu0 %1612
        %1616 = vset.pattern.permute.xlu0 0
        %1617 = vperm.xlu0 %1616, %v1459
        %v1618 = vpop.permute.xlu0 %1617
        %v1620 = vmul.f32 %v1396, %v1463
        %v1621 = vmul.f32 %v1397, %v1468
        %v1622 = vmul.f32 %v1398, %v1473
        %v1623 = vmul.f32 %v1399, %v1478
        %v1624 = vmul.f32 %v1400, %v1483
        %v1625 = vmul.f32 %v1401, %v1488
        %v1626 = vmul.f32 %v1402, %v1493
        %v1627 = vmul.f32 %v1403, %v1498
        %v1628 = vmul.f32 %v1404, %v1503
        %v1629 = vmul.f32 %v1405, %v1508
        %v1630 = vmul.f32 %v1406, %v1513
        %v1631 = vmul.f32 %v1407, %v1518
        %v1632 = vmul.f32 %v1408, %v1523
        %v1633 = vmul.f32 %v1409, %v1528
        %v1634 = vmul.f32 %v1410, %v1533
        %v1635 = vmul.f32 %v1411, %v1538
        %v1636 = vmul.f32 %v1412, %v1543
        %v1637 = vmul.f32 %v1413, %v1548
        %v1638 = vmul.f32 %v1414, %v1553
        %v1639 = vmul.f32 %v1415, %v1558
        %v1640 = vmul.f32 %v1416, %v1563
        %v1641 = vmul.f32 %v1417, %v1568
        %v1642 = vmul.f32 %v1418, %v1573
        %v1643 = vmul.f32 %v1419, %v1578
        %v1644 = vmul.f32 %v1420, %v1583
        %v1645 = vmul.f32 %v1421, %v1588
        %v1646 = vmul.f32 %v1422, %v1593
        %v1647 = vmul.f32 %v1423, %v1598
        %v1648 = vmul.f32 %v1424, %v1603
        %v1649 = vmul.f32 %v1425, %v1608
        %v1650 = vmul.f32 %v1426, %v1613
        %v1651 = vmul.f32 %v1427, %v1618
        %v1652 = vld [vmem:[%s290] sm:$0xff]
        %v1653 = vld [vmem:[%s290 + $0x8] sm:$0xff]
        %v1654 = vld [vmem:[%s290 + $0x10] sm:$0xff]
        %v1655 = vld [vmem:[%s290 + $0x18] sm:$0xff]
        %v1656 = vld [vmem:[%s290 + $0x20] sm:$0xff]
        %v1657 = vld [vmem:[%s290 + $0x28] sm:$0xff]
        %v1658 = vld [vmem:[%s290 + $0x30] sm:$0xff]
        %v1659 = vld [vmem:[%s290 + $0x38] sm:$0xff]
        %v1660 = vld [vmem:[%s290 + $0x40] sm:$0xff]
        %v1661 = vld [vmem:[%s290 + $0x48] sm:$0xff]
        %v1662 = vld [vmem:[%s290 + $0x50] sm:$0xff]
        %v1663 = vld [vmem:[%s290 + $0x58] sm:$0xff]
        %v1664 = vld [vmem:[%s290 + $0x60] sm:$0xff]
        %v1665 = vld [vmem:[%s290 + $0x68] sm:$0xff]
        %v1666 = vld [vmem:[%s290 + $0x70] sm:$0xff]
        %v1667 = vld [vmem:[%s290 + $0x78] sm:$0xff]
        %v1668 = vld [vmem:[%s290 + $0x80] sm:$0xff]
        %v1669 = vld [vmem:[%s290 + $0x88] sm:$0xff]
        %v1670 = vld [vmem:[%s290 + $0x90] sm:$0xff]
        %v1671 = vld [vmem:[%s290 + $0x98] sm:$0xff]
        %v1672 = vld [vmem:[%s290 + $0xa0] sm:$0xff]
        %v1673 = vld [vmem:[%s290 + $0xa8] sm:$0xff]
        %v1674 = vld [vmem:[%s290 + $0xb0] sm:$0xff]
        %v1675 = vld [vmem:[%s290 + $0xb8] sm:$0xff]
        %v1676 = vld [vmem:[%s290 + $0xc0] sm:$0xff]
        %v1677 = vld [vmem:[%s290 + $0xc8] sm:$0xff]
        %v1678 = vld [vmem:[%s290 + $0xd0] sm:$0xff]
        %v1679 = vld [vmem:[%s290 + $0xd8] sm:$0xff]
        %v1680 = vld [vmem:[%s290 + $0xe0] sm:$0xff]
        %v1681 = vld [vmem:[%s290 + $0xe8] sm:$0xff]
        %v1682 = vld [vmem:[%s290 + $0xf0] sm:$0xff]
        %v1683 = vld [vmem:[%s290 + $0xf8] sm:$0xff]
        %v1684 = vadd.f32 %v1620, %v1652
        %v1685 = vadd.f32 %v1621, %v1653
        %v1686 = vadd.f32 %v1622, %v1654
        %v1687 = vadd.f32 %v1623, %v1655
        %v1688 = vadd.f32 %v1624, %v1656
        %v1689 = vadd.f32 %v1625, %v1657
        %v1690 = vadd.f32 %v1626, %v1658
        %v1691 = vadd.f32 %v1627, %v1659
        %v1692 = vadd.f32 %v1628, %v1660
        %v1693 = vadd.f32 %v1629, %v1661
        %v1694 = vadd.f32 %v1630, %v1662
        %v1695 = vadd.f32 %v1631, %v1663
        %v1696 = vadd.f32 %v1632, %v1664
        %v1697 = vadd.f32 %v1633, %v1665
        %v1698 = vadd.f32 %v1634, %v1666
        %v1699 = vadd.f32 %v1635, %v1667
        %v1700 = vadd.f32 %v1636, %v1668
        %v1701 = vadd.f32 %v1637, %v1669
        %v1702 = vadd.f32 %v1638, %v1670
        %v1703 = vadd.f32 %v1639, %v1671
        %v1704 = vadd.f32 %v1640, %v1672
        %v1705 = vadd.f32 %v1641, %v1673
        %v1706 = vadd.f32 %v1642, %v1674
        %v1707 = vadd.f32 %v1643, %v1675
        %v1708 = vadd.f32 %v1644, %v1676
        %v1709 = vadd.f32 %v1645, %v1677
        %v1710 = vadd.f32 %v1646, %v1678
        %v1711 = vadd.f32 %v1647, %v1679
        %v1712 = vadd.f32 %v1648, %v1680
        %v1713 = vadd.f32 %v1649, %v1681
        %v1714 = vadd.f32 %v1650, %v1682
        %v1715 = vadd.f32 %v1651, %v1683
        %v1716 = vmax.f32 %v1684, 0.0
        %v1717 = vmax.f32 %v1685, 0.0
        %v1718 = vmax.f32 %v1686, 0.0
        %v1719 = vmax.f32 %v1687, 0.0
        %v1720 = vmax.f32 %v1688, 0.0
        %v1721 = vmax.f32 %v1689, 0.0
        %v1722 = vmax.f32 %v1690, 0.0
        %v1723 = vmax.f32 %v1691, 0.0
        %v1724 = vmax.f32 %v1692, 0.0
        %v1725 = vmax.f32 %v1693, 0.0
        %v1726 = vmax.f32 %v1694, 0.0
        %v1727 = vmax.f32 %v1695, 0.0
        %v1728 = vmax.f32 %v1696, 0.0
        %v1729 = vmax.f32 %v1697, 0.0
        %v1730 = vmax.f32 %v1698, 0.0
        %v1731 = vmax.f32 %v1699, 0.0
        %v1732 = vmax.f32 %v1700, 0.0
        %v1733 = vmax.f32 %v1701, 0.0
        %v1734 = vmax.f32 %v1702, 0.0
        %v1735 = vmax.f32 %v1703, 0.0
        %v1736 = vmax.f32 %v1704, 0.0
        %v1737 = vmax.f32 %v1705, 0.0
        %v1738 = vmax.f32 %v1706, 0.0
        %v1739 = vmax.f32 %v1707, 0.0
        %v1740 = vmax.f32 %v1708, 0.0
        %v1741 = vmax.f32 %v1709, 0.0
        %v1742 = vmax.f32 %v1710, 0.0
        %v1743 = vmax.f32 %v1711, 0.0
        %v1744 = vmax.f32 %v1712, 0.0
        %v1745 = vmax.f32 %v1713, 0.0
        %v1746 = vmax.f32 %v1714, 0.0
        %v1747 = vmax.f32 %v1715, 0.0
        %v1748 = vpack.c.bf16 %v1717, %v1716
        %v1749 = vpack.c.bf16 %v1719, %v1718
        %v1750 = vpack.c.bf16 %v1721, %v1720
        %v1751 = vpack.c.bf16 %v1723, %v1722
        %v1752 = vpack.c.bf16 %v1725, %v1724
        %v1753 = vpack.c.bf16 %v1727, %v1726
        %v1754 = vpack.c.bf16 %v1729, %v1728
        %v1755 = vpack.c.bf16 %v1731, %v1730
        %v1756 = vpack.c.bf16 %v1733, %v1732
        %v1757 = vpack.c.bf16 %v1735, %v1734
        %v1758 = vpack.c.bf16 %v1737, %v1736
        %v1759 = vpack.c.bf16 %v1739, %v1738
        %v1760 = vpack.c.bf16 %v1741, %v1740
        %v1761 = vpack.c.bf16 %v1743, %v1742
        %v1762 = vpack.c.bf16 %v1745, %v1744
        %v1763 = vpack.c.bf16 %v1747, %v1746
        %v1780 = vunpack.c.l.b16 %v1748
        %v1781 = vunpack.c.h.b16 %v1748
        %v1782 = vunpack.c.l.b16 %v1749
        %v1783 = vunpack.c.h.b16 %v1749
        %v1784 = vunpack.c.l.b16 %v1750
        %v1785 = vunpack.c.h.b16 %v1750
        %v1786 = vunpack.c.l.b16 %v1751
        %v1787 = vunpack.c.h.b16 %v1751
        %v1788 = vunpack.c.l.b16 %v1752
        %v1789 = vunpack.c.h.b16 %v1752
        %v1790 = vunpack.c.l.b16 %v1753
        %v1791 = vunpack.c.h.b16 %v1753
        %v1792 = vunpack.c.l.b16 %v1754
        %v1793 = vunpack.c.h.b16 %v1754
        %v1794 = vunpack.c.l.b16 %v1755
        %v1795 = vunpack.c.h.b16 %v1755
        %v1796 = vunpack.c.l.b16 %v1756
        %v1797 = vunpack.c.h.b16 %v1756
        %v1798 = vunpack.c.l.b16 %v1757
        %v1799 = vunpack.c.h.b16 %v1757
        %v1800 = vunpack.c.l.b16 %v1758
        %v1801 = vunpack.c.h.b16 %v1758
        %v1802 = vunpack.c.l.b16 %v1759
        %v1803 = vunpack.c.h.b16 %v1759
        %v1804 = vunpack.c.l.b16 %v1760
        %v1805 = vunpack.c.h.b16 %v1760
        %v1806 = vunpack.c.l.b16 %v1761
        %v1807 = vunpack.c.h.b16 %v1761
        %v1808 = vunpack.c.l.b16 %v1762
        %v1809 = vunpack.c.h.b16 %v1762
        %v1810 = vunpack.c.l.b16 %v1763
        %v1811 = vunpack.c.h.b16 %v1763
        %v1812 = vpack.c.b16 %v1780, %v1780
        %v1813 = vpack.c.b16 %v1781, %v1781
        %v1814 = vpack.c.b16 %v1782, %v1782
        %v1815 = vpack.c.b16 %v1783, %v1783
        %v1816 = vpack.c.b16 %v1784, %v1784
        %v1817 = vpack.c.b16 %v1785, %v1785
        %v1818 = vpack.c.b16 %v1786, %v1786
        %v1819 = vpack.c.b16 %v1787, %v1787
        %v1820 = vpack.c.b16 %v1788, %v1788
        %v1821 = vpack.c.b16 %v1789, %v1789
        %v1822 = vpack.c.b16 %v1790, %v1790
        %v1823 = vpack.c.b16 %v1791, %v1791
        %v1824 = vpack.c.b16 %v1792, %v1792
        %v1825 = vpack.c.b16 %v1793, %v1793
        %v1826 = vpack.c.b16 %v1794, %v1794
        %v1827 = vpack.c.b16 %v1795, %v1795
        %v1828 = vpack.c.b16 %v1796, %v1796
        %v1829 = vpack.c.b16 %v1797, %v1797
        %v1830 = vpack.c.b16 %v1798, %v1798
        %v1831 = vpack.c.b16 %v1799, %v1799
        %v1832 = vpack.c.b16 %v1800, %v1800
        %v1833 = vpack.c.b16 %v1801, %v1801
        %v1834 = vpack.c.b16 %v1802, %v1802
        %v1835 = vpack.c.b16 %v1803, %v1803
        %v1836 = vpack.c.b16 %v1804, %v1804
        %v1837 = vpack.c.b16 %v1805, %v1805
        %v1838 = vpack.c.b16 %v1806, %v1806
        %v1839 = vpack.c.b16 %v1807, %v1807
        %v1840 = vpack.c.b16 %v1808, %v1808
        %v1841 = vpack.c.b16 %v1809, %v1809
        %v1842 = vpack.c.b16 %v1810, %v1810
        %v1843 = vpack.c.b16 %v1811, %v1811
        %1876 = vst [vmem:[%s296] sm:$0xf] %v1812
        %1877 = vst [vmem:[%s296 + $0x4] sm:$0xf] %v1813
        %1878 = vst [vmem:[%s296 + $0x8] sm:$0xf] %v1814
        %1879 = vst [vmem:[%s296 + $0xc] sm:$0xf] %v1815
        %1880 = vst [vmem:[%s296 + $0x10] sm:$0xf] %v1816
        %1881 = vst [vmem:[%s296 + $0x14] sm:$0xf] %v1817
        %1882 = vst [vmem:[%s296 + $0x18] sm:$0xf] %v1818
        %1883 = vst [vmem:[%s296 + $0x1c] sm:$0xf] %v1819
        %1884 = vst [vmem:[%s296 + $0x20] sm:$0xf] %v1820
        %1885 = vst [vmem:[%s296 + $0x24] sm:$0xf] %v1821
        %1886 = vst [vmem:[%s296 + $0x28] sm:$0xf] %v1822
        %1887 = vst [vmem:[%s296 + $0x2c] sm:$0xf] %v1823
        %1888 = vst [vmem:[%s296 + $0x30] sm:$0xf] %v1824
        %1889 = vst [vmem:[%s296 + $0x34] sm:$0xf] %v1825
        %1890 = vst [vmem:[%s296 + $0x38] sm:$0xf] %v1826
        %1891 = vst [vmem:[%s296 + $0x3c] sm:$0xf] %v1827
        %1892 = vst [vmem:[%s296 + $0x40] sm:$0xf] %v1828
        %1893 = vst [vmem:[%s296 + $0x44] sm:$0xf] %v1829
        %1894 = vst [vmem:[%s296 + $0x48] sm:$0xf] %v1830
        %1895 = vst [vmem:[%s296 + $0x4c] sm:$0xf] %v1831
        %1896 = vst [vmem:[%s296 + $0x50] sm:$0xf] %v1832
        %1897 = vst [vmem:[%s296 + $0x54] sm:$0xf] %v1833
        %1898 = vst [vmem:[%s296 + $0x58] sm:$0xf] %v1834
        %1899 = vst [vmem:[%s296 + $0x5c] sm:$0xf] %v1835
        %1900 = vst [vmem:[%s296 + $0x60] sm:$0xf] %v1836
        %1901 = vst [vmem:[%s296 + $0x64] sm:$0xf] %v1837
        %1902 = vst [vmem:[%s296 + $0x68] sm:$0xf] %v1838
        %1903 = vst [vmem:[%s296 + $0x6c] sm:$0xf] %v1839
        %1904 = vst [vmem:[%s296 + $0x70] sm:$0xf] %v1840
        %1905 = vst [vmem:[%s296 + $0x74] sm:$0xf] %v1841
        %1906 = vst [vmem:[%s296 + $0x78] sm:$0xf] %v1842
        %1907 = vst [vmem:[%s296 + $0x7c] sm:$0xf] %v1843
      $region44: #{graphsage_forward.5} parent=35 // pred_fallthru
        _
      %s1908 = smul.u32 32, %s19
      %p1909 = scmp.lt.s32.totalorder %s1908, 63
      %s1910 = scalar_select %p1909, %s1908, 63
      %s1911 = smul.addr %s1910, 4
      %s1912 = scalar_lea.vmem %s4, %s1911
      // Predicated region
      $region45: #{graphsage_forward.5} parent=35 // pred_check
        %p1913 = pneg %p151
      $region46: #{graphsage_forward.5} parent=35 // pred_check_branch
        %1915 = sbr.rel (%p1913) target = $region48
      $region47: #{graphsage_forward.5} parent=35 // pred_region
        %s1916 = smul.u32 32, %s19
      $region48: #{graphsage_forward.5} parent=35 // pred_fallthru
        _
    $region36: #{graphsage_forward.5} parent=5 // pred_fallthru
      _
    %p1917 = scmp.le.s32.totalorder 2, %s10
    // Predicated region
    $region49: #{graphsage_forward.5} parent=5 // pred_check
      %p1918 = pneg %p1917
    $region50: #{graphsage_forward.5} parent=5 // pred_check_branch
      %1920 = sbr.rel (%p1918) target = $region52
    $region51: #{graphsage_forward.5} parent=5 // pred_region
      %s1921 = ssub.s32 %s10, 2
      // Predicated region
      $region53: #{graphsage_forward.5} parent=51 // pred_check
        %p1922 = pneg %p157
      $region54: #{graphsage_forward.5} parent=51 // pred_check_branch
        %1924 = sbr.rel (%p1922) target = $region56
      $region55: #{graphsage_forward.5} parent=51 // pred_region
        %s1925 = smul.u32 32, %s21
        %p1926 = scmp.lt.s32.totalorder %s1925, 63
        %s1927 = scalar_select %p1926, %s1925, 63
        %s1928 = smul.addr %s1927, 4
        %s1929 = scalar_lea.vmem %s4, %s1928
      $region56: #{graphsage_forward.5} parent=51 // pred_fallthru
        _
    $region52: #{graphsage_forward.5} parent=5 // pred_fallthru
      _
  $region6: #{graphsage_forward.5} parent=0 // loop_footer
    %s14 = sadd.s32 1, %s10
  $region7: #{graphsage_forward.5} parent=0 // loop_footer_branch
    %9 = sbr.rel target = $region3
  $region8: #{graphsage_forward.5} parent=0 // loop_exit
    _

// kernel: graphsage_forward.7
$region0: #{graphsage_forward.7}
  #allocation0 [shape = 'u32[]', space=smem, size = 0x4, offset = 0x4, fixed_abs, tag = 'smem constant byte address 0x4 - core index']
  #allocation1 [shape = 'u32[144,128]{1,0:T(1,128)}', space=vmem, size = 0x12000, scoped, tag = 'internal scratch']
  #allocation2 [shape = 'f32[256,128]{1,0:T(8,128)}', space=vmem, size = 0x20000, scoped, tag = 'scratch operand']
  %s0 = inlined_call_operand.vmem [shape: bf16[512,512], index: 0, kind: input, shape index: {}]
  %s1 = inlined_call_operand.vmem [shape: bf16[512,128], index: 1, kind: input, shape index: {}]
  %s2 = inlined_call_operand.vmem [shape: f32[512,1], index: 2, kind: input, shape index: {}]
  %s3 = inlined_call_operand.vmem [shape: f32[512,128], index: 3, kind: input, shape index: {}]
  %s4 = inlined_call_operand.vmem [shape: f32[512,128], index: 4, kind: output, shape index: {0}]
  %s5 = inlined_call_operand.vmem [shape: f32[512,128], index: 5, kind: output, shape index: {1}]
  %6 = xla_tuple %s4, %s5
  %s7 = sld [smem:[#allocation0]]
  $region65: #{graphsage_forward.7} parent=0
    _
  %s9 = ssub.s32 1, %s7
  %s10 = scalar_select 0, %s9, %s7
  loop: start=0, step=1, limit=4
  $region2: #{graphsage_forward.7} parent=0 // loop_pre_header
    _
  $region3: #{graphsage_forward.7} parent=0 // loop_header
    %s12 = sphi 0, %s16
    %p13 = scmp.ge.s32.totalorder %s12, 4
    %s19 = sphi 0, %s31
    %s20 = sphi 0, %s27
    %s21 = sphi 0, %s19
    %s22 = sphi 0, %s20
    %s23 = sphi 0, %s21
    %s24 = sphi 0, %s22
    %s36 = sphi 0, %s38
    %s39 = sphi 0, %s36
    %s40 = sphi 0, %s39
    %s56 = sphi 0, %s40
    %s62 = sphi 0, %s64
    %s65 = sphi 0, %s62
    %s66 = sphi 0, %s65
    %s82 = sphi 0, %s66
    %s88 = sphi 0, %s90
    %s91 = sphi 0, %s88
    %s92 = sphi 0, %s91
    %s108 = sphi 0, %s92
    %s114 = sphi 0, %s116
    %s117 = sphi 0, %s114
    %s118 = sphi 0, %s117
    %s134 = sphi 0, %s118
    %s140 = sphi 0, %s142
    %s143 = sphi 0, %s140
    %s144 = sphi 0, %s143
    %s160 = sphi 0, %s144
    %s166 = sphi 0, %s168
    %s169 = sphi 0, %s166
    %s170 = sphi 0, %s169
    %s186 = sphi 0, %s170
  $region4: #{graphsage_forward.7} parent=0 // loop_header_branch
    %15 = sbr.rel (%p13) target = $region8
  $region5: #{graphsage_forward.7} parent=0 // loop_body
    %s17 = ssub.s32 %s12, 1
    %s18 = ssub.s32 %s12, 2
    %s25 = sadd.s32 1, %s20
    %p26 = scmp.ge.s32.totalorder %s25, 1
    %s27 = scalar_select %p26, 0, %s25
    %s28 = sadd.s32 1, %s19
    %s29 = scalar_select %p26, %s28, %s19
    %p30 = scmp.ge.s32.totalorder %s29, 2
    %s31 = scalar_select %p30, 0, %s29
    %s32 = ssub.s32 %s19, %s31
    %s33 = ssub.s32 %s20, %s27
    %s34 = sor.u32 %s32, %s33
    %p35 = scmp.eq.s32.totalorder %s34, 0
    %s37 = sadd.s32 %s36, 1
    %s38 = scalar_select %p35, %s36, %s37
    %p41 = pneg %p35
    %p42 = scmp.eq.s32.totalorder %s12, 1
    %p43 = por %p41, %p42
    %p44 = scmp.ne.s32.totalorder %s36, %s39
    %p45 = scmp.eq.s32.totalorder %s12, 0
    %p46 = por %p44, %p45
    %p47 = scmp.ne.s32.totalorder %s36, %s39
    %p48 = scmp.eq.s32.totalorder %s17, 1
    %p49 = por %p47, %p48
    %p50 = scmp.ne.s32.totalorder %s39, %s40
    %p51 = scmp.eq.s32.totalorder %s17, 0
    %p52 = por %p50, %p51
    %p53 = scmp.ne.s32.totalorder %s39, %s40
    %p54 = scmp.eq.s32.totalorder %s18, 1
    %p55 = por %p53, %p54
    %p57 = scmp.ne.s32.totalorder %s40, %s56
    %p58 = scmp.eq.s32.totalorder %s18, 0
    %p59 = por %p57, %p58
    %s60 = ssub.s32 %s20, %s27
    %p61 = scmp.eq.s32.totalorder %s60, 0
    %s63 = sadd.s32 %s62, 1
    %s64 = scalar_select %p61, %s62, %s63
    %p67 = pneg %p61
    %p68 = scmp.eq.s32.totalorder %s12, 1
    %p69 = por %p67, %p68
    %p70 = scmp.ne.s32.totalorder %s62, %s65
    %p71 = scmp.eq.s32.totalorder %s12, 0
    %p72 = por %p70, %p71
    %p73 = scmp.ne.s32.totalorder %s62, %s65
    %p74 = scmp.eq.s32.totalorder %s17, 1
    %p75 = por %p73, %p74
    %p76 = scmp.ne.s32.totalorder %s65, %s66
    %p77 = scmp.eq.s32.totalorder %s17, 0
    %p78 = por %p76, %p77
    %p79 = scmp.ne.s32.totalorder %s65, %s66
    %p80 = scmp.eq.s32.totalorder %s18, 1
    %p81 = por %p79, %p80
    %p83 = scmp.ne.s32.totalorder %s66, %s82
    %p84 = scmp.eq.s32.totalorder %s18, 0
    %p85 = por %p83, %p84
    %s86 = ssub.s32 %s19, %s31
    %p87 = scmp.eq.s32.totalorder %s86, 0
    %s89 = sadd.s32 %s88, 1
    %s90 = scalar_select %p87, %s88, %s89
    %p93 = pneg %p87
    %p94 = scmp.eq.s32.totalorder %s12, 1
    %p95 = por %p93, %p94
    %p96 = scmp.ne.s32.totalorder %s88, %s91
    %p97 = scmp.eq.s32.totalorder %s12, 0
    %p98 = por %p96, %p97
    %p99 = scmp.ne.s32.totalorder %s88, %s91
    %p100 = scmp.eq.s32.totalorder %s17, 1
    %p101 = por %p99, %p100
    %p102 = scmp.ne.s32.totalorder %s91, %s92
    %p103 = scmp.eq.s32.totalorder %s17, 0
    %p104 = por %p102, %p103
    %p105 = scmp.ne.s32.totalorder %s91, %s92
    %p106 = scmp.eq.s32.totalorder %s18, 1
    %p107 = por %p105, %p106
    %p109 = scmp.ne.s32.totalorder %s92, %s108
    %p110 = scmp.eq.s32.totalorder %s18, 0
    %p111 = por %p109, %p110
    %s112 = ssub.s32 %s19, %s31
    %p113 = scmp.eq.s32.totalorder %s112, 0
    %s115 = sadd.s32 %s114, 1
    %s116 = scalar_select %p113, %s114, %s115
    %p119 = pneg %p113
    %p120 = scmp.eq.s32.totalorder %s12, 1
    %p121 = por %p119, %p120
    %p122 = scmp.ne.s32.totalorder %s114, %s117
    %p123 = scmp.eq.s32.totalorder %s12, 0
    %p124 = por %p122, %p123
    %p125 = scmp.ne.s32.totalorder %s114, %s117
    %p126 = scmp.eq.s32.totalorder %s17, 1
    %p127 = por %p125, %p126
    %p128 = scmp.ne.s32.totalorder %s117, %s118
    %p129 = scmp.eq.s32.totalorder %s17, 0
    %p130 = por %p128, %p129
    %p131 = scmp.ne.s32.totalorder %s117, %s118
    %p132 = scmp.eq.s32.totalorder %s18, 1
    %p133 = por %p131, %p132
    %p135 = scmp.ne.s32.totalorder %s118, %s134
    %p136 = scmp.eq.s32.totalorder %s18, 0
    %p137 = por %p135, %p136
    %s138 = ssub.s32 %s19, %s31
    %p139 = scmp.eq.s32.totalorder %s138, 0
    %s141 = sadd.s32 %s140, 1
    %s142 = scalar_select %p139, %s140, %s141
    %p145 = pneg %p139
    %p146 = scmp.eq.s32.totalorder %s12, 1
    %p147 = por %p145, %p146
    %p148 = scmp.ne.s32.totalorder %s140, %s143
    %p149 = scmp.eq.s32.totalorder %s12, 0
    %p150 = por %p148, %p149
    %p151 = scmp.ne.s32.totalorder %s140, %s143
    %p152 = scmp.eq.s32.totalorder %s17, 1
    %p153 = por %p151, %p152
    %p154 = scmp.ne.s32.totalorder %s143, %s144
    %p155 = scmp.eq.s32.totalorder %s17, 0
    %p156 = por %p154, %p155
    %p157 = scmp.ne.s32.totalorder %s143, %s144
    %p158 = scmp.eq.s32.totalorder %s18, 1
    %p159 = por %p157, %p158
    %p161 = scmp.ne.s32.totalorder %s144, %s160
    %p162 = scmp.eq.s32.totalorder %s18, 0
    %p163 = por %p161, %p162
    %s164 = ssub.s32 %s19, %s31
    %p165 = scmp.eq.s32.totalorder %s164, 0
    %s167 = sadd.s32 %s166, 1
    %s168 = scalar_select %p165, %s166, %s167
    %p171 = pneg %p165
    %p172 = scmp.eq.s32.totalorder %s12, 1
    %p173 = por %p171, %p172
    %p174 = scmp.ne.s32.totalorder %s166, %s169
    %p175 = scmp.eq.s32.totalorder %s12, 0
    %p176 = por %p174, %p175
    %p177 = scmp.ne.s32.totalorder %s166, %s169
    %p178 = scmp.eq.s32.totalorder %s17, 1
    %p179 = por %p177, %p178
    %p180 = scmp.ne.s32.totalorder %s169, %s170
    %p181 = scmp.eq.s32.totalorder %s17, 0
    %p182 = por %p180, %p181
    %p183 = scmp.ne.s32.totalorder %s169, %s170
    %p184 = scmp.eq.s32.totalorder %s18, 1
    %p185 = por %p183, %p184
    %p187 = scmp.ne.s32.totalorder %s170, %s186
    %p188 = scmp.eq.s32.totalorder %s18, 0
    %p189 = por %p187, %p188
    %p190 = scmp.le.s32.totalorder 1, %s12
    %p191 = scmp.lt.s32.totalorder %s12, 3
    %p192 = pnand %p190, %p191
    %p193 = pneg %p192
    // Predicated region
    $region9: #{graphsage_forward.7} parent=5 // pred_check
      _
    $region10: #{graphsage_forward.7} parent=5 // pred_check_branch
      %195 = sbr.rel (%p192) target = $region12
    $region11: #{graphsage_forward.7} parent=5 // pred_region
      %s196 = ssub.s32 %s12, 1
      // Predicated region
      $region13: #{graphsage_forward.7} parent=11 // pred_check
        %p197 = pneg %p78
      $region14: #{graphsage_forward.7} parent=11 // pred_check_branch
        %199 = sbr.rel (%p197) target = $region16
      $region15: #{graphsage_forward.7} parent=11 // pred_region
        %s200 = smul.u32 64, %s22
        %p201 = scmp.lt.s32.totalorder %s200, 63
        %s202 = scalar_select %p201, %s200, 63
        %s203 = smul.addr %s202, 4
        %s204 = scalar_lea.vmem %s1, %s203
        %s205 = smul.u32 64, %s22
      $region16: #{graphsage_forward.7} parent=11 // pred_fallthru
        _
    $region12: #{graphsage_forward.7} parent=5 // pred_fallthru
      _
    %p206 = scmp.lt.s32.totalorder %s12, 2
    // Predicated region
    $region17: #{graphsage_forward.7} parent=5 // pred_check
      %p207 = pneg %p206
    $region18: #{graphsage_forward.7} parent=5 // pred_check_branch
      %209 = sbr.rel (%p207) target = $region20
    $region19: #{graphsage_forward.7} parent=5 // pred_region
      // Predicated region
      $region21: #{graphsage_forward.7} parent=19 // pred_check
        %p210 = pneg %p46
      $region22: #{graphsage_forward.7} parent=19 // pred_check_branch
        %212 = sbr.rel (%p210) target = $region24
      $region23: #{graphsage_forward.7} parent=19 // pred_region
        %s213 = smul.u32 32, %s19
        %s214 = smul.u32 4, %s20
        %p215 = scmp.lt.s32.totalorder %s213, 63
        %s216 = scalar_select %p215, %s213, 63
        %p217 = scmp.lt.s32.totalorder %s214, 3
        %s218 = scalar_select %p217, %s214, 3
        %s219 = smul.addr %s216, 4
        %s220 = sadd.s32 %s218, %s219
        %s221 = smul.addr %s220, 4
        %s222 = scalar_lea.vmem %s0, %s221
        %s223 = smul.u32 32, %s19
        %s224 = smul.u32 4, %s20
      $region24: #{graphsage_forward.7} parent=19 // pred_fallthru
        _
      // Predicated region
      $region25: #{graphsage_forward.7} parent=19 // pred_check
        %p225 = pneg %p98
      $region26: #{graphsage_forward.7} parent=19 // pred_check_branch
        %227 = sbr.rel (%p225) target = $region28
      $region27: #{graphsage_forward.7} parent=19 // pred_region
        %s228 = smul.u32 32, %s19
        %p229 = scmp.lt.s32.totalorder %s228, 63
        %s230 = scalar_select %p229, %s228, 63
        %s231 = smul.addr %s230, 8
        %s232 = scalar_lea.vmem %s2, %s231
        %s233 = smul.u32 32, %s19
      $region28: #{graphsage_forward.7} parent=19 // pred_fallthru
        _
      // Predicated region
      $region29: #{graphsage_forward.7} parent=19 // pred_check
        %p234 = pneg %p124
      $region30: #{graphsage_forward.7} parent=19 // pred_check_branch
        %236 = sbr.rel (%p234) target = $region32
      $region31: #{graphsage_forward.7} parent=19 // pred_region
        %s237 = smul.u32 32, %s19
        %p238 = scmp.lt.s32.totalorder %s237, 63
        %s239 = scalar_select %p238, %s237, 63
        %s240 = smul.addr %s239, 8
        %s241 = scalar_lea.vmem %s3, %s240
        %s242 = smul.u32 32, %s19
      $region32: #{graphsage_forward.7} parent=19 // pred_fallthru
        _
    $region20: #{graphsage_forward.7} parent=5 // pred_fallthru
      _
    %p243 = scmp.le.s32.totalorder 1, %s12
    %p244 = scmp.lt.s32.totalorder %s12, 3
    %p245 = pnand %p243, %p244
    %p246 = pneg %p245
    // Predicated region
    $region33: #{graphsage_forward.7} parent=5 // pred_check
      _
    $region34: #{graphsage_forward.7} parent=5 // pred_check_branch
      %248 = sbr.rel (%p245) target = $region36
    $region35: #{graphsage_forward.7} parent=5 // pred_region
      %s249 = ssub.s32 %s12, 1
      %s250 = smul.u32 32, %s21
      %s251 = smul.u32 4, %s22
      %p252 = scmp.lt.s32.totalorder %s250, 63
      %s253 = scalar_select %p252, %s250, 63
      %p254 = scmp.lt.s32.totalorder %s251, 3
      %s255 = scalar_select %p254, %s251, 3
      %s256 = smul.addr %s253, 4
      %s257 = sadd.s32 %s255, %s256
      %s258 = smul.addr %s257, 4
      %s259 = scalar_lea.vmem %s0, %s258
      %p260 = pneg %p52
      %p261 = pneg %p49
      %s262 = smul.u32 64, %s22
      %p263 = scmp.lt.s32.totalorder %s262, 63
      %s264 = scalar_select %p263, %s262, 63
      %s265 = smul.addr %s264, 4
      %s266 = scalar_lea.vmem %s1, %s265
      %p267 = pneg %p78
      %p268 = pneg %p75
      %s269 = smul.u32 32, %s21
      %p270 = scmp.lt.s32.totalorder %s269, 63
      %s271 = scalar_select %p270, %s269, 63
      %s272 = smul.addr %s271, 8
      %s273 = scalar_lea.vmem %s2, %s272
      %p274 = pneg %p104
      %p275 = pneg %p101
      %s276 = smul.u32 32, %s21
      %p277 = scmp.lt.s32.totalorder %s276, 63
      %s278 = scalar_select %p277, %s276, 63
      %s279 = smul.addr %s278, 8
      %s280 = scalar_lea.vmem %s3, %s279
      %p281 = pneg %p130
      %p282 = pneg %p127
      %p283 = pneg %p156
      %p284 = pneg %p153
      %s285 = smul.u32 32, %s21
      %p286 = scmp.lt.s32.totalorder %s285, 63
      %s287 = scalar_select %p286, %s285, 63
      %s288 = smul.addr %s287, 8
      %s289 = scalar_lea.vmem %s4, %s288
      %p290 = pneg %p182
      %p291 = pneg %p179
      %s292 = smul.u32 32, %s21
      %p293 = scmp.lt.s32.totalorder %s292, 63
      %s294 = scalar_select %p293, %s292, 63
      %s295 = smul.addr %s294, 8
      %s296 = scalar_lea.vmem %s5, %s295
      %s297 = smul.u32 32, %s21
      %s298 = smul.u32 4, %s22
      %p299 = scmp.lt.s32.totalorder %s297, 63
      %s300 = scalar_select %p299, %s297, 63
      %p301 = scmp.lt.s32.totalorder %s298, 3
      %s302 = scalar_select %p301, %s298, 3
      %s303 = smul.addr %s300, 4
      %s304 = sadd.s32 %s302, %s303
      %s305 = smul.addr %s304, 4
      %s306 = scalar_lea.vmem %s0, %s305
      %s307 = smul.u32 32, %s21
      %s308 = smul.u32 4, %s22
      %s309 = smul.u32 64, %s22
      %p310 = scmp.lt.s32.totalorder %s309, 63
      %s311 = scalar_select %p310, %s309, 63
      %s312 = smul.addr %s311, 4
      %s313 = scalar_lea.vmem %s1, %s312
      %s314 = smul.u32 64, %s22
      %s315 = smul.u32 32, %s21
      %p316 = scmp.lt.s32.totalorder %s315, 63
      %s317 = scalar_select %p316, %s315, 63
      %s318 = smul.addr %s317, 8
      %s319 = scalar_lea.vmem %s2, %s318
      %s320 = smul.u32 32, %s21
      %s321 = smul.u32 32, %s21
      %p322 = scmp.lt.s32.totalorder %s321, 63
      %s323 = scalar_select %p322, %s321, 63
      %s324 = smul.addr %s323, 8
      %s325 = scalar_lea.vmem %s3, %s324
      %s326 = smul.u32 32, %s21
      %s327 = smul.u32 32, %s21
      %p328 = scmp.lt.s32.totalorder %s327, 63
      %s329 = scalar_select %p328, %s327, 63
      %s330 = smul.addr %s329, 8
      %s331 = scalar_lea.vmem %s4, %s330
      %s332 = smul.u32 32, %s21
      %s333 = smul.u32 32, %s21
      %p334 = scmp.lt.s32.totalorder %s333, 63
      %s335 = scalar_select %p334, %s333, 63
      %s336 = smul.addr %s335, 8
      %s337 = scalar_lea.vmem %s5, %s336
      %s338 = smul.u32 32, %s21
      %p340 = scmp.eq.s32.totalorder %s22, 0
      // Predicated region
      $region37: #{graphsage_forward.7} parent=35 // pred_check
        %p341 = pneg %p340
      $region38: #{graphsage_forward.7} parent=35 // pred_check_branch
        %343 = sbr.rel (%p341) target = $region40
      $region39: #{graphsage_forward.7} parent=35 // pred_region
        %344 = vst [vmem:[#allocation2] sm:$0xff] 0.0
        %345 = vst [vmem:[#allocation2 + $0x8] sm:$0xff] 0.0
        %346 = vst [vmem:[#allocation2 + $0x10] sm:$0xff] 0.0
        %347 = vst [vmem:[#allocation2 + $0x18] sm:$0xff] 0.0
        %348 = vst [vmem:[#allocation2 + $0x20] sm:$0xff] 0.0
        %349 = vst [vmem:[#allocation2 + $0x28] sm:$0xff] 0.0
        %350 = vst [vmem:[#allocation2 + $0x30] sm:$0xff] 0.0
        %351 = vst [vmem:[#allocation2 + $0x38] sm:$0xff] 0.0
        %352 = vst [vmem:[#allocation2 + $0x40] sm:$0xff] 0.0
        %353 = vst [vmem:[#allocation2 + $0x48] sm:$0xff] 0.0
        %354 = vst [vmem:[#allocation2 + $0x50] sm:$0xff] 0.0
        %355 = vst [vmem:[#allocation2 + $0x58] sm:$0xff] 0.0
        %356 = vst [vmem:[#allocation2 + $0x60] sm:$0xff] 0.0
        %357 = vst [vmem:[#allocation2 + $0x68] sm:$0xff] 0.0
        %358 = vst [vmem:[#allocation2 + $0x70] sm:$0xff] 0.0
        %359 = vst [vmem:[#allocation2 + $0x78] sm:$0xff] 0.0
        %360 = vst [vmem:[#allocation2 + $0x80] sm:$0xff] 0.0
        %361 = vst [vmem:[#allocation2 + $0x88] sm:$0xff] 0.0
        %362 = vst [vmem:[#allocation2 + $0x90] sm:$0xff] 0.0
        %363 = vst [vmem:[#allocation2 + $0x98] sm:$0xff] 0.0
        %364 = vst [vmem:[#allocation2 + $0xa0] sm:$0xff] 0.0
        %365 = vst [vmem:[#allocation2 + $0xa8] sm:$0xff] 0.0
        %366 = vst [vmem:[#allocation2 + $0xb0] sm:$0xff] 0.0
        %367 = vst [vmem:[#allocation2 + $0xb8] sm:$0xff] 0.0
        %368 = vst [vmem:[#allocation2 + $0xc0] sm:$0xff] 0.0
        %369 = vst [vmem:[#allocation2 + $0xc8] sm:$0xff] 0.0
        %370 = vst [vmem:[#allocation2 + $0xd0] sm:$0xff] 0.0
        %371 = vst [vmem:[#allocation2 + $0xd8] sm:$0xff] 0.0
        %372 = vst [vmem:[#allocation2 + $0xe0] sm:$0xff] 0.0
        %373 = vst [vmem:[#allocation2 + $0xe8] sm:$0xff] 0.0
        %374 = vst [vmem:[#allocation2 + $0xf0] sm:$0xff] 0.0
        %375 = vst [vmem:[#allocation2 + $0xf8] sm:$0xff] 0.0
      $region40: #{graphsage_forward.7} parent=35 // pred_fallthru
        _
      %v376 = vld [vmem:[#allocation2] sm:$0xff]
      %v377 = vld [vmem:[#allocation2 + $0x8] sm:$0xff]
      %v378 = vld [vmem:[#allocation2 + $0x10] sm:$0xff]
      %v379 = vld [vmem:[#allocation2 + $0x18] sm:$0xff]
      %v380 = vld [vmem:[#allocation2 + $0x20] sm:$0xff]
      %v381 = vld [vmem:[#allocation2 + $0x28] sm:$0xff]
      %v382 = vld [vmem:[#allocation2 + $0x30] sm:$0xff]
      %v383 = vld [vmem:[#allocation2 + $0x38] sm:$0xff]
      %v384 = vld [vmem:[#allocation2 + $0x40] sm:$0xff]
      %v385 = vld [vmem:[#allocation2 + $0x48] sm:$0xff]
      %v386 = vld [vmem:[#allocation2 + $0x50] sm:$0xff]
      %v387 = vld [vmem:[#allocation2 + $0x58] sm:$0xff]
      %v388 = vld [vmem:[#allocation2 + $0x60] sm:$0xff]
      %v389 = vld [vmem:[#allocation2 + $0x68] sm:$0xff]
      %v390 = vld [vmem:[#allocation2 + $0x70] sm:$0xff]
      %v391 = vld [vmem:[#allocation2 + $0x78] sm:$0xff]
      %v392 = vld [vmem:[#allocation2 + $0x80] sm:$0xff]
      %v393 = vld [vmem:[#allocation2 + $0x88] sm:$0xff]
      %v394 = vld [vmem:[#allocation2 + $0x90] sm:$0xff]
      %v395 = vld [vmem:[#allocation2 + $0x98] sm:$0xff]
      %v396 = vld [vmem:[#allocation2 + $0xa0] sm:$0xff]
      %v397 = vld [vmem:[#allocation2 + $0xa8] sm:$0xff]
      %v398 = vld [vmem:[#allocation2 + $0xb0] sm:$0xff]
      %v399 = vld [vmem:[#allocation2 + $0xb8] sm:$0xff]
      %v400 = vld [vmem:[#allocation2 + $0xc0] sm:$0xff]
      %v401 = vld [vmem:[#allocation2 + $0xc8] sm:$0xff]
      %v402 = vld [vmem:[#allocation2 + $0xd0] sm:$0xff]
      %v403 = vld [vmem:[#allocation2 + $0xd8] sm:$0xff]
      %v404 = vld [vmem:[#allocation2 + $0xe0] sm:$0xff]
      %v405 = vld [vmem:[#allocation2 + $0xe8] sm:$0xff]
      %v406 = vld [vmem:[#allocation2 + $0xf0] sm:$0xff]
      %v407 = vld [vmem:[#allocation2 + $0xf8] sm:$0xff]
      %v408 = vld [vmem:[%s306] sm:$0xff]
      %v409 = vld [vmem:[%s306 + $0x8] sm:$0xff]
      %v410 = vld [vmem:[%s306 + $0x10] sm:$0xff]
      %v411 = vld [vmem:[%s306 + $0x18] sm:$0xff]
      %v412 = vld [vmem:[%s306 + $0x20] sm:$0xff]
      %v413 = vld [vmem:[%s306 + $0x28] sm:$0xff]
      %v414 = vld [vmem:[%s306 + $0x30] sm:$0xff]
      %v415 = vld [vmem:[%s306 + $0x38] sm:$0xff]
      %v416 = vld [vmem:[%s306 + $0x40] sm:$0xff]
      %v417 = vld [vmem:[%s306 + $0x48] sm:$0xff]
      %v418 = vld [vmem:[%s306 + $0x50] sm:$0xff]
      %v419 = vld [vmem:[%s306 + $0x58] sm:$0xff]
      %v420 = vld [vmem:[%s306 + $0x60] sm:$0xff]
      %v421 = vld [vmem:[%s306 + $0x68] sm:$0xff]
      %v422 = vld [vmem:[%s306 + $0x70] sm:$0xff]
      %v423 = vld [vmem:[%s306 + $0x78] sm:$0xff]
      %v424 = vld [vmem:[%s306 + $0x80] sm:$0xff]
      %v425 = vld [vmem:[%s306 + $0x88] sm:$0xff]
      %v426 = vld [vmem:[%s306 + $0x90] sm:$0xff]
      %v427 = vld [vmem:[%s306 + $0x98] sm:$0xff]
      %v428 = vld [vmem:[%s306 + $0xa0] sm:$0xff]
      %v429 = vld [vmem:[%s306 + $0xa8] sm:$0xff]
      %v430 = vld [vmem:[%s306 + $0xb0] sm:$0xff]
      %v431 = vld [vmem:[%s306 + $0xb8] sm:$0xff]
      %v432 = vld [vmem:[%s306 + $0xc0] sm:$0xff]
      %v433 = vld [vmem:[%s306 + $0xc8] sm:$0xff]
      %v434 = vld [vmem:[%s306 + $0xd0] sm:$0xff]
      %v435 = vld [vmem:[%s306 + $0xd8] sm:$0xff]
      %v436 = vld [vmem:[%s306 + $0xe0] sm:$0xff]
      %v437 = vld [vmem:[%s306 + $0xe8] sm:$0xff]
      %v438 = vld [vmem:[%s306 + $0xf0] sm:$0xff]
      %v439 = vld [vmem:[%s306 + $0xf8] sm:$0xff]
      %v440 = vld [vmem:[%s306 + $0x100] sm:$0xff]
      %v441 = vld [vmem:[%s306 + $0x108] sm:$0xff]
      %v442 = vld [vmem:[%s306 + $0x110] sm:$0xff]
      %v443 = vld [vmem:[%s306 + $0x118] sm:$0xff]
      %v444 = vld [vmem:[%s306 + $0x120] sm:$0xff]
      %v445 = vld [vmem:[%s306 + $0x128] sm:$0xff]
      %v446 = vld [vmem:[%s306 + $0x130] sm:$0xff]
      %v447 = vld [vmem:[%s306 + $0x138] sm:$0xff]
      %v448 = vld [vmem:[%s306 + $0x140] sm:$0xff]
      %v449 = vld [vmem:[%s306 + $0x148] sm:$0xff]
      %v450 = vld [vmem:[%s306 + $0x150] sm:$0xff]
      %v451 = vld [vmem:[%s306 + $0x158] sm:$0xff]
      %v452 = vld [vmem:[%s306 + $0x160] sm:$0xff]
      %v453 = vld [vmem:[%s306 + $0x168] sm:$0xff]
      %v454 = vld [vmem:[%s306 + $0x170] sm:$0xff]
      %v455 = vld [vmem:[%s306 + $0x178] sm:$0xff]
      %v456 = vld [vmem:[%s306 + $0x180] sm:$0xff]
      %v457 = vld [vmem:[%s306 + $0x188] sm:$0xff]
      %v458 = vld [vmem:[%s306 + $0x190] sm:$0xff]
      %v459 = vld [vmem:[%s306 + $0x198] sm:$0xff]
      %v460 = vld [vmem:[%s306 + $0x1a0] sm:$0xff]
      %v461 = vld [vmem:[%s306 + $0x1a8] sm:$0xff]
      %v462 = vld [vmem:[%s306 + $0x1b0] sm:$0xff]
      %v463 = vld [vmem:[%s306 + $0x1b8] sm:$0xff]
      %v464 = vld [vmem:[%s306 + $0x1c0] sm:$0xff]
      %v465 = vld [vmem:[%s306 + $0x1c8] sm:$0xff]
      %v466 = vld [vmem:[%s306 + $0x1d0] sm:$0xff]
      %v467 = vld [vmem:[%s306 + $0x1d8] sm:$0xff]
      %v468 = vld [vmem:[%s306 + $0x1e0] sm:$0xff]
      %v469 = vld [vmem:[%s306 + $0x1e8] sm:$0xff]
      %v470 = vld [vmem:[%s306 + $0x1f0] sm:$0xff]
      %v471 = vld [vmem:[%s306 + $0x1f8] sm:$0xff]
      %v472 = vld [vmem:[%s313] sm:$0xf]
      %v473 = vld [vmem:[%s313 + $0x4] sm:$0xf]
      %v474 = vld [vmem:[%s313 + $0x8] sm:$0xf]
      %v475 = vld [vmem:[%s313 + $0xc] sm:$0xf]
      %v476 = vld [vmem:[%s313 + $0x10] sm:$0xf]
      %v477 = vld [vmem:[%s313 + $0x14] sm:$0xf]
      %v478 = vld [vmem:[%s313 + $0x18] sm:$0xf]
      %v479 = vld [vmem:[%s313 + $0x1c] sm:$0xf]
      %v480 = vld [vmem:[%s313 + $0x20] sm:$0xf]
      %v481 = vld [vmem:[%s313 + $0x24] sm:$0xf]
      %v482 = vld [vmem:[%s313 + $0x28] sm:$0xf]
      %v483 = vld [vmem:[%s313 + $0x2c] sm:$0xf]
      %v484 = vld [vmem:[%s313 + $0x30] sm:$0xf]
      %v485 = vld [vmem:[%s313 + $0x34] sm:$0xf]
      %v486 = vld [vmem:[%s313 + $0x38] sm:$0xf]
      %v487 = vld [vmem:[%s313 + $0x3c] sm:$0xf]
      %v488 = vld [vmem:[%s313 + $0x40] sm:$0xf]
      %v489 = vld [vmem:[%s313 + $0x44] sm:$0xf]
      %v490 = vld [vmem:[%s313 + $0x48] sm:$0xf]
      %v491 = vld [vmem:[%s313 + $0x4c] sm:$0xf]
      %v492 = vld [vmem:[%s313 + $0x50] sm:$0xf]
      %v493 = vld [vmem:[%s313 + $0x54] sm:$0xf]
      %v494 = vld [vmem:[%s313 + $0x58] sm:$0xf]
      %v495 = vld [vmem:[%s313 + $0x5c] sm:$0xf]
      %v496 = vld [vmem:[%s313 + $0x60] sm:$0xf]
      %v497 = vld [vmem:[%s313 + $0x64] sm:$0xf]
      %v498 = vld [vmem:[%s313 + $0x68] sm:$0xf]
      %v499 = vld [vmem:[%s313 + $0x6c] sm:$0xf]
      %v500 = vld [vmem:[%s313 + $0x70] sm:$0xf]
      %v501 = vld [vmem:[%s313 + $0x74] sm:$0xf]
      %v502 = vld [vmem:[%s313 + $0x78] sm:$0xf]
      %v503 = vld [vmem:[%s313 + $0x7c] sm:$0xf]
      %v504 = vld [vmem:[%s313 + $0x80] sm:$0xf]
      %v505 = vld [vmem:[%s313 + $0x84] sm:$0xf]
      %v506 = vld [vmem:[%s313 + $0x88] sm:$0xf]
      %v507 = vld [vmem:[%s313 + $0x8c] sm:$0xf]
      %v508 = vld [vmem:[%s313 + $0x90] sm:$0xf]
      %v509 = vld [vmem:[%s313 + $0x94] sm:$0xf]
      %v510 = vld [vmem:[%s313 + $0x98] sm:$0xf]
      %v511 = vld [vmem:[%s313 + $0x9c] sm:$0xf]
      %v512 = vld [vmem:[%s313 + $0xa0] sm:$0xf]
      %v513 = vld [vmem:[%s313 + $0xa4] sm:$0xf]
      %v514 = vld [vmem:[%s313 + $0xa8] sm:$0xf]
      %v515 = vld [vmem:[%s313 + $0xac] sm:$0xf]
      %v516 = vld [vmem:[%s313 + $0xb0] sm:$0xf]
      %v517 = vld [vmem:[%s313 + $0xb4] sm:$0xf]
      %v518 = vld [vmem:[%s313 + $0xb8] sm:$0xf]
      %v519 = vld [vmem:[%s313 + $0xbc] sm:$0xf]
      %v520 = vld [vmem:[%s313 + $0xc0] sm:$0xf]
      %v521 = vld [vmem:[%s313 + $0xc4] sm:$0xf]
      %v522 = vld [vmem:[%s313 + $0xc8] sm:$0xf]
      %v523 = vld [vmem:[%s313 + $0xcc] sm:$0xf]
      %v524 = vld [vmem:[%s313 + $0xd0] sm:$0xf]
      %v525 = vld [vmem:[%s313 + $0xd4] sm:$0xf]
      %v526 = vld [vmem:[%s313 + $0xd8] sm:$0xf]
      %v527 = vld [vmem:[%s313 + $0xdc] sm:$0xf]
      %v528 = vld [vmem:[%s313 + $0xe0] sm:$0xf]
      %v529 = vld [vmem:[%s313 + $0xe4] sm:$0xf]
      %v530 = vld [vmem:[%s313 + $0xe8] sm:$0xf]
      %v531 = vld [vmem:[%s313 + $0xec] sm:$0xf]
      %v532 = vld [vmem:[%s313 + $0xf0] sm:$0xf]
      %v533 = vld [vmem:[%s313 + $0xf4] sm:$0xf]
      %v534 = vld [vmem:[%s313 + $0xf8] sm:$0xf]
      %v535 = vld [vmem:[%s313 + $0xfc] sm:$0xf]
      %v600 = vunpack.c.l.b16 %v408
      %v601 = vunpack.c.h.b16 %v408
      %v602 = vunpack.c.l.b16 %v409
      %v603 = vunpack.c.h.b16 %v409
      %v604 = vunpack.c.l.b16 %v410
      %v605 = vunpack.c.h.b16 %v410
      %v606 = vunpack.c.l.b16 %v411
      %v607 = vunpack.c.h.b16 %v411
      %v608 = vunpack.c.l.b16 %v412
      %v609 = vunpack.c.h.b16 %v412
      %v610 = vunpack.c.l.b16 %v413
      %v611 = vunpack.c.h.b16 %v413
      %v612 = vunpack.c.l.b16 %v414
      %v613 = vunpack.c.h.b16 %v414
      %v614 = vunpack.c.l.b16 %v415
      %v615 = vunpack.c.h.b16 %v415
      %v616 = vunpack.c.l.b16 %v416
      %v617 = vunpack.c.h.b16 %v416
      %v618 = vunpack.c.l.b16 %v417
      %v619 = vunpack.c.h.b16 %v417
      %v620 = vunpack.c.l.b16 %v418
      %v621 = vunpack.c.h.b16 %v418
      %v622 = vunpack.c.l.b16 %v419
      %v623 = vunpack.c.h.b16 %v419
      %v624 = vunpack.c.l.b16 %v420
      %v625 = vunpack.c.h.b16 %v420
      %v626 = vunpack.c.l.b16 %v421
      %v627 = vunpack.c.h.b16 %v421
      %v628 = vunpack.c.l.b16 %v422
      %v629 = vunpack.c.h.b16 %v422
      %v630 = vunpack.c.l.b16 %v423
      %v631 = vunpack.c.h.b16 %v423
      %v632 = vunpack.c.l.b16 %v424
      %v633 = vunpack.c.h.b16 %v424
      %v634 = vunpack.c.l.b16 %v425
      %v635 = vunpack.c.h.b16 %v425
      %v636 = vunpack.c.l.b16 %v426
      %v637 = vunpack.c.h.b16 %v426
      %v638 = vunpack.c.l.b16 %v427
      %v639 = vunpack.c.h.b16 %v427
      %v640 = vunpack.c.l.b16 %v428
      %v641 = vunpack.c.h.b16 %v428
      %v642 = vunpack.c.l.b16 %v429
      %v643 = vunpack.c.h.b16 %v429
      %v644 = vunpack.c.l.b16 %v430
      %v645 = vunpack.c.h.b16 %v430
      %v646 = vunpack.c.l.b16 %v431
      %v647 = vunpack.c.h.b16 %v431
      %v648 = vunpack.c.l.b16 %v432
      %v649 = vunpack.c.h.b16 %v432
      %v650 = vunpack.c.l.b16 %v433
      %v651 = vunpack.c.h.b16 %v433
      %v652 = vunpack.c.l.b16 %v434
      %v653 = vunpack.c.h.b16 %v434
      %v654 = vunpack.c.l.b16 %v435
      %v655 = vunpack.c.h.b16 %v435
      %v656 = vunpack.c.l.b16 %v436
      %v657 = vunpack.c.h.b16 %v436
      %v658 = vunpack.c.l.b16 %v437
      %v659 = vunpack.c.h.b16 %v437
      %v660 = vunpack.c.l.b16 %v438
      %v661 = vunpack.c.h.b16 %v438
      %v662 = vunpack.c.l.b16 %v439
      %v663 = vunpack.c.h.b16 %v439
      %v664 = vunpack.c.l.b16 %v440
      %v665 = vunpack.c.h.b16 %v440
      %v666 = vunpack.c.l.b16 %v441
      %v667 = vunpack.c.h.b16 %v441
      %v668 = vunpack.c.l.b16 %v442
      %v669 = vunpack.c.h.b16 %v442
      %v670 = vunpack.c.l.b16 %v443
      %v671 = vunpack.c.h.b16 %v443
      %v672 = vunpack.c.l.b16 %v444
      %v673 = vunpack.c.h.b16 %v444
      %v674 = vunpack.c.l.b16 %v445
      %v675 = vunpack.c.h.b16 %v445
      %v676 = vunpack.c.l.b16 %v446
      %v677 = vunpack.c.h.b16 %v446
      %v678 = vunpack.c.l.b16 %v447
      %v679 = vunpack.c.h.b16 %v447
      %v680 = vunpack.c.l.b16 %v448
      %v681 = vunpack.c.h.b16 %v448
      %v682 = vunpack.c.l.b16 %v449
      %v683 = vunpack.c.h.b16 %v449
      %v684 = vunpack.c.l.b16 %v450
      %v685 = vunpack.c.h.b16 %v450
      %v686 = vunpack.c.l.b16 %v451
      %v687 = vunpack.c.h.b16 %v451
      %v688 = vunpack.c.l.b16 %v452
      %v689 = vunpack.c.h.b16 %v452
      %v690 = vunpack.c.l.b16 %v453
      %v691 = vunpack.c.h.b16 %v453
      %v692 = vunpack.c.l.b16 %v454
      %v693 = vunpack.c.h.b16 %v454
      %v694 = vunpack.c.l.b16 %v455
      %v695 = vunpack.c.h.b16 %v455
      %v696 = vunpack.c.l.b16 %v456
      %v697 = vunpack.c.h.b16 %v456
      %v698 = vunpack.c.l.b16 %v457
      %v699 = vunpack.c.h.b16 %v457
      %v700 = vunpack.c.l.b16 %v458
      %v701 = vunpack.c.h.b16 %v458
      %v702 = vunpack.c.l.b16 %v459
      %v703 = vunpack.c.h.b16 %v459
      %v704 = vunpack.c.l.b16 %v460
      %v705 = vunpack.c.h.b16 %v460
      %v706 = vunpack.c.l.b16 %v461
      %v707 = vunpack.c.h.b16 %v461
      %v708 = vunpack.c.l.b16 %v462
      %v709 = vunpack.c.h.b16 %v462
      %v710 = vunpack.c.l.b16 %v463
      %v711 = vunpack.c.h.b16 %v463
      %v712 = vunpack.c.l.b16 %v464
      %v713 = vunpack.c.h.b16 %v464
      %v714 = vunpack.c.l.b16 %v465
      %v715 = vunpack.c.h.b16 %v465
      %v716 = vunpack.c.l.b16 %v466
      %v717 = vunpack.c.h.b16 %v466
      %v718 = vunpack.c.l.b16 %v467
      %v719 = vunpack.c.h.b16 %v467
      %v720 = vunpack.c.l.b16 %v468
      %v721 = vunpack.c.h.b16 %v468
      %v722 = vunpack.c.l.b16 %v469
      %v723 = vunpack.c.h.b16 %v469
      %v724 = vunpack.c.l.b16 %v470
      %v725 = vunpack.c.h.b16 %v470
      %v726 = vunpack.c.l.b16 %v471
      %v727 = vunpack.c.h.b16 %v471
      %v728 = vpack.c.b16 %v604, %v600
      %v729 = vpack.c.b16 %v605, %v601
      %v730 = vpack.c.b16 %v606, %v602
      %v731 = vpack.c.b16 %v607, %v603
      %v732 = vpack.c.b16 %v612, %v608
      %v733 = vpack.c.b16 %v613, %v609
      %v734 = vpack.c.b16 %v614, %v610
      %v735 = vpack.c.b16 %v615, %v611
      %v736 = vpack.c.b16 %v620, %v616
      %v737 = vpack.c.b16 %v621, %v617
      %v738 = vpack.c.b16 %v622, %v618
      %v739 = vpack.c.b16 %v623, %v619
      %v740 = vpack.c.b16 %v628, %v624
      %v741 = vpack.c.b16 %v629, %v625
      %v742 = vpack.c.b16 %v630, %v626
      %v743 = vpack.c.b16 %v631, %v627
      %v744 = vpack.c.b16 %v636, %v632
      %v745 = vpack.c.b16 %v637, %v633
      %v746 = vpack.c.b16 %v638, %v634
      %v747 = vpack.c.b16 %v639, %v635
      %v748 = vpack.c.b16 %v644, %v640
      %v749 = vpack.c.b16 %v645, %v641
      %v750 = vpack.c.b16 %v646, %v642
      %v751 = vpack.c.b16 %v647, %v643
      %v752 = vpack.c.b16 %v652, %v648
      %v753 = vpack.c.b16 %v653, %v649
      %v754 = vpack.c.b16 %v654, %v650
      %v755 = vpack.c.b16 %v655, %v651
      %v756 = vpack.c.b16 %v660, %v656
      %v757 = vpack.c.b16 %v661, %v657
      %v758 = vpack.c.b16 %v662, %v658
      %v759 = vpack.c.b16 %v663, %v659
      %v760 = vpack.c.b16 %v668, %v664
      %v761 = vpack.c.b16 %v669, %v665
      %v762 = vpack.c.b16 %v670, %v666
      %v763 = vpack.c.b16 %v671, %v667
      %v764 = vpack.c.b16 %v676, %v672
      %v765 = vpack.c.b16 %v677, %v673
      %v766 = vpack.c.b16 %v678, %v674
      %v767 = vpack.c.b16 %v679, %v675
      %v768 = vpack.c.b16 %v684, %v680
      %v769 = vpack.c.b16 %v685, %v681
      %v770 = vpack.c.b16 %v686, %v682
      %v771 = vpack.c.b16 %v687, %v683
      %v772 = vpack.c.b16 %v692, %v688
      %v773 = vpack.c.b16 %v693, %v689
      %v774 = vpack.c.b16 %v694, %v690
      %v775 = vpack.c.b16 %v695, %v691
      %v776 = vpack.c.b16 %v700, %v696
      %v777 = vpack.c.b16 %v701, %v697
      %v778 = vpack.c.b16 %v702, %v698
      %v779 = vpack.c.b16 %v703, %v699
      %v780 = vpack.c.b16 %v708, %v704
      %v781 = vpack.c.b16 %v709, %v705
      %v782 = vpack.c.b16 %v710, %v706
      %v783 = vpack.c.b16 %v711, %v707
      %v784 = vpack.c.b16 %v716, %v712
      %v785 = vpack.c.b16 %v717, %v713
      %v786 = vpack.c.b16 %v718, %v714
      %v787 = vpack.c.b16 %v719, %v715
      %v788 = vpack.c.b16 %v724, %v720
      %v789 = vpack.c.b16 %v725, %v721
      %v790 = vpack.c.b16 %v726, %v722
      %v791 = vpack.c.b16 %v727, %v723
      %v920 = vunpack.c.l.b16 %v472
      %v921 = vunpack.c.l.b16 %v473
      %v922 = vunpack.c.l.b16 %v474
      %v923 = vunpack.c.l.b16 %v475
      %v924 = vunpack.c.l.b16 %v476
      %v925 = vunpack.c.l.b16 %v477
      %v926 = vunpack.c.l.b16 %v478
      %v927 = vunpack.c.l.b16 %v479
      %v928 = vunpack.c.l.b16 %v480
      %v929 = vunpack.c.l.b16 %v481
      %v930 = vunpack.c.l.b16 %v482
      %v931 = vunpack.c.l.b16 %v483
      %v932 = vunpack.c.l.b16 %v484
      %v933 = vunpack.c.l.b16 %v485
      %v934 = vunpack.c.l.b16 %v486
      %v935 = vunpack.c.l.b16 %v487
      %v936 = vunpack.c.l.b16 %v488
      %v937 = vunpack.c.l.b16 %v489
      %v938 = vunpack.c.l.b16 %v490
      %v939 = vunpack.c.l.b16 %v491
      %v940 = vunpack.c.l.b16 %v492
      %v941 = vunpack.c.l.b16 %v493
      %v942 = vunpack.c.l.b16 %v494
      %v943 = vunpack.c.l.b16 %v495
      %v944 = vunpack.c.l.b16 %v496
      %v945 = vunpack.c.l.b16 %v497
      %v946 = vunpack.c.l.b16 %v498
      %v947 = vunpack.c.l.b16 %v499
      %v948 = vunpack.c.l.b16 %v500
      %v949 = vunpack.c.l.b16 %v501
      %v950 = vunpack.c.l.b16 %v502
      %v951 = vunpack.c.l.b16 %v503
      %v952 = vunpack.c.l.b16 %v504
      %v953 = vunpack.c.l.b16 %v505
      %v954 = vunpack.c.l.b16 %v506
      %v955 = vunpack.c.l.b16 %v507
      %v956 = vunpack.c.l.b16 %v508
      %v957 = vunpack.c.l.b16 %v509
      %v958 = vunpack.c.l.b16 %v510
      %v959 = vunpack.c.l.b16 %v511
      %v960 = vunpack.c.l.b16 %v512
      %v961 = vunpack.c.l.b16 %v513
      %v962 = vunpack.c.l.b16 %v514
      %v963 = vunpack.c.l.b16 %v515
      %v964 = vunpack.c.l.b16 %v516
      %v965 = vunpack.c.l.b16 %v517
      %v966 = vunpack.c.l.b16 %v518
      %v967 = vunpack.c.l.b16 %v519
      %v968 = vunpack.c.l.b16 %v520
      %v969 = vunpack.c.l.b16 %v521
      %v970 = vunpack.c.l.b16 %v522
      %v971 = vunpack.c.l.b16 %v523
      %v972 = vunpack.c.l.b16 %v524
      %v973 = vunpack.c.l.b16 %v525
      %v974 = vunpack.c.l.b16 %v526
      %v975 = vunpack.c.l.b16 %v527
      %v976 = vunpack.c.l.b16 %v528
      %v977 = vunpack.c.l.b16 %v529
      %v978 = vunpack.c.l.b16 %v530
      %v979 = vunpack.c.l.b16 %v531
      %v980 = vunpack.c.l.b16 %v532
      %v981 = vunpack.c.l.b16 %v533
      %v982 = vunpack.c.l.b16 %v534
      %v983 = vunpack.c.l.b16 %v535
      %v984 = vpack.c.b16 %v921, %v920
      %v985 = vpack.c.b16 %v923, %v922
      %v986 = vpack.c.b16 %v925, %v924
      %v987 = vpack.c.b16 %v927, %v926
      %v988 = vpack.c.b16 %v929, %v928
      %v989 = vpack.c.b16 %v931, %v930
      %v990 = vpack.c.b16 %v933, %v932
      %v991 = vpack.c.b16 %v935, %v934
      %v992 = vpack.c.b16 %v937, %v936
      %v993 = vpack.c.b16 %v939, %v938
      %v994 = vpack.c.b16 %v941, %v940
      %v995 = vpack.c.b16 %v943, %v942
      %v996 = vpack.c.b16 %v945, %v944
      %v997 = vpack.c.b16 %v947, %v946
      %v998 = vpack.c.b16 %v949, %v948
      %v999 = vpack.c.b16 %v951, %v950
      %v1000 = vpack.c.b16 %v953, %v952
      %v1001 = vpack.c.b16 %v955, %v954
      %v1002 = vpack.c.b16 %v957, %v956
      %v1003 = vpack.c.b16 %v959, %v958
      %v1004 = vpack.c.b16 %v961, %v960
      %v1005 = vpack.c.b16 %v963, %v962
      %v1006 = vpack.c.b16 %v965, %v964
      %v1007 = vpack.c.b16 %v967, %v966
      %v1008 = vpack.c.b16 %v969, %v968
      %v1009 = vpack.c.b16 %v971, %v970
      %v1010 = vpack.c.b16 %v973, %v972
      %v1011 = vpack.c.b16 %v975, %v974
      %v1012 = vpack.c.b16 %v977, %v976
      %v1013 = vpack.c.b16 %v979, %v978
      %v1014 = vpack.c.b16 %v981, %v980
      %v1015 = vpack.c.b16 %v983, %v982
      %1048 = vmatprep.subr.bf16.mxu0 0
      %1049 = vmatpush1.bf16.msra.mxu0 %v991
      %1050 = vmatprep.subr.bf16.mxu0 0
      %1051 = vmatpush1.bf16.msra.mxu0 %v990
      %1052 = vmatprep.subr.bf16.mxu0 0
      %1053 = vmatpush1.bf16.msra.mxu0 %v989
      %1054 = vmatprep.subr.bf16.mxu0 0
      %1055 = vmatpush1.bf16.msra.mxu0 %v988
      %1056 = vmatprep.subr.bf16.mxu0 0
      %1057 = vmatpush1.bf16.msra.mxu0 %v987
      %1058 = vmatprep.subr.bf16.mxu0 0
      %1059 = vmatpush1.bf16.msra.mxu0 %v986
      %1060 = vmatprep.subr.bf16.mxu0 0
      %1061 = vmatpush1.bf16.msra.mxu0 %v985
      %1062 = vmatprep.subr.bf16.mxu0 0
      %1063 = vmatpush1.bf16.msra.mxu0 %v984
      %1064 = vmatprep.subr.bf16.mxu0 0
      %1065 = vmatpush2.bf16.msra.mxu0 %v999
      %1066 = vmatprep.subr.bf16.mxu0 0
      %1067 = vmatpush2.bf16.msra.mxu0 %v998
      %1068 = vmatprep.subr.bf16.mxu0 0
      %1069 = vmatpush2.bf16.msra.mxu0 %v997
      %1070 = vmatprep.subr.bf16.mxu0 0
      %1071 = vmatpush2.bf16.msra.mxu0 %v996
      %1072 = vmatprep.subr.bf16.mxu0 0
      %1073 = vmatpush2.bf16.msra.mxu0 %v995
      %1074 = vmatprep.subr.bf16.mxu0 0
      %1075 = vmatpush2.bf16.msra.mxu0 %v994
      %1076 = vmatprep.subr.bf16.mxu0 0
      %1077 = vmatpush2.bf16.msra.mxu0 %v993
      %1078 = vmatprep.subr.bf16.mxu0 0
      %1079 = vmatpush2.bf16.msra.mxu0 %v992
      %1080 = vmatprep.mubr.bf16.mxu0 %v729
      %1081 = vmatmul.mubr.bf16.gmra.mxu0 %v728
      %v1082 = vpop.f32.mrf.mxu0
      %v1083 = vadd.f32 0.0, %v1082
      %v1084 = vpop.f32.mrf.mxu0
      %v1085 = vpop.f32.mrf.mxu0
      %v1086 = vadd.f32 0.0, %v1085
      %v1087 = vpop.f32.mrf.mxu0
      %1088 = vmatprep.mubr.bf16.mxu0 %v733
      %1089 = vmatmul.mubr.bf16.gmra.mxu0 %v732
      %v1090 = vpop.f32.mrf.mxu0
      %v1091 = vadd.f32 0.0, %v1090
      %v1092 = vpop.f32.mrf.mxu0
      %v1093 = vpop.f32.mrf.mxu0
      %v1094 = vadd.f32 0.0, %v1093
      %v1095 = vpop.f32.mrf.mxu0
      %1096 = vmatprep.mubr.bf16.mxu0 %v737
      %1097 = vmatmul.mubr.bf16.gmra.mxu0 %v736
      %v1098 = vpop.f32.mrf.mxu0
      %v1099 = vadd.f32 0.0, %v1098
      %v1100 = vpop.f32.mrf.mxu0
      %v1101 = vpop.f32.mrf.mxu0
      %v1102 = vadd.f32 0.0, %v1101
      %v1103 = vpop.f32.mrf.mxu0
      %1104 = vmatprep.mubr.bf16.mxu0 %v741
      %1105 = vmatmul.mubr.bf16.gmra.mxu0 %v740
      %v1106 = vpop.f32.mrf.mxu0
      %v1107 = vadd.f32 0.0, %v1106
      %v1108 = vpop.f32.mrf.mxu0
      %v1109 = vpop.f32.mrf.mxu0
      %v1110 = vadd.f32 0.0, %v1109
      %v1111 = vpop.f32.mrf.mxu0
      %1112 = vmatprep.mubr.bf16.mxu0 %v745
      %1113 = vmatmul.mubr.bf16.gmra.mxu0 %v744
      %v1114 = vpop.f32.mrf.mxu0
      %v1115 = vadd.f32 0.0, %v1114
      %v1116 = vpop.f32.mrf.mxu0
      %v1117 = vpop.f32.mrf.mxu0
      %v1118 = vadd.f32 0.0, %v1117
      %v1119 = vpop.f32.mrf.mxu0
      %1120 = vmatprep.mubr.bf16.mxu0 %v749
      %1121 = vmatmul.mubr.bf16.gmra.mxu0 %v748
      %v1122 = vpop.f32.mrf.mxu0
      %v1123 = vadd.f32 0.0, %v1122
      %v1124 = vpop.f32.mrf.mxu0
      %v1125 = vpop.f32.mrf.mxu0
      %v1126 = vadd.f32 0.0, %v1125
      %v1127 = vpop.f32.mrf.mxu0
      %1128 = vmatprep.mubr.bf16.mxu0 %v753
      %1129 = vmatmul.mubr.bf16.gmra.mxu0 %v752
      %v1130 = vpop.f32.mrf.mxu0
      %v1131 = vadd.f32 0.0, %v1130
      %v1132 = vpop.f32.mrf.mxu0
      %v1133 = vpop.f32.mrf.mxu0
      %v1134 = vadd.f32 0.0, %v1133
      %v1135 = vpop.f32.mrf.mxu0
      %1136 = vmatprep.mubr.bf16.mxu0 %v757
      %1137 = vmatmul.mubr.bf16.gmra.mxu0 %v756
      %v1138 = vpop.f32.mrf.mxu0
      %v1139 = vadd.f32 0.0, %v1138
      %v1140 = vpop.f32.mrf.mxu0
      %v1141 = vpop.f32.mrf.mxu0
      %v1142 = vadd.f32 0.0, %v1141
      %v1143 = vpop.f32.mrf.mxu0
      %1144 = vmatprep.mubr.bf16.mxu0 %v761
      %1145 = vmatmul.mubr.bf16.gmra.mxu0 %v760
      %v1146 = vpop.f32.mrf.mxu0
      %v1147 = vadd.f32 0.0, %v1146
      %v1148 = vpop.f32.mrf.mxu0
      %v1149 = vpop.f32.mrf.mxu0
      %v1150 = vadd.f32 0.0, %v1149
      %v1151 = vpop.f32.mrf.mxu0
      %1152 = vmatprep.mubr.bf16.mxu0 %v765
      %1153 = vmatmul.mubr.bf16.gmra.mxu0 %v764
      %v1154 = vpop.f32.mrf.mxu0
      %v1155 = vadd.f32 0.0, %v1154
      %v1156 = vpop.f32.mrf.mxu0
      %v1157 = vpop.f32.mrf.mxu0
      %v1158 = vadd.f32 0.0, %v1157
      %v1159 = vpop.f32.mrf.mxu0
      %1160 = vmatprep.mubr.bf16.mxu0 %v769
      %1161 = vmatmul.mubr.bf16.gmra.mxu0 %v768
      %v1162 = vpop.f32.mrf.mxu0
      %v1163 = vadd.f32 0.0, %v1162
      %v1164 = vpop.f32.mrf.mxu0
      %v1165 = vpop.f32.mrf.mxu0
      %v1166 = vadd.f32 0.0, %v1165
      %v1167 = vpop.f32.mrf.mxu0
      %1168 = vmatprep.mubr.bf16.mxu0 %v773
      %1169 = vmatmul.mubr.bf16.gmra.mxu0 %v772
      %v1170 = vpop.f32.mrf.mxu0
      %v1171 = vadd.f32 0.0, %v1170
      %v1172 = vpop.f32.mrf.mxu0
      %v1173 = vpop.f32.mrf.mxu0
      %v1174 = vadd.f32 0.0, %v1173
      %v1175 = vpop.f32.mrf.mxu0
      %1176 = vmatprep.mubr.bf16.mxu0 %v777
      %1177 = vmatmul.mubr.bf16.gmra.mxu0 %v776
      %v1178 = vpop.f32.mrf.mxu0
      %v1179 = vadd.f32 0.0, %v1178
      %v1180 = vpop.f32.mrf.mxu0
      %v1181 = vpop.f32.mrf.mxu0
      %v1182 = vadd.f32 0.0, %v1181
      %v1183 = vpop.f32.mrf.mxu0
      %1184 = vmatprep.mubr.bf16.mxu0 %v781
      %1185 = vmatmul.mubr.bf16.gmra.mxu0 %v780
      %v1186 = vpop.f32.mrf.mxu0
      %v1187 = vadd.f32 0.0, %v1186
      %v1188 = vpop.f32.mrf.mxu0
      %v1189 = vpop.f32.mrf.mxu0
      %v1190 = vadd.f32 0.0, %v1189
      %v1191 = vpop.f32.mrf.mxu0
      %1192 = vmatprep.mubr.bf16.mxu0 %v785
      %1193 = vmatmul.mubr.bf16.gmra.mxu0 %v784
      %v1194 = vpop.f32.mrf.mxu0
      %v1195 = vadd.f32 0.0, %v1194
      %v1196 = vpop.f32.mrf.mxu0
      %v1197 = vpop.f32.mrf.mxu0
      %v1198 = vadd.f32 0.0, %v1197
      %v1199 = vpop.f32.mrf.mxu0
      %1200 = vmatprep.mubr.bf16.mxu0 %v789
      %1201 = vmatmul.mubr.bf16.gmra.mxu0 %v788
      %v1202 = vpop.f32.mrf.mxu0
      %v1203 = vadd.f32 0.0, %v1202
      %v1204 = vpop.f32.mrf.mxu0
      %v1205 = vpop.f32.mrf.mxu0
      %v1206 = vadd.f32 0.0, %v1205
      %v1207 = vpop.f32.mrf.mxu0
      %1208 = vdwg.mxu0
      %1209 = vmatprep.subr.bf16.mxu0 0
      %1210 = vmatpush1.bf16.msra.mxu0 %v1007
      %1211 = vmatprep.subr.bf16.mxu0 0
      %1212 = vmatpush1.bf16.msra.mxu0 %v1006
      %1213 = vmatprep.subr.bf16.mxu0 0
      %1214 = vmatpush1.bf16.msra.mxu0 %v1005
      %1215 = vmatprep.subr.bf16.mxu0 0
      %1216 = vmatpush1.bf16.msra.mxu0 %v1004
      %1217 = vmatprep.subr.bf16.mxu0 0
      %1218 = vmatpush1.bf16.msra.mxu0 %v1003
      %1219 = vmatprep.subr.bf16.mxu0 0
      %1220 = vmatpush1.bf16.msra.mxu0 %v1002
      %1221 = vmatprep.subr.bf16.mxu0 0
      %1222 = vmatpush1.bf16.msra.mxu0 %v1001
      %1223 = vmatprep.subr.bf16.mxu0 0
      %1224 = vmatpush1.bf16.msra.mxu0 %v1000
      %1225 = vmatprep.subr.bf16.mxu0 0
      %1226 = vmatpush2.bf16.msra.mxu0 %v1015
      %1227 = vmatprep.subr.bf16.mxu0 0
      %1228 = vmatpush2.bf16.msra.mxu0 %v1014
      %1229 = vmatprep.subr.bf16.mxu0 0
      %1230 = vmatpush2.bf16.msra.mxu0 %v1013
      %1231 = vmatprep.subr.bf16.mxu0 0
      %1232 = vmatpush2.bf16.msra.mxu0 %v1012
      %1233 = vmatprep.subr.bf16.mxu0 0
      %1234 = vmatpush2.bf16.msra.mxu0 %v1011
      %1235 = vmatprep.subr.bf16.mxu0 0
      %1236 = vmatpush2.bf16.msra.mxu0 %v1010
      %1237 = vmatprep.subr.bf16.mxu0 0
      %1238 = vmatpush2.bf16.msra.mxu0 %v1009
      %1239 = vmatprep.subr.bf16.mxu0 0
      %1240 = vmatpush2.bf16.msra.mxu0 %v1008
      %1241 = vmatprep.mubr.bf16.mxu0 %v731
      %1242 = vmatmul.mubr.bf16.gmra.mxu0 %v730
      %v1243 = vpop.f32.mrf.mxu0
      %v1244 = vadd.f32 %v1083, %v1243
      %v1245 = vpop.f32.mrf.mxu0
      %v1246 = vpop.f32.mrf.mxu0
      %v1247 = vadd.f32 %v1086, %v1246
      %v1248 = vpop.f32.mrf.mxu0
      %1249 = vmatprep.mubr.bf16.mxu0 %v735
      %1250 = vmatmul.mubr.bf16.gmra.mxu0 %v734
      %v1251 = vpop.f32.mrf.mxu0
      %v1252 = vadd.f32 %v1091, %v1251
      %v1253 = vpop.f32.mrf.mxu0
      %v1254 = vpop.f32.mrf.mxu0
      %v1255 = vadd.f32 %v1094, %v1254
      %v1256 = vpop.f32.mrf.mxu0
      %1257 = vmatprep.mubr.bf16.mxu0 %v739
      %1258 = vmatmul.mubr.bf16.gmra.mxu0 %v738
      %v1259 = vpop.f32.mrf.mxu0
      %v1260 = vadd.f32 %v1099, %v1259
      %v1261 = vpop.f32.mrf.mxu0
      %v1262 = vpop.f32.mrf.mxu0
      %v1263 = vadd.f32 %v1102, %v1262
      %v1264 = vpop.f32.mrf.mxu0
      %1265 = vmatprep.mubr.bf16.mxu0 %v743
      %1266 = vmatmul.mubr.bf16.gmra.mxu0 %v742
      %v1267 = vpop.f32.mrf.mxu0
      %v1268 = vadd.f32 %v1107, %v1267
      %v1269 = vpop.f32.mrf.mxu0
      %v1270 = vpop.f32.mrf.mxu0
      %v1271 = vadd.f32 %v1110, %v1270
      %v1272 = vpop.f32.mrf.mxu0
      %1273 = vmatprep.mubr.bf16.mxu0 %v747
      %1274 = vmatmul.mubr.bf16.gmra.mxu0 %v746
      %v1275 = vpop.f32.mrf.mxu0
      %v1276 = vadd.f32 %v1115, %v1275
      %v1277 = vpop.f32.mrf.mxu0
      %v1278 = vpop.f32.mrf.mxu0
      %v1279 = vadd.f32 %v1118, %v1278
      %v1280 = vpop.f32.mrf.mxu0
      %1281 = vmatprep.mubr.bf16.mxu0 %v751
      %1282 = vmatmul.mubr.bf16.gmra.mxu0 %v750
      %v1283 = vpop.f32.mrf.mxu0
      %v1284 = vadd.f32 %v1123, %v1283
      %v1285 = vpop.f32.mrf.mxu0
      %v1286 = vpop.f32.mrf.mxu0
      %v1287 = vadd.f32 %v1126, %v1286
      %v1288 = vpop.f32.mrf.mxu0
      %1289 = vmatprep.mubr.bf16.mxu0 %v755
      %1290 = vmatmul.mubr.bf16.gmra.mxu0 %v754
      %v1291 = vpop.f32.mrf.mxu0
      %v1292 = vadd.f32 %v1131, %v1291
      %v1293 = vpop.f32.mrf.mxu0
      %v1294 = vpop.f32.mrf.mxu0
      %v1295 = vadd.f32 %v1134, %v1294
      %v1296 = vpop.f32.mrf.mxu0
      %1297 = vmatprep.mubr.bf16.mxu0 %v759
      %1298 = vmatmul.mubr.bf16.gmra.mxu0 %v758
      %v1299 = vpop.f32.mrf.mxu0
      %v1300 = vadd.f32 %v1139, %v1299
      %v1301 = vpop.f32.mrf.mxu0
      %v1302 = vpop.f32.mrf.mxu0
      %v1303 = vadd.f32 %v1142, %v1302
      %v1304 = vpop.f32.mrf.mxu0
      %1305 = vmatprep.mubr.bf16.mxu0 %v763
      %1306 = vmatmul.mubr.bf16.gmra.mxu0 %v762
      %v1307 = vpop.f32.mrf.mxu0
      %v1308 = vadd.f32 %v1147, %v1307
      %v1309 = vpop.f32.mrf.mxu0
      %v1310 = vpop.f32.mrf.mxu0
      %v1311 = vadd.f32 %v1150, %v1310
      %v1312 = vpop.f32.mrf.mxu0
      %1313 = vmatprep.mubr.bf16.mxu0 %v767
      %1314 = vmatmul.mubr.bf16.gmra.mxu0 %v766
      %v1315 = vpop.f32.mrf.mxu0
      %v1316 = vadd.f32 %v1155, %v1315
      %v1317 = vpop.f32.mrf.mxu0
      %v1318 = vpop.f32.mrf.mxu0
      %v1319 = vadd.f32 %v1158, %v1318
      %v1320 = vpop.f32.mrf.mxu0
      %1321 = vmatprep.mubr.bf16.mxu0 %v771
      %1322 = vmatmul.mubr.bf16.gmra.mxu0 %v770
      %v1323 = vpop.f32.mrf.mxu0
      %v1324 = vadd.f32 %v1163, %v1323
      %v1325 = vpop.f32.mrf.mxu0
      %v1326 = vpop.f32.mrf.mxu0
      %v1327 = vadd.f32 %v1166, %v1326
      %v1328 = vpop.f32.mrf.mxu0
      %1329 = vmatprep.mubr.bf16.mxu0 %v775
      %1330 = vmatmul.mubr.bf16.gmra.mxu0 %v774
      %v1331 = vpop.f32.mrf.mxu0
      %v1332 = vadd.f32 %v1171, %v1331
      %v1333 = vpop.f32.mrf.mxu0
      %v1334 = vpop.f32.mrf.mxu0
      %v1335 = vadd.f32 %v1174, %v1334
      %v1336 = vpop.f32.mrf.mxu0
      %1337 = vmatprep.mubr.bf16.mxu0 %v779
      %1338 = vmatmul.mubr.bf16.gmra.mxu0 %v778
      %v1339 = vpop.f32.mrf.mxu0
      %v1340 = vadd.f32 %v1179, %v1339
      %v1341 = vpop.f32.mrf.mxu0
      %v1342 = vpop.f32.mrf.mxu0
      %v1343 = vadd.f32 %v1182, %v1342
      %v1344 = vpop.f32.mrf.mxu0
      %1345 = vmatprep.mubr.bf16.mxu0 %v783
      %1346 = vmatmul.mubr.bf16.gmra.mxu0 %v782
      %v1347 = vpop.f32.mrf.mxu0
      %v1348 = vadd.f32 %v1187, %v1347
      %v1349 = vpop.f32.mrf.mxu0
      %v1350 = vpop.f32.mrf.mxu0
      %v1351 = vadd.f32 %v1190, %v1350
      %v1352 = vpop.f32.mrf.mxu0
      %1353 = vmatprep.mubr.bf16.mxu0 %v787
      %1354 = vmatmul.mubr.bf16.gmra.mxu0 %v786
      %v1355 = vpop.f32.mrf.mxu0
      %v1356 = vadd.f32 %v1195, %v1355
      %v1357 = vpop.f32.mrf.mxu0
      %v1358 = vpop.f32.mrf.mxu0
      %v1359 = vadd.f32 %v1198, %v1358
      %v1360 = vpop.f32.mrf.mxu0
      %1361 = vmatprep.mubr.bf16.mxu0 %v791
      %1362 = vmatmul.mubr.bf16.gmra.mxu0 %v790
      %v1363 = vpop.f32.mrf.mxu0
      %v1364 = vadd.f32 %v1203, %v1363
      %v1365 = vpop.f32.mrf.mxu0
      %v1366 = vpop.f32.mrf.mxu0
      %v1367 = vadd.f32 %v1206, %v1366
      %v1368 = vpop.f32.mrf.mxu0
      %1369 = vdwg.mxu0
      %v1370 = vadd.f32 %v376, %v1244
      %v1371 = vadd.f32 %v377, %v1247
      %v1372 = vadd.f32 %v378, %v1252
      %v1373 = vadd.f32 %v379, %v1255
      %v1374 = vadd.f32 %v380, %v1260
      %v1375 = vadd.f32 %v381, %v1263
      %v1376 = vadd.f32 %v382, %v1268
      %v1377 = vadd.f32 %v383, %v1271
      %v1378 = vadd.f32 %v384, %v1276
      %v1379 = vadd.f32 %v385, %v1279
      %v1380 = vadd.f32 %v386, %v1284
      %v1381 = vadd.f32 %v387, %v1287
      %v1382 = vadd.f32 %v388, %v1292
      %v1383 = vadd.f32 %v389, %v1295
      %v1384 = vadd.f32 %v390, %v1300
      %v1385 = vadd.f32 %v391, %v1303
      %v1386 = vadd.f32 %v392, %v1308
      %v1387 = vadd.f32 %v393, %v1311
      %v1388 = vadd.f32 %v394, %v1316
      %v1389 = vadd.f32 %v395, %v1319
      %v1390 = vadd.f32 %v396, %v1324
      %v1391 = vadd.f32 %v397, %v1327
      %v1392 = vadd.f32 %v398, %v1332
      %v1393 = vadd.f32 %v399, %v1335
      %v1394 = vadd.f32 %v400, %v1340
      %v1395 = vadd.f32 %v401, %v1343
      %v1396 = vadd.f32 %v402, %v1348
      %v1397 = vadd.f32 %v403, %v1351
      %v1398 = vadd.f32 %v404, %v1356
      %v1399 = vadd.f32 %v405, %v1359
      %v1400 = vadd.f32 %v406, %v1364
      %v1401 = vadd.f32 %v407, %v1367
      %1402 = vst [vmem:[#allocation2] sm:$0xff] %v1370
      %1403 = vst [vmem:[#allocation2 + $0x8] sm:$0xff] %v1371
      %1404 = vst [vmem:[#allocation2 + $0x10] sm:$0xff] %v1372
      %1405 = vst [vmem:[#allocation2 + $0x18] sm:$0xff] %v1373
      %1406 = vst [vmem:[#allocation2 + $0x20] sm:$0xff] %v1374
      %1407 = vst [vmem:[#allocation2 + $0x28] sm:$0xff] %v1375
      %1408 = vst [vmem:[#allocation2 + $0x30] sm:$0xff] %v1376
      %1409 = vst [vmem:[#allocation2 + $0x38] sm:$0xff] %v1377
      %1410 = vst [vmem:[#allocation2 + $0x40] sm:$0xff] %v1378
      %1411 = vst [vmem:[#allocation2 + $0x48] sm:$0xff] %v1379
      %1412 = vst [vmem:[#allocation2 + $0x50] sm:$0xff] %v1380
      %1413 = vst [vmem:[#allocation2 + $0x58] sm:$0xff] %v1381
      %1414 = vst [vmem:[#allocation2 + $0x60] sm:$0xff] %v1382
      %1415 = vst [vmem:[#allocation2 + $0x68] sm:$0xff] %v1383
      %1416 = vst [vmem:[#allocation2 + $0x70] sm:$0xff] %v1384
      %1417 = vst [vmem:[#allocation2 + $0x78] sm:$0xff] %v1385
      %1418 = vst [vmem:[#allocation2 + $0x80] sm:$0xff] %v1386
      %1419 = vst [vmem:[#allocation2 + $0x88] sm:$0xff] %v1387
      %1420 = vst [vmem:[#allocation2 + $0x90] sm:$0xff] %v1388
      %1421 = vst [vmem:[#allocation2 + $0x98] sm:$0xff] %v1389
      %1422 = vst [vmem:[#allocation2 + $0xa0] sm:$0xff] %v1390
      %1423 = vst [vmem:[#allocation2 + $0xa8] sm:$0xff] %v1391
      %1424 = vst [vmem:[#allocation2 + $0xb0] sm:$0xff] %v1392
      %1425 = vst [vmem:[#allocation2 + $0xb8] sm:$0xff] %v1393
      %1426 = vst [vmem:[#allocation2 + $0xc0] sm:$0xff] %v1394
      %1427 = vst [vmem:[#allocation2 + $0xc8] sm:$0xff] %v1395
      %1428 = vst [vmem:[#allocation2 + $0xd0] sm:$0xff] %v1396
      %1429 = vst [vmem:[#allocation2 + $0xd8] sm:$0xff] %v1397
      %1430 = vst [vmem:[#allocation2 + $0xe0] sm:$0xff] %v1398
      %1431 = vst [vmem:[#allocation2 + $0xe8] sm:$0xff] %v1399
      %1432 = vst [vmem:[#allocation2 + $0xf0] sm:$0xff] %v1400
      %1433 = vst [vmem:[#allocation2 + $0xf8] sm:$0xff] %v1401
      // Predicated region
      $region41: #{graphsage_forward.7} parent=35 // pred_check
        %p1434 = pneg %p340
      $region42: #{graphsage_forward.7} parent=35 // pred_check_branch
        %1436 = sbr.rel (%p1434) target = $region44
      $region43: #{graphsage_forward.7} parent=35 // pred_region
        %v1437 = vld [vmem:[#allocation2] sm:$0xff]
        %v1438 = vld [vmem:[#allocation2 + $0x8] sm:$0xff]
        %v1439 = vld [vmem:[#allocation2 + $0x10] sm:$0xff]
        %v1440 = vld [vmem:[#allocation2 + $0x18] sm:$0xff]
        %v1441 = vld [vmem:[#allocation2 + $0x20] sm:$0xff]
        %v1442 = vld [vmem:[#allocation2 + $0x28] sm:$0xff]
        %v1443 = vld [vmem:[#allocation2 + $0x30] sm:$0xff]
        %v1444 = vld [vmem:[#allocation2 + $0x38] sm:$0xff]
        %v1445 = vld [vmem:[#allocation2 + $0x40] sm:$0xff]
        %v1446 = vld [vmem:[#allocation2 + $0x48] sm:$0xff]
        %v1447 = vld [vmem:[#allocation2 + $0x50] sm:$0xff]
        %v1448 = vld [vmem:[#allocation2 + $0x58] sm:$0xff]
        %v1449 = vld [vmem:[#allocation2 + $0x60] sm:$0xff]
        %v1450 = vld [vmem:[#allocation2 + $0x68] sm:$0xff]
        %v1451 = vld [vmem:[#allocation2 + $0x70] sm:$0xff]
        %v1452 = vld [vmem:[#allocation2 + $0x78] sm:$0xff]
        %v1453 = vld [vmem:[#allocation2 + $0x80] sm:$0xff]
        %v1454 = vld [vmem:[#allocation2 + $0x88] sm:$0xff]
        %v1455 = vld [vmem:[#allocation2 + $0x90] sm:$0xff]
        %v1456 = vld [vmem:[#allocation2 + $0x98] sm:$0xff]
        %v1457 = vld [vmem:[#allocation2 + $0xa0] sm:$0xff]
        %v1458 = vld [vmem:[#allocation2 + $0xa8] sm:$0xff]
        %v1459 = vld [vmem:[#allocation2 + $0xb0] sm:$0xff]
        %v1460 = vld [vmem:[#allocation2 + $0xb8] sm:$0xff]
        %v1461 = vld [vmem:[#allocation2 + $0xc0] sm:$0xff]
        %v1462 = vld [vmem:[#allocation2 + $0xc8] sm:$0xff]
        %v1463 = vld [vmem:[#allocation2 + $0xd0] sm:$0xff]
        %v1464 = vld [vmem:[#allocation2 + $0xd8] sm:$0xff]
        %v1465 = vld [vmem:[#allocation2 + $0xe0] sm:$0xff]
        %v1466 = vld [vmem:[#allocation2 + $0xe8] sm:$0xff]
        %v1467 = vld [vmem:[#allocation2 + $0xf0] sm:$0xff]
        %v1468 = vld [vmem:[#allocation2 + $0xf8] sm:$0xff]
        %v1469 = vld [vmem:[%s319] sm:$0xff]
        %v1470 = vld [vmem:[%s319 + $0x8] sm:$0xff]
        %v1471 = vld [vmem:[%s319 + $0x10] sm:$0xff]
        %v1472 = vld [vmem:[%s319 + $0x18] sm:$0xff]
        %v1473 = vld [vmem:[%s319 + $0x20] sm:$0xff]
        %v1474 = vld [vmem:[%s319 + $0x28] sm:$0xff]
        %v1475 = vld [vmem:[%s319 + $0x30] sm:$0xff]
        %v1476 = vld [vmem:[%s319 + $0x38] sm:$0xff]
        %v1477 = vld [vmem:[%s319 + $0x40] sm:$0xff]
        %v1478 = vld [vmem:[%s319 + $0x48] sm:$0xff]
        %v1479 = vld [vmem:[%s319 + $0x50] sm:$0xff]
        %v1480 = vld [vmem:[%s319 + $0x58] sm:$0xff]
        %v1481 = vld [vmem:[%s319 + $0x60] sm:$0xff]
        %v1482 = vld [vmem:[%s319 + $0x68] sm:$0xff]
        %v1483 = vld [vmem:[%s319 + $0x70] sm:$0xff]
        %v1484 = vld [vmem:[%s319 + $0x78] sm:$0xff]
        %v1485 = vld [vmem:[%s319 + $0x80] sm:$0xff]
        %v1486 = vld [vmem:[%s319 + $0x88] sm:$0xff]
        %v1487 = vld [vmem:[%s319 + $0x90] sm:$0xff]
        %v1488 = vld [vmem:[%s319 + $0x98] sm:$0xff]
        %v1489 = vld [vmem:[%s319 + $0xa0] sm:$0xff]
        %v1490 = vld [vmem:[%s319 + $0xa8] sm:$0xff]
        %v1491 = vld [vmem:[%s319 + $0xb0] sm:$0xff]
        %v1492 = vld [vmem:[%s319 + $0xb8] sm:$0xff]
        %v1493 = vld [vmem:[%s319 + $0xc0] sm:$0xff]
        %v1494 = vld [vmem:[%s319 + $0xc8] sm:$0xff]
        %v1495 = vld [vmem:[%s319 + $0xd0] sm:$0xff]
        %v1496 = vld [vmem:[%s319 + $0xd8] sm:$0xff]
        %v1497 = vld [vmem:[%s319 + $0xe0] sm:$0xff]
        %v1498 = vld [vmem:[%s319 + $0xe8] sm:$0xff]
        %v1499 = vld [vmem:[%s319 + $0xf0] sm:$0xff]
        %v1500 = vld [vmem:[%s319 + $0xf8] sm:$0xff]
        %1502 = vset.pattern.permute.xlu0 0
        %1503 = vperm.xlu0 %1502, %v1469
        %v1504 = vpop.permute.xlu0 %1503
        %1507 = vset.pattern.permute.xlu0 0
        %1508 = vperm.xlu0 %1507, %v1470
        %v1509 = vpop.permute.xlu0 %1508
        %1512 = vset.pattern.permute.xlu0 0
        %1513 = vperm.xlu0 %1512, %v1471
        %v1514 = vpop.permute.xlu0 %1513
        %1517 = vset.pattern.permute.xlu0 0
        %1518 = vperm.xlu0 %1517, %v1472
        %v1519 = vpop.permute.xlu0 %1518
        %1522 = vset.pattern.permute.xlu0 0
        %1523 = vperm.xlu0 %1522, %v1473
        %v1524 = vpop.permute.xlu0 %1523
        %1527 = vset.pattern.permute.xlu0 0
        %1528 = vperm.xlu0 %1527, %v1474
        %v1529 = vpop.permute.xlu0 %1528
        %1532 = vset.pattern.permute.xlu0 0
        %1533 = vperm.xlu0 %1532, %v1475
        %v1534 = vpop.permute.xlu0 %1533
        %1537 = vset.pattern.permute.xlu0 0
        %1538 = vperm.xlu0 %1537, %v1476
        %v1539 = vpop.permute.xlu0 %1538
        %1542 = vset.pattern.permute.xlu0 0
        %1543 = vperm.xlu0 %1542, %v1477
        %v1544 = vpop.permute.xlu0 %1543
        %1547 = vset.pattern.permute.xlu0 0
        %1548 = vperm.xlu0 %1547, %v1478
        %v1549 = vpop.permute.xlu0 %1548
        %1552 = vset.pattern.permute.xlu0 0
        %1553 = vperm.xlu0 %1552, %v1479
        %v1554 = vpop.permute.xlu0 %1553
        %1557 = vset.pattern.permute.xlu0 0
        %1558 = vperm.xlu0 %1557, %v1480
        %v1559 = vpop.permute.xlu0 %1558
        %1562 = vset.pattern.permute.xlu0 0
        %1563 = vperm.xlu0 %1562, %v1481
        %v1564 = vpop.permute.xlu0 %1563
        %1567 = vset.pattern.permute.xlu0 0
        %1568 = vperm.xlu0 %1567, %v1482
        %v1569 = vpop.permute.xlu0 %1568
        %1572 = vset.pattern.permute.xlu0 0
        %1573 = vperm.xlu0 %1572, %v1483
        %v1574 = vpop.permute.xlu0 %1573
        %1577 = vset.pattern.permute.xlu0 0
        %1578 = vperm.xlu0 %1577, %v1484
        %v1579 = vpop.permute.xlu0 %1578
        %1582 = vset.pattern.permute.xlu0 0
        %1583 = vperm.xlu0 %1582, %v1485
        %v1584 = vpop.permute.xlu0 %1583
        %1587 = vset.pattern.permute.xlu0 0
        %1588 = vperm.xlu0 %1587, %v1486
        %v1589 = vpop.permute.xlu0 %1588
        %1592 = vset.pattern.permute.xlu0 0
        %1593 = vperm.xlu0 %1592, %v1487
        %v1594 = vpop.permute.xlu0 %1593
        %1597 = vset.pattern.permute.xlu0 0
        %1598 = vperm.xlu0 %1597, %v1488
        %v1599 = vpop.permute.xlu0 %1598
        %1602 = vset.pattern.permute.xlu0 0
        %1603 = vperm.xlu0 %1602, %v1489
        %v1604 = vpop.permute.xlu0 %1603
        %1607 = vset.pattern.permute.xlu0 0
        %1608 = vperm.xlu0 %1607, %v1490
        %v1609 = vpop.permute.xlu0 %1608
        %1612 = vset.pattern.permute.xlu0 0
        %1613 = vperm.xlu0 %1612, %v1491
        %v1614 = vpop.permute.xlu0 %1613
        %1617 = vset.pattern.permute.xlu0 0
        %1618 = vperm.xlu0 %1617, %v1492
        %v1619 = vpop.permute.xlu0 %1618
        %1622 = vset.pattern.permute.xlu0 0
        %1623 = vperm.xlu0 %1622, %v1493
        %v1624 = vpop.permute.xlu0 %1623
        %1627 = vset.pattern.permute.xlu0 0
        %1628 = vperm.xlu0 %1627, %v1494
        %v1629 = vpop.permute.xlu0 %1628
        %1632 = vset.pattern.permute.xlu0 0
        %1633 = vperm.xlu0 %1632, %v1495
        %v1634 = vpop.permute.xlu0 %1633
        %1637 = vset.pattern.permute.xlu0 0
        %1638 = vperm.xlu0 %1637, %v1496
        %v1639 = vpop.permute.xlu0 %1638
        %1642 = vset.pattern.permute.xlu0 0
        %1643 = vperm.xlu0 %1642, %v1497
        %v1644 = vpop.permute.xlu0 %1643
        %1647 = vset.pattern.permute.xlu0 0
        %1648 = vperm.xlu0 %1647, %v1498
        %v1649 = vpop.permute.xlu0 %1648
        %1652 = vset.pattern.permute.xlu0 0
        %1653 = vperm.xlu0 %1652, %v1499
        %v1654 = vpop.permute.xlu0 %1653
        %1657 = vset.pattern.permute.xlu0 0
        %1658 = vperm.xlu0 %1657, %v1500
        %v1659 = vpop.permute.xlu0 %1658
        %v1661 = vmul.f32 %v1437, %v1504
        %v1662 = vmul.f32 %v1438, %v1509
        %v1663 = vmul.f32 %v1439, %v1514
        %v1664 = vmul.f32 %v1440, %v1519
        %v1665 = vmul.f32 %v1441, %v1524
        %v1666 = vmul.f32 %v1442, %v1529
        %v1667 = vmul.f32 %v1443, %v1534
        %v1668 = vmul.f32 %v1444, %v1539
        %v1669 = vmul.f32 %v1445, %v1544
        %v1670 = vmul.f32 %v1446, %v1549
        %v1671 = vmul.f32 %v1447, %v1554
        %v1672 = vmul.f32 %v1448, %v1559
        %v1673 = vmul.f32 %v1449, %v1564
        %v1674 = vmul.f32 %v1450, %v1569
        %v1675 = vmul.f32 %v1451, %v1574
        %v1676 = vmul.f32 %v1452, %v1579
        %v1677 = vmul.f32 %v1453, %v1584
        %v1678 = vmul.f32 %v1454, %v1589
        %v1679 = vmul.f32 %v1455, %v1594
        %v1680 = vmul.f32 %v1456, %v1599
        %v1681 = vmul.f32 %v1457, %v1604
        %v1682 = vmul.f32 %v1458, %v1609
        %v1683 = vmul.f32 %v1459, %v1614
        %v1684 = vmul.f32 %v1460, %v1619
        %v1685 = vmul.f32 %v1461, %v1624
        %v1686 = vmul.f32 %v1462, %v1629
        %v1687 = vmul.f32 %v1463, %v1634
        %v1688 = vmul.f32 %v1464, %v1639
        %v1689 = vmul.f32 %v1465, %v1644
        %v1690 = vmul.f32 %v1466, %v1649
        %v1691 = vmul.f32 %v1467, %v1654
        %v1692 = vmul.f32 %v1468, %v1659
        %v1693 = vld [vmem:[%s325] sm:$0xff]
        %v1694 = vld [vmem:[%s325 + $0x8] sm:$0xff]
        %v1695 = vld [vmem:[%s325 + $0x10] sm:$0xff]
        %v1696 = vld [vmem:[%s325 + $0x18] sm:$0xff]
        %v1697 = vld [vmem:[%s325 + $0x20] sm:$0xff]
        %v1698 = vld [vmem:[%s325 + $0x28] sm:$0xff]
        %v1699 = vld [vmem:[%s325 + $0x30] sm:$0xff]
        %v1700 = vld [vmem:[%s325 + $0x38] sm:$0xff]
        %v1701 = vld [vmem:[%s325 + $0x40] sm:$0xff]
        %v1702 = vld [vmem:[%s325 + $0x48] sm:$0xff]
        %v1703 = vld [vmem:[%s325 + $0x50] sm:$0xff]
        %v1704 = vld [vmem:[%s325 + $0x58] sm:$0xff]
        %v1705 = vld [vmem:[%s325 + $0x60] sm:$0xff]
        %v1706 = vld [vmem:[%s325 + $0x68] sm:$0xff]
        %v1707 = vld [vmem:[%s325 + $0x70] sm:$0xff]
        %v1708 = vld [vmem:[%s325 + $0x78] sm:$0xff]
        %v1709 = vld [vmem:[%s325 + $0x80] sm:$0xff]
        %v1710 = vld [vmem:[%s325 + $0x88] sm:$0xff]
        %v1711 = vld [vmem:[%s325 + $0x90] sm:$0xff]
        %v1712 = vld [vmem:[%s325 + $0x98] sm:$0xff]
        %v1713 = vld [vmem:[%s325 + $0xa0] sm:$0xff]
        %v1714 = vld [vmem:[%s325 + $0xa8] sm:$0xff]
        %v1715 = vld [vmem:[%s325 + $0xb0] sm:$0xff]
        %v1716 = vld [vmem:[%s325 + $0xb8] sm:$0xff]
        %v1717 = vld [vmem:[%s325 + $0xc0] sm:$0xff]
        %v1718 = vld [vmem:[%s325 + $0xc8] sm:$0xff]
        %v1719 = vld [vmem:[%s325 + $0xd0] sm:$0xff]
        %v1720 = vld [vmem:[%s325 + $0xd8] sm:$0xff]
        %v1721 = vld [vmem:[%s325 + $0xe0] sm:$0xff]
        %v1722 = vld [vmem:[%s325 + $0xe8] sm:$0xff]
        %v1723 = vld [vmem:[%s325 + $0xf0] sm:$0xff]
        %v1724 = vld [vmem:[%s325 + $0xf8] sm:$0xff]
        %v1725 = vadd.f32 %v1661, %v1693
        %v1726 = vadd.f32 %v1662, %v1694
        %v1727 = vadd.f32 %v1663, %v1695
        %v1728 = vadd.f32 %v1664, %v1696
        %v1729 = vadd.f32 %v1665, %v1697
        %v1730 = vadd.f32 %v1666, %v1698
        %v1731 = vadd.f32 %v1667, %v1699
        %v1732 = vadd.f32 %v1668, %v1700
        %v1733 = vadd.f32 %v1669, %v1701
        %v1734 = vadd.f32 %v1670, %v1702
        %v1735 = vadd.f32 %v1671, %v1703
        %v1736 = vadd.f32 %v1672, %v1704
        %v1737 = vadd.f32 %v1673, %v1705
        %v1738 = vadd.f32 %v1674, %v1706
        %v1739 = vadd.f32 %v1675, %v1707
        %v1740 = vadd.f32 %v1676, %v1708
        %v1741 = vadd.f32 %v1677, %v1709
        %v1742 = vadd.f32 %v1678, %v1710
        %v1743 = vadd.f32 %v1679, %v1711
        %v1744 = vadd.f32 %v1680, %v1712
        %v1745 = vadd.f32 %v1681, %v1713
        %v1746 = vadd.f32 %v1682, %v1714
        %v1747 = vadd.f32 %v1683, %v1715
        %v1748 = vadd.f32 %v1684, %v1716
        %v1749 = vadd.f32 %v1685, %v1717
        %v1750 = vadd.f32 %v1686, %v1718
        %v1751 = vadd.f32 %v1687, %v1719
        %v1752 = vadd.f32 %v1688, %v1720
        %v1753 = vadd.f32 %v1689, %v1721
        %v1754 = vadd.f32 %v1690, %v1722
        %v1755 = vadd.f32 %v1691, %v1723
        %v1756 = vadd.f32 %v1692, %v1724
        %1757 = vst [vmem:[%s331] sm:$0xff] %v1725
        %1758 = vst [vmem:[%s331 + $0x8] sm:$0xff] %v1726
        %1759 = vst [vmem:[%s331 + $0x10] sm:$0xff] %v1727
        %1760 = vst [vmem:[%s331 + $0x18] sm:$0xff] %v1728
        %1761 = vst [vmem:[%s331 + $0x20] sm:$0xff] %v1729
        %1762 = vst [vmem:[%s331 + $0x28] sm:$0xff] %v1730
        %1763 = vst [vmem:[%s331 + $0x30] sm:$0xff] %v1731
        %1764 = vst [vmem:[%s331 + $0x38] sm:$0xff] %v1732
        %1765 = vst [vmem:[%s331 + $0x40] sm:$0xff] %v1733
        %1766 = vst [vmem:[%s331 + $0x48] sm:$0xff] %v1734
        %1767 = vst [vmem:[%s331 + $0x50] sm:$0xff] %v1735
        %1768 = vst [vmem:[%s331 + $0x58] sm:$0xff] %v1736
        %1769 = vst [vmem:[%s331 + $0x60] sm:$0xff] %v1737
        %1770 = vst [vmem:[%s331 + $0x68] sm:$0xff] %v1738
        %1771 = vst [vmem:[%s331 + $0x70] sm:$0xff] %v1739
        %1772 = vst [vmem:[%s331 + $0x78] sm:$0xff] %v1740
        %1773 = vst [vmem:[%s331 + $0x80] sm:$0xff] %v1741
        %1774 = vst [vmem:[%s331 + $0x88] sm:$0xff] %v1742
        %1775 = vst [vmem:[%s331 + $0x90] sm:$0xff] %v1743
        %1776 = vst [vmem:[%s331 + $0x98] sm:$0xff] %v1744
        %1777 = vst [vmem:[%s331 + $0xa0] sm:$0xff] %v1745
        %1778 = vst [vmem:[%s331 + $0xa8] sm:$0xff] %v1746
        %1779 = vst [vmem:[%s331 + $0xb0] sm:$0xff] %v1747
        %1780 = vst [vmem:[%s331 + $0xb8] sm:$0xff] %v1748
        %1781 = vst [vmem:[%s331 + $0xc0] sm:$0xff] %v1749
        %1782 = vst [vmem:[%s331 + $0xc8] sm:$0xff] %v1750
        %1783 = vst [vmem:[%s331 + $0xd0] sm:$0xff] %v1751
        %1784 = vst [vmem:[%s331 + $0xd8] sm:$0xff] %v1752
        %1785 = vst [vmem:[%s331 + $0xe0] sm:$0xff] %v1753
        %1786 = vst [vmem:[%s331 + $0xe8] sm:$0xff] %v1754
        %1787 = vst [vmem:[%s331 + $0xf0] sm:$0xff] %v1755
        %1788 = vst [vmem:[%s331 + $0xf8] sm:$0xff] %v1756
        %v1789 = vlaneseq
        %v1790 = vand.u32 %v1789, 127
        %vm1791 = vcmp.lt.s32.totalorder %v1790, 8
        %v1792 = vsel %vm1791, %v1725, -inf
        %v1793 = vsel %vm1791, %v1726, -inf
        %v1794 = vsel %vm1791, %v1727, -inf
        %v1795 = vsel %vm1791, %v1728, -inf
        %v1796 = vsel %vm1791, %v1729, -inf
        %v1797 = vsel %vm1791, %v1730, -inf
        %v1798 = vsel %vm1791, %v1731, -inf
        %v1799 = vsel %vm1791, %v1732, -inf
        %v1800 = vsel %vm1791, %v1733, -inf
        %v1801 = vsel %vm1791, %v1734, -inf
        %v1802 = vsel %vm1791, %v1735, -inf
        %v1803 = vsel %vm1791, %v1736, -inf
        %v1804 = vsel %vm1791, %v1737, -inf
        %v1805 = vsel %vm1791, %v1738, -inf
        %v1806 = vsel %vm1791, %v1739, -inf
        %v1807 = vsel %vm1791, %v1740, -inf
        %v1808 = vsel %vm1791, %v1741, -inf
        %v1809 = vsel %vm1791, %v1742, -inf
        %v1810 = vsel %vm1791, %v1743, -inf
        %v1811 = vsel %vm1791, %v1744, -inf
        %v1812 = vsel %vm1791, %v1745, -inf
        %v1813 = vsel %vm1791, %v1746, -inf
        %v1814 = vsel %vm1791, %v1747, -inf
        %v1815 = vsel %vm1791, %v1748, -inf
        %v1816 = vsel %vm1791, %v1749, -inf
        %v1817 = vsel %vm1791, %v1750, -inf
        %v1818 = vsel %vm1791, %v1751, -inf
        %v1819 = vsel %vm1791, %v1752, -inf
        %v1820 = vsel %vm1791, %v1753, -inf
        %v1821 = vsel %vm1791, %v1754, -inf
        %v1822 = vsel %vm1791, %v1755, -inf
        %v1823 = vsel %vm1791, %v1756, -inf
        %1824 = vmax.xlane.f32.xlu0 %v1792
        %v1825 = vpop.xlane.xlu0 %1824
        %1826 = vmax.xlane.f32.xlu0 %v1793
        %v1827 = vpop.xlane.xlu0 %1826
        %1828 = vmax.xlane.f32.xlu0 %v1794
        %v1829 = vpop.xlane.xlu0 %1828
        %1830 = vmax.xlane.f32.xlu0 %v1795
        %v1831 = vpop.xlane.xlu0 %1830
        %1832 = vmax.xlane.f32.xlu0 %v1796
        %v1833 = vpop.xlane.xlu0 %1832
        %1834 = vmax.xlane.f32.xlu0 %v1797
        %v1835 = vpop.xlane.xlu0 %1834
        %1836 = vmax.xlane.f32.xlu0 %v1798
        %v1837 = vpop.xlane.xlu0 %1836
        %1838 = vmax.xlane.f32.xlu0 %v1799
        %v1839 = vpop.xlane.xlu0 %1838
        %1840 = vmax.xlane.f32.xlu0 %v1800
        %v1841 = vpop.xlane.xlu0 %1840
        %1842 = vmax.xlane.f32.xlu0 %v1801
        %v1843 = vpop.xlane.xlu0 %1842
        %1844 = vmax.xlane.f32.xlu0 %v1802
        %v1845 = vpop.xlane.xlu0 %1844
        %1846 = vmax.xlane.f32.xlu0 %v1803
        %v1847 = vpop.xlane.xlu0 %1846
        %1848 = vmax.xlane.f32.xlu0 %v1804
        %v1849 = vpop.xlane.xlu0 %1848
        %1850 = vmax.xlane.f32.xlu0 %v1805
        %v1851 = vpop.xlane.xlu0 %1850
        %1852 = vmax.xlane.f32.xlu0 %v1806
        %v1853 = vpop.xlane.xlu0 %1852
        %1854 = vmax.xlane.f32.xlu0 %v1807
        %v1855 = vpop.xlane.xlu0 %1854
        %1856 = vmax.xlane.f32.xlu0 %v1808
        %v1857 = vpop.xlane.xlu0 %1856
        %1858 = vmax.xlane.f32.xlu0 %v1809
        %v1859 = vpop.xlane.xlu0 %1858
        %1860 = vmax.xlane.f32.xlu0 %v1810
        %v1861 = vpop.xlane.xlu0 %1860
        %1862 = vmax.xlane.f32.xlu0 %v1811
        %v1863 = vpop.xlane.xlu0 %1862
        %1864 = vmax.xlane.f32.xlu0 %v1812
        %v1865 = vpop.xlane.xlu0 %1864
        %1866 = vmax.xlane.f32.xlu0 %v1813
        %v1867 = vpop.xlane.xlu0 %1866
        %1868 = vmax.xlane.f32.xlu0 %v1814
        %v1869 = vpop.xlane.xlu0 %1868
        %1870 = vmax.xlane.f32.xlu0 %v1815
        %v1871 = vpop.xlane.xlu0 %1870
        %1872 = vmax.xlane.f32.xlu0 %v1816
        %v1873 = vpop.xlane.xlu0 %1872
        %1874 = vmax.xlane.f32.xlu0 %v1817
        %v1875 = vpop.xlane.xlu0 %1874
        %1876 = vmax.xlane.f32.xlu0 %v1818
        %v1877 = vpop.xlane.xlu0 %1876
        %1878 = vmax.xlane.f32.xlu0 %v1819
        %v1879 = vpop.xlane.xlu0 %1878
        %1880 = vmax.xlane.f32.xlu0 %v1820
        %v1881 = vpop.xlane.xlu0 %1880
        %1882 = vmax.xlane.f32.xlu0 %v1821
        %v1883 = vpop.xlane.xlu0 %1882
        %1884 = vmax.xlane.f32.xlu0 %v1822
        %v1885 = vpop.xlane.xlu0 %1884
        %1886 = vmax.xlane.f32.xlu0 %v1823
        %v1887 = vpop.xlane.xlu0 %1886
        %v1888 = vsub.f32 %v1725, %v1825
        %v1889 = vsub.f32 %v1726, %v1827
        %v1890 = vsub.f32 %v1727, %v1829
        %v1891 = vsub.f32 %v1728, %v1831
        %v1892 = vsub.f32 %v1729, %v1833
        %v1893 = vsub.f32 %v1730, %v1835
        %v1894 = vsub.f32 %v1731, %v1837
        %v1895 = vsub.f32 %v1732, %v1839
        %v1896 = vsub.f32 %v1733, %v1841
        %v1897 = vsub.f32 %v1734, %v1843
        %v1898 = vsub.f32 %v1735, %v1845
        %v1899 = vsub.f32 %v1736, %v1847
        %v1900 = vsub.f32 %v1737, %v1849
        %v1901 = vsub.f32 %v1738, %v1851
        %v1902 = vsub.f32 %v1739, %v1853
        %v1903 = vsub.f32 %v1740, %v1855
        %v1904 = vsub.f32 %v1741, %v1857
        %v1905 = vsub.f32 %v1742, %v1859
        %v1906 = vsub.f32 %v1743, %v1861
        %v1907 = vsub.f32 %v1744, %v1863
        %v1908 = vsub.f32 %v1745, %v1865
        %v1909 = vsub.f32 %v1746, %v1867
        %v1910 = vsub.f32 %v1747, %v1869
        %v1911 = vsub.f32 %v1748, %v1871
        %v1912 = vsub.f32 %v1749, %v1873
        %v1913 = vsub.f32 %v1750, %v1875
        %v1914 = vsub.f32 %v1751, %v1877
        %v1915 = vsub.f32 %v1752, %v1879
        %v1916 = vsub.f32 %v1753, %v1881
        %v1917 = vsub.f32 %v1754, %v1883
        %v1918 = vsub.f32 %v1755, %v1885
        %v1919 = vsub.f32 %v1756, %v1887
        %v1920 = vmul.f32 %v1888, 1.442695
        %v1921 = vpow.pop %v1920
        %v1922 = vmul.f32 %v1889, 1.442695
        %v1923 = vpow.pop %v1922
        %v1924 = vmul.f32 %v1890, 1.442695
        %v1925 = vpow.pop %v1924
        %v1926 = vmul.f32 %v1891, 1.442695
        %v1927 = vpow.pop %v1926
        %v1928 = vmul.f32 %v1892, 1.442695
        %v1929 = vpow.pop %v1928
        %v1930 = vmul.f32 %v1893, 1.442695
        %v1931 = vpow.pop %v1930
        %v1932 = vmul.f32 %v1894, 1.442695
        %v1933 = vpow.pop %v1932
        %v1934 = vmul.f32 %v1895, 1.442695
        %v1935 = vpow.pop %v1934
        %v1936 = vmul.f32 %v1896, 1.442695
        %v1937 = vpow.pop %v1936
        %v1938 = vmul.f32 %v1897, 1.442695
        %v1939 = vpow.pop %v1938
        %v1940 = vmul.f32 %v1898, 1.442695
        %v1941 = vpow.pop %v1940
        %v1942 = vmul.f32 %v1899, 1.442695
        %v1943 = vpow.pop %v1942
        %v1944 = vmul.f32 %v1900, 1.442695
        %v1945 = vpow.pop %v1944
        %v1946 = vmul.f32 %v1901, 1.442695
        %v1947 = vpow.pop %v1946
        %v1948 = vmul.f32 %v1902, 1.442695
        %v1949 = vpow.pop %v1948
        %v1950 = vmul.f32 %v1903, 1.442695
        %v1951 = vpow.pop %v1950
        %v1952 = vmul.f32 %v1904, 1.442695
        %v1953 = vpow.pop %v1952
        %v1954 = vmul.f32 %v1905, 1.442695
        %v1955 = vpow.pop %v1954
        %v1956 = vmul.f32 %v1906, 1.442695
        %v1957 = vpow.pop %v1956
        %v1958 = vmul.f32 %v1907, 1.442695
        %v1959 = vpow.pop %v1958
        %v1960 = vmul.f32 %v1908, 1.442695
        %v1961 = vpow.pop %v1960
        %v1962 = vmul.f32 %v1909, 1.442695
        %v1963 = vpow.pop %v1962
        %v1964 = vmul.f32 %v1910, 1.442695
        %v1965 = vpow.pop %v1964
        %v1966 = vmul.f32 %v1911, 1.442695
        %v1967 = vpow.pop %v1966
        %v1968 = vmul.f32 %v1912, 1.442695
        %v1969 = vpow.pop %v1968
        %v1970 = vmul.f32 %v1913, 1.442695
        %v1971 = vpow.pop %v1970
        %v1972 = vmul.f32 %v1914, 1.442695
        %v1973 = vpow.pop %v1972
        %v1974 = vmul.f32 %v1915, 1.442695
        %v1975 = vpow.pop %v1974
        %v1976 = vmul.f32 %v1916, 1.442695
        %v1977 = vpow.pop %v1976
        %v1978 = vmul.f32 %v1917, 1.442695
        %v1979 = vpow.pop %v1978
        %v1980 = vmul.f32 %v1918, 1.442695
        %v1981 = vpow.pop %v1980
        %v1982 = vmul.f32 %v1919, 1.442695
        %v1983 = vpow.pop %v1982
        %v1984 = vsel %vm1791, %v1921, 0.0
        %v1985 = vsel %vm1791, %v1923, 0.0
        %v1986 = vsel %vm1791, %v1925, 0.0
        %v1987 = vsel %vm1791, %v1927, 0.0
        %v1988 = vsel %vm1791, %v1929, 0.0
        %v1989 = vsel %vm1791, %v1931, 0.0
        %v1990 = vsel %vm1791, %v1933, 0.0
        %v1991 = vsel %vm1791, %v1935, 0.0
        %v1992 = vsel %vm1791, %v1937, 0.0
        %v1993 = vsel %vm1791, %v1939, 0.0
        %v1994 = vsel %vm1791, %v1941, 0.0
        %v1995 = vsel %vm1791, %v1943, 0.0
        %v1996 = vsel %vm1791, %v1945, 0.0
        %v1997 = vsel %vm1791, %v1947, 0.0
        %v1998 = vsel %vm1791, %v1949, 0.0
        %v1999 = vsel %vm1791, %v1951, 0.0
        %v2000 = vsel %vm1791, %v1953, 0.0
        %v2001 = vsel %vm1791, %v1955, 0.0
        %v2002 = vsel %vm1791, %v1957, 0.0
        %v2003 = vsel %vm1791, %v1959, 0.0
        %v2004 = vsel %vm1791, %v1961, 0.0
        %v2005 = vsel %vm1791, %v1963, 0.0
        %v2006 = vsel %vm1791, %v1965, 0.0
        %v2007 = vsel %vm1791, %v1967, 0.0
        %v2008 = vsel %vm1791, %v1969, 0.0
        %v2009 = vsel %vm1791, %v1971, 0.0
        %v2010 = vsel %vm1791, %v1973, 0.0
        %v2011 = vsel %vm1791, %v1975, 0.0
        %v2012 = vsel %vm1791, %v1977, 0.0
        %v2013 = vsel %vm1791, %v1979, 0.0
        %v2014 = vsel %vm1791, %v1981, 0.0
        %v2015 = vsel %vm1791, %v1983, 0.0
        %2016 = vadd.xlane.f32.xlu0 %v1984
        %v2017 = vpop.xlane.xlu0 %2016
        %2018 = vadd.xlane.f32.xlu0 %v1985
        %v2019 = vpop.xlane.xlu0 %2018
        %2020 = vadd.xlane.f32.xlu0 %v1986
        %v2021 = vpop.xlane.xlu0 %2020
        %2022 = vadd.xlane.f32.xlu0 %v1987
        %v2023 = vpop.xlane.xlu0 %2022
        %2024 = vadd.xlane.f32.xlu0 %v1988
        %v2025 = vpop.xlane.xlu0 %2024
        %2026 = vadd.xlane.f32.xlu0 %v1989
        %v2027 = vpop.xlane.xlu0 %2026
        %2028 = vadd.xlane.f32.xlu0 %v1990
        %v2029 = vpop.xlane.xlu0 %2028
        %2030 = vadd.xlane.f32.xlu0 %v1991
        %v2031 = vpop.xlane.xlu0 %2030
        %2032 = vadd.xlane.f32.xlu0 %v1992
        %v2033 = vpop.xlane.xlu0 %2032
        %2034 = vadd.xlane.f32.xlu0 %v1993
        %v2035 = vpop.xlane.xlu0 %2034
        %2036 = vadd.xlane.f32.xlu0 %v1994
        %v2037 = vpop.xlane.xlu0 %2036
        %2038 = vadd.xlane.f32.xlu0 %v1995
        %v2039 = vpop.xlane.xlu0 %2038
        %2040 = vadd.xlane.f32.xlu0 %v1996
        %v2041 = vpop.xlane.xlu0 %2040
        %2042 = vadd.xlane.f32.xlu0 %v1997
        %v2043 = vpop.xlane.xlu0 %2042
        %2044 = vadd.xlane.f32.xlu0 %v1998
        %v2045 = vpop.xlane.xlu0 %2044
        %2046 = vadd.xlane.f32.xlu0 %v1999
        %v2047 = vpop.xlane.xlu0 %2046
        %2048 = vadd.xlane.f32.xlu0 %v2000
        %v2049 = vpop.xlane.xlu0 %2048
        %2050 = vadd.xlane.f32.xlu0 %v2001
        %v2051 = vpop.xlane.xlu0 %2050
        %2052 = vadd.xlane.f32.xlu0 %v2002
        %v2053 = vpop.xlane.xlu0 %2052
        %2054 = vadd.xlane.f32.xlu0 %v2003
        %v2055 = vpop.xlane.xlu0 %2054
        %2056 = vadd.xlane.f32.xlu0 %v2004
        %v2057 = vpop.xlane.xlu0 %2056
        %2058 = vadd.xlane.f32.xlu0 %v2005
        %v2059 = vpop.xlane.xlu0 %2058
        %2060 = vadd.xlane.f32.xlu0 %v2006
        %v2061 = vpop.xlane.xlu0 %2060
        %2062 = vadd.xlane.f32.xlu0 %v2007
        %v2063 = vpop.xlane.xlu0 %2062
        %2064 = vadd.xlane.f32.xlu0 %v2008
        %v2065 = vpop.xlane.xlu0 %2064
        %2066 = vadd.xlane.f32.xlu0 %v2009
        %v2067 = vpop.xlane.xlu0 %2066
        %2068 = vadd.xlane.f32.xlu0 %v2010
        %v2069 = vpop.xlane.xlu0 %2068
        %2070 = vadd.xlane.f32.xlu0 %v2011
        %v2071 = vpop.xlane.xlu0 %2070
        %2072 = vadd.xlane.f32.xlu0 %v2012
        %v2073 = vpop.xlane.xlu0 %2072
        %2074 = vadd.xlane.f32.xlu0 %v2013
        %v2075 = vpop.xlane.xlu0 %2074
        %2076 = vadd.xlane.f32.xlu0 %v2014
        %v2077 = vpop.xlane.xlu0 %2076
        %2078 = vadd.xlane.f32.xlu0 %v2015
        %v2079 = vpop.xlane.xlu0 %2078
        %v2080 = vlog2.pop %v2017
        %v2081 = vmul.f32 %v2080, 0.6931472
        %v2082 = vlog2.pop %v2019
        %v2083 = vmul.f32 %v2082, 0.6931472
        %v2084 = vlog2.pop %v2021
        %v2085 = vmul.f32 %v2084, 0.6931472
        %v2086 = vlog2.pop %v2023
        %v2087 = vmul.f32 %v2086, 0.6931472
        %v2088 = vlog2.pop %v2025
        %v2089 = vmul.f32 %v2088, 0.6931472
        %v2090 = vlog2.pop %v2027
        %v2091 = vmul.f32 %v2090, 0.6931472
        %v2092 = vlog2.pop %v2029
        %v2093 = vmul.f32 %v2092, 0.6931472
        %v2094 = vlog2.pop %v2031
        %v2095 = vmul.f32 %v2094, 0.6931472
        %v2096 = vlog2.pop %v2033
        %v2097 = vmul.f32 %v2096, 0.6931472
        %v2098 = vlog2.pop %v2035
        %v2099 = vmul.f32 %v2098, 0.6931472
        %v2100 = vlog2.pop %v2037
        %v2101 = vmul.f32 %v2100, 0.6931472
        %v2102 = vlog2.pop %v2039
        %v2103 = vmul.f32 %v2102, 0.6931472
        %v2104 = vlog2.pop %v2041
        %v2105 = vmul.f32 %v2104, 0.6931472
        %v2106 = vlog2.pop %v2043
        %v2107 = vmul.f32 %v2106, 0.6931472
        %v2108 = vlog2.pop %v2045
        %v2109 = vmul.f32 %v2108, 0.6931472
        %v2110 = vlog2.pop %v2047
        %v2111 = vmul.f32 %v2110, 0.6931472
        %v2112 = vlog2.pop %v2049
        %v2113 = vmul.f32 %v2112, 0.6931472
        %v2114 = vlog2.pop %v2051
        %v2115 = vmul.f32 %v2114, 0.6931472
        %v2116 = vlog2.pop %v2053
        %v2117 = vmul.f32 %v2116, 0.6931472
        %v2118 = vlog2.pop %v2055
        %v2119 = vmul.f32 %v2118, 0.6931472
        %v2120 = vlog2.pop %v2057
        %v2121 = vmul.f32 %v2120, 0.6931472
        %v2122 = vlog2.pop %v2059
        %v2123 = vmul.f32 %v2122, 0.6931472
        %v2124 = vlog2.pop %v2061
        %v2125 = vmul.f32 %v2124, 0.6931472
        %v2126 = vlog2.pop %v2063
        %v2127 = vmul.f32 %v2126, 0.6931472
        %v2128 = vlog2.pop %v2065
        %v2129 = vmul.f32 %v2128, 0.6931472
        %v2130 = vlog2.pop %v2067
        %v2131 = vmul.f32 %v2130, 0.6931472
        %v2132 = vlog2.pop %v2069
        %v2133 = vmul.f32 %v2132, 0.6931472
        %v2134 = vlog2.pop %v2071
        %v2135 = vmul.f32 %v2134, 0.6931472
        %v2136 = vlog2.pop %v2073
        %v2137 = vmul.f32 %v2136, 0.6931472
        %v2138 = vlog2.pop %v2075
        %v2139 = vmul.f32 %v2138, 0.6931472
        %v2140 = vlog2.pop %v2077
        %v2141 = vmul.f32 %v2140, 0.6931472
        %v2142 = vlog2.pop %v2079
        %v2143 = vmul.f32 %v2142, 0.6931472
        %v2144 = vadd.f32 %v2081, %v1825
        %v2145 = vadd.f32 %v2083, %v1827
        %v2146 = vadd.f32 %v2085, %v1829
        %v2147 = vadd.f32 %v2087, %v1831
        %v2148 = vadd.f32 %v2089, %v1833
        %v2149 = vadd.f32 %v2091, %v1835
        %v2150 = vadd.f32 %v2093, %v1837
        %v2151 = vadd.f32 %v2095, %v1839
        %v2152 = vadd.f32 %v2097, %v1841
        %v2153 = vadd.f32 %v2099, %v1843
        %v2154 = vadd.f32 %v2101, %v1845
        %v2155 = vadd.f32 %v2103, %v1847
        %v2156 = vadd.f32 %v2105, %v1849
        %v2157 = vadd.f32 %v2107, %v1851
        %v2158 = vadd.f32 %v2109, %v1853
        %v2159 = vadd.f32 %v2111, %v1855
        %v2160 = vadd.f32 %v2113, %v1857
        %v2161 = vadd.f32 %v2115, %v1859
        %v2162 = vadd.f32 %v2117, %v1861
        %v2163 = vadd.f32 %v2119, %v1863
        %v2164 = vadd.f32 %v2121, %v1865
        %v2165 = vadd.f32 %v2123, %v1867
        %v2166 = vadd.f32 %v2125, %v1869
        %v2167 = vadd.f32 %v2127, %v1871
        %v2168 = vadd.f32 %v2129, %v1873
        %v2169 = vadd.f32 %v2131, %v1875
        %v2170 = vadd.f32 %v2133, %v1877
        %v2171 = vadd.f32 %v2135, %v1879
        %v2172 = vadd.f32 %v2137, %v1881
        %v2173 = vadd.f32 %v2139, %v1883
        %v2174 = vadd.f32 %v2141, %v1885
        %v2175 = vadd.f32 %v2143, %v1887
        %v2176 = vsub.f32 %v1725, %v2144
        %v2177 = vsub.f32 %v1726, %v2145
        %v2178 = vsub.f32 %v1727, %v2146
        %v2179 = vsub.f32 %v1728, %v2147
        %v2180 = vsub.f32 %v1729, %v2148
        %v2181 = vsub.f32 %v1730, %v2149
        %v2182 = vsub.f32 %v1731, %v2150
        %v2183 = vsub.f32 %v1732, %v2151
        %v2184 = vsub.f32 %v1733, %v2152
        %v2185 = vsub.f32 %v1734, %v2153
        %v2186 = vsub.f32 %v1735, %v2154
        %v2187 = vsub.f32 %v1736, %v2155
        %v2188 = vsub.f32 %v1737, %v2156
        %v2189 = vsub.f32 %v1738, %v2157
        %v2190 = vsub.f32 %v1739, %v2158
        %v2191 = vsub.f32 %v1740, %v2159
        %v2192 = vsub.f32 %v1741, %v2160
        %v2193 = vsub.f32 %v1742, %v2161
        %v2194 = vsub.f32 %v1743, %v2162
        %v2195 = vsub.f32 %v1744, %v2163
        %v2196 = vsub.f32 %v1745, %v2164
        %v2197 = vsub.f32 %v1746, %v2165
        %v2198 = vsub.f32 %v1747, %v2166
        %v2199 = vsub.f32 %v1748, %v2167
        %v2200 = vsub.f32 %v1749, %v2168
        %v2201 = vsub.f32 %v1750, %v2169
        %v2202 = vsub.f32 %v1751, %v2170
        %v2203 = vsub.f32 %v1752, %v2171
        %v2204 = vsub.f32 %v1753, %v2172
        %v2205 = vsub.f32 %v1754, %v2173
        %v2206 = vsub.f32 %v1755, %v2174
        %v2207 = vsub.f32 %v1756, %v2175
        %2208 = vst [vmem:[%s337] sm:$0xff] %v2176
        %2209 = vst [vmem:[%s337 + $0x8] sm:$0xff] %v2177
        %2210 = vst [vmem:[%s337 + $0x10] sm:$0xff] %v2178
        %2211 = vst [vmem:[%s337 + $0x18] sm:$0xff] %v2179
        %2212 = vst [vmem:[%s337 + $0x20] sm:$0xff] %v2180
        %2213 = vst [vmem:[%s337 + $0x28] sm:$0xff] %v2181
        %2214 = vst [vmem:[%s337 + $0x30] sm:$0xff] %v2182
        %2215 = vst [vmem:[%s337 + $0x38] sm:$0xff] %v2183
        %2216 = vst [vmem:[%s337 + $0x40] sm:$0xff] %v2184
        %2217 = vst [vmem:[%s337 + $0x48] sm:$0xff] %v2185
        %2218 = vst [vmem:[%s337 + $0x50] sm:$0xff] %v2186
        %2219 = vst [vmem:[%s337 + $0x58] sm:$0xff] %v2187
        %2220 = vst [vmem:[%s337 + $0x60] sm:$0xff] %v2188
        %2221 = vst [vmem:[%s337 + $0x68] sm:$0xff] %v2189
        %2222 = vst [vmem:[%s337 + $0x70] sm:$0xff] %v2190
        %2223 = vst [vmem:[%s337 + $0x78] sm:$0xff] %v2191
        %2224 = vst [vmem:[%s337 + $0x80] sm:$0xff] %v2192
        %2225 = vst [vmem:[%s337 + $0x88] sm:$0xff] %v2193
        %2226 = vst [vmem:[%s337 + $0x90] sm:$0xff] %v2194
        %2227 = vst [vmem:[%s337 + $0x98] sm:$0xff] %v2195
        %2228 = vst [vmem:[%s337 + $0xa0] sm:$0xff] %v2196
        %2229 = vst [vmem:[%s337 + $0xa8] sm:$0xff] %v2197
        %2230 = vst [vmem:[%s337 + $0xb0] sm:$0xff] %v2198
        %2231 = vst [vmem:[%s337 + $0xb8] sm:$0xff] %v2199
        %2232 = vst [vmem:[%s337 + $0xc0] sm:$0xff] %v2200
        %2233 = vst [vmem:[%s337 + $0xc8] sm:$0xff] %v2201
        %2234 = vst [vmem:[%s337 + $0xd0] sm:$0xff] %v2202
        %2235 = vst [vmem:[%s337 + $0xd8] sm:$0xff] %v2203
        %2236 = vst [vmem:[%s337 + $0xe0] sm:$0xff] %v2204
        %2237 = vst [vmem:[%s337 + $0xe8] sm:$0xff] %v2205
        %2238 = vst [vmem:[%s337 + $0xf0] sm:$0xff] %v2206
        %2239 = vst [vmem:[%s337 + $0xf8] sm:$0xff] %v2207
      $region44: #{graphsage_forward.7} parent=35 // pred_fallthru
        _
      %s2240 = smul.u32 32, %s21
      %p2241 = scmp.lt.s32.totalorder %s2240, 63
      %s2242 = scalar_select %p2241, %s2240, 63
      %s2243 = smul.addr %s2242, 8
      %s2244 = scalar_lea.vmem %s4, %s2243
      %s2245 = smul.u32 32, %s21
      %p2246 = scmp.lt.s32.totalorder %s2245, 63
      %s2247 = scalar_select %p2246, %s2245, 63
      %s2248 = smul.addr %s2247, 8
      %s2249 = scalar_lea.vmem %s5, %s2248
      // Predicated region
      $region45: #{graphsage_forward.7} parent=35 // pred_check
        %p2250 = pneg %p153
      $region46: #{graphsage_forward.7} parent=35 // pred_check_branch
        %2252 = sbr.rel (%p2250) target = $region48
      $region47: #{graphsage_forward.7} parent=35 // pred_region
        %s2253 = smul.u32 32, %s21
      $region48: #{graphsage_forward.7} parent=35 // pred_fallthru
        _
      // Predicated region
      $region49: #{graphsage_forward.7} parent=35 // pred_check
        %p2254 = pneg %p179
      $region50: #{graphsage_forward.7} parent=35 // pred_check_branch
        %2256 = sbr.rel (%p2254) target = $region52
      $region51: #{graphsage_forward.7} parent=35 // pred_region
        %s2257 = smul.u32 32, %s21
      $region52: #{graphsage_forward.7} parent=35 // pred_fallthru
        _
    $region36: #{graphsage_forward.7} parent=5 // pred_fallthru
      _
    %p2258 = scmp.le.s32.totalorder 2, %s12
    // Predicated region
    $region53: #{graphsage_forward.7} parent=5 // pred_check
      %p2259 = pneg %p2258
    $region54: #{graphsage_forward.7} parent=5 // pred_check_branch
      %2261 = sbr.rel (%p2259) target = $region56
    $region55: #{graphsage_forward.7} parent=5 // pred_region
      %s2262 = ssub.s32 %s12, 2
      // Predicated region
      $region57: #{graphsage_forward.7} parent=55 // pred_check
        %p2263 = pneg %p159
      $region58: #{graphsage_forward.7} parent=55 // pred_check_branch
        %2265 = sbr.rel (%p2263) target = $region60
      $region59: #{graphsage_forward.7} parent=55 // pred_region
        %s2266 = smul.u32 32, %s23
        %p2267 = scmp.lt.s32.totalorder %s2266, 63
        %s2268 = scalar_select %p2267, %s2266, 63
        %s2269 = smul.addr %s2268, 8
        %s2270 = scalar_lea.vmem %s4, %s2269
      $region60: #{graphsage_forward.7} parent=55 // pred_fallthru
        _
      // Predicated region
      $region61: #{graphsage_forward.7} parent=55 // pred_check
        %p2271 = pneg %p185
      $region62: #{graphsage_forward.7} parent=55 // pred_check_branch
        %2273 = sbr.rel (%p2271) target = $region64
      $region63: #{graphsage_forward.7} parent=55 // pred_region
        %s2274 = smul.u32 32, %s23
        %p2275 = scmp.lt.s32.totalorder %s2274, 63
        %s2276 = scalar_select %p2275, %s2274, 63
        %s2277 = smul.addr %s2276, 8
        %s2278 = scalar_lea.vmem %s5, %s2277
      $region64: #{graphsage_forward.7} parent=55 // pred_fallthru
        _
    $region56: #{graphsage_forward.7} parent=5 // pred_fallthru
      _
  $region6: #{graphsage_forward.7} parent=0 // loop_footer
    %s16 = sadd.s32 1, %s12
  $region7: #{graphsage_forward.7} parent=0 // loop_footer_branch
    %11 = sbr.rel target = $region3
  $region8: #{graphsage_forward.7} parent=0 // loop_exit
    _

</llo_original>
